<compile_context>
chip_gen: v7x
topology: tpu7x:2x2x1
jax: 0.10.0
libtpu: 0.0.40
codegen_flags: <defaults>
</compile_context>

<pallas_src>
import jax
import jax.numpy as jnp
from jax import lax
from jax.experimental import pallas as pl
from jax.experimental.pallas import tpu as pltpu

EPS = 1e-5


def _make_kernel(N, H, W, Cg, Wp, Mp, Rpad):
    inv_cnt = 1.0 / float(N * H * W)

    def kernel(x_ref, w_ref, gamma_ref, beta_ref, mask_ref, o_ref,
               xpad_ref, stage_ref):
        # x_ref:     [1, Mp, Cg]       padded, flattened input (bf16)
        # w_ref:     [1, 9*Cg, Cg]     concatenated-K grouped weights (bf16)
        # gamma_ref: [1, 1, Cg]        beta_ref: [1, 1, Cg]   (f32)
        # mask_ref:  [1, Mp, 1]        1.0 on interior rows, 0.0 on padding rows
        # o_ref:     [1, Mp, Cg]
        # xpad_ref:  [Mp + 2*Rpad, Cg] bf16 scratch (zero halos)
        # stage_ref: [Mp, 9*Cg]        bf16 staging for the single matmul

        # Zero only the two Rpad halo slabs (tiny vs zeroing the whole scratch);
        # they are never overwritten, so every shifted read is zero-extended and
        # finite.  (Done every step so megacore sharding of the grid stays safe.)
        halo = jnp.zeros((Rpad, Cg), jnp.bfloat16)
        xpad_ref[pl.ds(0, Rpad), :] = halo
        xpad_ref[pl.ds(Rpad + Mp, Rpad), :] = halo

        # ReLU once (input is already bf16), single write into the scratch.
        xpad_ref[pl.ds(Rpad, Mp), :] = jnp.maximum(x_ref[0], 0).astype(jnp.bfloat16)

        # Stage the 9 uniformly-shifted views side by side -> [Mp, 9*Cg] so the
        # grouped 3x3 conv becomes ONE MXU matmul with K = 9*Cg.
        for t in range(9):
            kh, kw = t // 3, t % 3
            delta = (kh - 1) * Wp + (kw - 1)
            stage_ref[:, t * Cg:(t + 1) * Cg] = xpad_ref[pl.ds(Rpad + delta, Mp), :]

        acc = jnp.dot(stage_ref[...], w_ref[0],
                      preferred_element_type=jnp.float32)        # [Mp, Cg] f32

        # One-pass BatchNorm batch statistics over interior (valid) rows only.
        m = mask_ref[0]                                          # [Mp, 1] (0/1)
        accm = acc * m
        s1 = jnp.sum(accm, axis=0, keepdims=True)                # [1, Cg]
        s2 = jnp.sum(accm * accm, axis=0, keepdims=True)         # m*m == m
        mean = s1 * inv_cnt
        var = s2 * inv_cnt - mean * mean                         # biased variance
        scale = lax.rsqrt(var + EPS) * gamma_ref[0]              # [1, Cg]
        shift = beta_ref[0] - mean * scale

        # Border rows hold garbage-but-finite values; host slices them off.
        o_ref[0] = (acc * scale + shift).astype(o_ref.dtype)

    return kernel


def relu_conv_bn(x_nchw, weight_oihw, gamma, beta, *, groups=4):
    """x_nchw: [N, C, H, W]; weight_oihw: [C, C//groups, 3, 3]; gamma/beta: [C]."""
    N, C, H, W = x_nchw.shape
    G = groups
    Cg = C // G
    Hp, Wp = H + 2, W + 2
    Mp = N * Hp * Wp
    # zero-extension rows on each side of the flattened grid (>= Wp+1, 8-aligned)
    Rpad = ((Wp + 1 + 7) // 8) * 8
    # Correctness of the flat-Mp shift trick: all shifted reads for interior
    # rows stay inside [Rpad, Rpad + Mp); border rows may touch the halos,
    # which are zero, and are masked from BN stats and sliced off below.
    assert Rpad >= Wp + 1

    # ---- host-side layout: pad + bf16 cast fused into the group-major copy ----
    xp = jnp.pad(x_nchw, ((0, 0), (0, 0), (1, 1), (1, 1)))
    xg = (xp.reshape(N, G, Cg, Hp, Wp)
            .transpose(1, 0, 3, 4, 2)                 # [G, N, Hp, Wp, Cg]
            .reshape(G, Mp, Cg)
            .astype(jnp.bfloat16))
    wg = (weight_oihw.reshape(G, Cg, Cg, 3, 3)        # [G, co, ci, kh, kw]
            .transpose(0, 3, 4, 2, 1)                 # [G, kh, kw, ci, co]
            .reshape(G, 9 * Cg, Cg)                   # K ordering = (tap, ci)
            .astype(jnp.bfloat16))
    gg = gamma.reshape(G, 1, Cg).astype(jnp.float32)
    bg = beta.reshape(G, 1, Cg).astype(jnp.float32)

    # interior-row mask over the flattened padded grid (same for all groups)
    hp = jnp.arange(Hp)
    wp = jnp.arange(Wp)
    m2d = ((hp >= 1) & (hp <= H))[:, None] & ((wp >= 1) & (wp <= W))[None, :]
    maskf = (jnp.broadcast_to(m2d[None], (N, Hp, Wp))
             .reshape(1, Mp, 1).astype(jnp.float32))

    kernel = _make_kernel(N, H, W, Cg, Wp, Mp, Rpad)

    out_flat = pl.pallas_call(
        kernel,
        out_shape=jax.ShapeDtypeStruct((G, Mp, Cg), x_nchw.dtype),
        grid=(G,),
        in_specs=[
            pl.BlockSpec((1, Mp, Cg), lambda g: (g, 0, 0)),
            pl.BlockSpec((1, 9 * Cg, Cg), lambda g: (g, 0, 0)),
            pl.BlockSpec((1, 1, Cg), lambda g: (g, 0, 0)),
            pl.BlockSpec((1, 1, Cg), lambda g: (g, 0, 0)),
            pl.BlockSpec((1, Mp, 1), lambda g: (0, 0, 0)),
        ],
        out_specs=pl.BlockSpec((1, Mp, Cg), lambda g: (g, 0, 0)),
        scratch_shapes=[
            pltpu.VMEM((Mp + 2 * Rpad, Cg), jnp.bfloat16),
            pltpu.VMEM((Mp, 9 * Cg), jnp.bfloat16),
        ],
        compiler_params=pltpu.CompilerParams(
            dimension_semantics=("parallel",),
            vmem_limit_bytes=32 * 1024 * 1024,
        ),
    )(xg, wg, gg, bg, maskf)

    # drop padding rows + back to NCHW (single fused XLA copy)
    out = (out_flat.reshape(G, N, Hp, Wp, Cg)[:, :, 1:1 + H, 1:1 + W, :]
           .transpose(1, 0, 4, 2, 3)
           .reshape(N, C, H, W))
    return out


def reference(x, weight, gamma, beta, *, groups=4):
    xr = jnp.maximum(x, 0.0)
    y = lax.conv_general_dilated(
        xr, weight, window_strides=(1, 1), padding=((1, 1), (1, 1)),
        dimension_numbers=("NCHW", "OIHW", "NCHW"), feature_group_count=groups)
    mean = jnp.mean(y, axis=(0, 2, 3), keepdims=True)
    var = jnp.mean((y - mean) ** 2, axis=(0, 2, 3), keepdims=True)
    return ((y - mean) * lax.rsqrt(var + EPS) * gamma.reshape(1, -1, 1, 1)
            + beta.reshape(1, -1, 1, 1))


if __name__ == "__main__":
    # Original module: N=1, C=1056, H=W=28, groups=4 (Cg=264).  Scaled down
    # here but keeping Cg >= 128 so the lane axis stays dense like the module.
    N, C, H, W = 2, 512, 8, 8
    G = 4
    Cg = C // G

    key = jax.random.PRNGKey(0)
    kx, kw, kg, kb = jax.random.split(key, 4)

    x = jax.random.normal(kx, (N, C, H, W), dtype=jnp.float32)
    weight = jax.random.normal(kw, (C, Cg, 3, 3), dtype=jnp.float32) * 0.1
    gamma = 1.0 + 0.1 * jax.random.normal(kg, (C,), dtype=jnp.float32)
    beta = 0.1 * jax.random.normal(kb, (C,), dtype=jnp.float32)

    out = jax.block_until_ready(relu_conv_bn(x, weight, gamma, beta, groups=G))
    ref = jax.block_until_ready(reference(x, weight, gamma, beta, groups=G))

    assert out.shape == (N, C, H, W)
    # bf16 input + bf16 MXU operands (f32 accumulation) vs an all-f32 reference.
    max_err = float(jnp.max(jnp.abs(out - ref)))
    assert jnp.allclose(out, ref, atol=3e-2, rtol=3e-2), max_err

    print("KERNEL_OK")
</pallas_src>

<mosaic_0001>
module attributes {stable_mosaic.version = 11 : i64} {
  func.func @kernel(%arg0: i32, %arg1: memref<1x200x128xbf16, #tpu.memory_space<vmem>>, %arg2: memref<1x1152x128xbf16, #tpu.memory_space<vmem>>, %arg3: memref<1x1x128xf32, #tpu.memory_space<vmem>>, %arg4: memref<1x1x128xf32, #tpu.memory_space<vmem>>, %arg5: memref<1x200x1xf32, #tpu.memory_space<vmem>>, %arg6: memref<1x200x128xf32, #tpu.memory_space<vmem>>, %arg7: memref<232x128xbf16, #tpu.memory_space<vmem>>, %arg8: memref<200x1152xbf16, #tpu.memory_space<vmem>>) attributes {dimension_semantics = [#tpu.dimension_semantics<parallel>], iteration_bounds = array<i64: 4>, scalar_prefetch = 0 : i64, scratch_operands = 2 : i64, tpu.core_type = #tpu.core_type<tc>, window_params = [{transform_indices = @transform_0, window_bounds = array<i64: 1, 200, 128>}, {transform_indices = @transform_1, window_bounds = array<i64: 1, 1152, 128>}, {transform_indices = @transform_2, window_bounds = array<i64: 1, 1, 128>}, {transform_indices = @transform_3, window_bounds = array<i64: 1, 1, 128>}, {pipeline_mode = #tpu.pipeline_mode<synchronous>, transform_indices = @transform_4, window_bounds = array<i64: 1, 200, 1>}, {transform_indices = @transform_5, window_bounds = array<i64: 1, 200, 128>}]} {
    %cst = arith.constant 0.000000e+00 : bf16
    %0 = vector.broadcast %cst : bf16 to vector<16x128xbf16>
    %c0 = arith.constant 0 : index
    %c0_0 = arith.constant 0 : index
    %1 = vector.load %arg7[%c0, %c0_0] : memref<232x128xbf16, #tpu.memory_space<vmem>>, vector<16x128xbf16>
    tpu.vector_store %arg7[%c0, %c0_0], %0 {strides = array<i32>} : memref<232x128xbf16, #tpu.memory_space<vmem>>, vector<16x128xbf16>,
    %c216 = arith.constant 216 : index
    %c0_1 = arith.constant 0 : index
    %2 = vector.load %arg7[%c216, %c0_1] : memref<232x128xbf16, #tpu.memory_space<vmem>>, vector<16x128xbf16>
    tpu.vector_store %arg7[%c216, %c0_1], %0 {strides = array<i32>} : memref<232x128xbf16, #tpu.memory_space<vmem>>, vector<16x128xbf16>,
    %c0_2 = arith.constant 0 : index
    %c0_3 = arith.constant 0 : index
    %c0_4 = arith.constant 0 : index
    %3 = vector.load %arg1[%c0_2, %c0_3, %c0_4] : memref<1x200x128xbf16, #tpu.memory_space<vmem>>, vector<1x200x128xbf16>
    %4 = vector.shape_cast %3 : vector<1x200x128xbf16> to vector<200x128xbf16>
    %cst_5 = arith.constant 0.000000e+00 : bf16
    %5 = vector.broadcast %cst_5 : bf16 to vector<200x128xbf16>
    %6 = arith.maximumf %4, %5 : vector<200x128xbf16>
    %c16 = arith.constant 16 : index
    %c0_6 = arith.constant 0 : index
    %7 = vector.load %arg7[%c16, %c0_6] : memref<232x128xbf16, #tpu.memory_space<vmem>>, vector<200x128xbf16>
    tpu.vector_store %arg7[%c16, %c0_6], %6 {strides = array<i32>} : memref<232x128xbf16, #tpu.memory_space<vmem>>, vector<200x128xbf16>,
    %c5 = arith.constant 5 : index
    %c0_7 = arith.constant 0 : index
    %8 = vector.load %arg7[%c5, %c0_7] : memref<232x128xbf16, #tpu.memory_space<vmem>>, vector<200x128xbf16>
    %c0_8 = arith.constant 0 : index
    %c0_9 = arith.constant 0 : index
    %9 = vector.load %arg8[%c0_8, %c0_9] : memref<200x1152xbf16, #tpu.memory_space<vmem>>, vector<200x128xbf16>
    tpu.vector_store %arg8[%c0_8, %c0_9], %8 {strides = array<i32>} : memref<200x1152xbf16, #tpu.memory_space<vmem>>, vector<200x128xbf16>,
    %c6 = arith.constant 6 : index
    %c0_10 = arith.constant 0 : index
    %10 = vector.load %arg7[%c6, %c0_10] : memref<232x128xbf16, #tpu.memory_space<vmem>>, vector<200x128xbf16>
    %c0_11 = arith.constant 0 : index
    %c128 = arith.constant 128 : index
    %11 = vector.load %arg8[%c0_11, %c128] : memref<200x1152xbf16, #tpu.memory_space<vmem>>, vector<200x128xbf16>
    tpu.vector_store %arg8[%c0_11, %c128], %10 {strides = array<i32>} : memref<200x1152xbf16, #tpu.memory_space<vmem>>, vector<200x128xbf16>,
    %c7 = arith.constant 7 : index
    %c0_12 = arith.constant 0 : index
    %12 = vector.load %arg7[%c7, %c0_12] : memref<232x128xbf16, #tpu.memory_space<vmem>>, vector<200x128xbf16>
    %c0_13 = arith.constant 0 : index
    %c256 = arith.constant 256 : index
    %13 = vector.load %arg8[%c0_13, %c256] : memref<200x1152xbf16, #tpu.memory_space<vmem>>, vector<200x128xbf16>
    tpu.vector_store %arg8[%c0_13, %c256], %12 {strides = array<i32>} : memref<200x1152xbf16, #tpu.memory_space<vmem>>, vector<200x128xbf16>,
    %c15 = arith.constant 15 : index
    %c0_14 = arith.constant 0 : index
    %14 = vector.load %arg7[%c15, %c0_14] : memref<232x128xbf16, #tpu.memory_space<vmem>>, vector<200x128xbf16>
    %c0_15 = arith.constant 0 : index
    %c384 = arith.constant 384 : index
    %15 = vector.load %arg8[%c0_15, %c384] : memref<200x1152xbf16, #tpu.memory_space<vmem>>, vector<200x128xbf16>
    tpu.vector_store %arg8[%c0_15, %c384], %14 {strides = array<i32>} : memref<200x1152xbf16, #tpu.memory_space<vmem>>, vector<200x128xbf16>,
    %c16_16 = arith.constant 16 : index
    %c0_17 = arith.constant 0 : index
    %16 = vector.load %arg7[%c16_16, %c0_17] : memref<232x128xbf16, #tpu.memory_space<vmem>>, vector<200x128xbf16>
    %c0_18 = arith.constant 0 : index
    %c512 = arith.constant 512 : index
    %17 = vector.load %arg8[%c0_18, %c512] : memref<200x1152xbf16, #tpu.memory_space<vmem>>, vector<200x128xbf16>
    tpu.vector_store %arg8[%c0_18, %c512], %16 {strides = array<i32>} : memref<200x1152xbf16, #tpu.memory_space<vmem>>, vector<200x128xbf16>,
    %c17 = arith.constant 17 : index
    %c0_19 = arith.constant 0 : index
    %18 = vector.load %arg7[%c17, %c0_19] : memref<232x128xbf16, #tpu.memory_space<vmem>>, vector<200x128xbf16>
    %c0_20 = arith.constant 0 : index
    %c640 = arith.constant 640 : index
    %19 = vector.load %arg8[%c0_20, %c640] : memref<200x1152xbf16, #tpu.memory_space<vmem>>, vector<200x128xbf16>
    tpu.vector_store %arg8[%c0_20, %c640], %18 {strides = array<i32>} : memref<200x1152xbf16, #tpu.memory_space<vmem>>, vector<200x128xbf16>,
    %c25 = arith.constant 25 : index
    %c0_21 = arith.constant 0 : index
    %20 = vector.load %arg7[%c25, %c0_21] : memref<232x128xbf16, #tpu.memory_space<vmem>>, vector<200x128xbf16>
    %c0_22 = arith.constant 0 : index
    %c768 = arith.constant 768 : index
    %21 = vector.load %arg8[%c0_22, %c768] : memref<200x1152xbf16, #tpu.memory_space<vmem>>, vector<200x128xbf16>
    tpu.vector_store %arg8[%c0_22, %c768], %20 {strides = array<i32>} : memref<200x1152xbf16, #tpu.memory_space<vmem>>, vector<200x128xbf16>,
    %c26 = arith.constant 26 : index
    %c0_23 = arith.constant 0 : index
    %22 = vector.load %arg7[%c26, %c0_23] : memref<232x128xbf16, #tpu.memory_space<vmem>>, vector<200x128xbf16>
    %c0_24 = arith.constant 0 : index
    %c896 = arith.constant 896 : index
    %23 = vector.load %arg8[%c0_24, %c896] : memref<200x1152xbf16, #tpu.memory_space<vmem>>, vector<200x128xbf16>
    tpu.vector_store %arg8[%c0_24, %c896], %22 {strides = array<i32>} : memref<200x1152xbf16, #tpu.memory_space<vmem>>, vector<200x128xbf16>,
    %c27 = arith.constant 27 : index
    %c0_25 = arith.constant 0 : index
    %24 = vector.load %arg7[%c27, %c0_25] : memref<232x128xbf16, #tpu.memory_space<vmem>>, vector<200x128xbf16>
    %c0_26 = arith.constant 0 : index
    %c1024 = arith.constant 1024 : index
    %25 = vector.load %arg8[%c0_26, %c1024] : memref<200x1152xbf16, #tpu.memory_space<vmem>>, vector<200x128xbf16>
    tpu.vector_store %arg8[%c0_26, %c1024], %24 {strides = array<i32>} : memref<200x1152xbf16, #tpu.memory_space<vmem>>, vector<200x128xbf16>,
    %c0_27 = arith.constant 0 : index
    %c0_28 = arith.constant 0 : index
    %26 = vector.load %arg8[%c0_27, %c0_28] : memref<200x1152xbf16, #tpu.memory_space<vmem>>, vector<200x1152xbf16>
    %c0_29 = arith.constant 0 : index
    %c0_30 = arith.constant 0 : index
    %c0_31 = arith.constant 0 : index
    %27 = vector.load %arg2[%c0_29, %c0_30, %c0_31] : memref<1x1152x128xbf16, #tpu.memory_space<vmem>>, vector<1x1152x128xbf16>
    %28 = vector.shape_cast %27 : vector<1x1152x128xbf16> to vector<1152x128xbf16>
    %cst_32 = arith.constant dense<0.000000e+00> : vector<200x128xf32>
    %29 = tpu.matmul %26, %28, %cst_32 {dimension_numbers = #tpu.dot_dimension_numbers<[1], [0], [0], [1], [0, 0, 1, 1], [], []>} : vector<200x1152xbf16>, vector<1152x128xbf16>, vector<200x128xf32> -> vector<200x128xf32>
    %c0_33 = arith.constant 0 : index
    %c0_34 = arith.constant 0 : index
    %c0_35 = arith.constant 0 : index
    %30 = vector.load %arg5[%c0_33, %c0_34, %c0_35] : memref<1x200x1xf32, #tpu.memory_space<vmem>>, vector<1x200x1xf32>
    %31 = vector.shape_cast %30 : vector<1x200x1xf32> to vector<200x1xf32>
    %32 = vector.broadcast %31 : vector<200x1xf32> to vector<200x128xf32>
    %33 = arith.mulf %29, %32 : vector<200x128xf32>
    %cst_36 = arith.constant dense<0.000000e+00> : vector<128xf32>
    %34 = vector.multi_reduction <add>, %33, %cst_36 [0] : vector<200x128xf32> to vector<128xf32>
    %35 = vector.shape_cast %34 : vector<128xf32> to vector<1x128xf32>
    %36 = arith.mulf %33, %33 : vector<200x128xf32>
    %cst_37 = arith.constant dense<0.000000e+00> : vector<128xf32>
    %37 = vector.multi_reduction <add>, %36, %cst_37 [0] : vector<200x128xf32> to vector<128xf32>
    %38 = vector.shape_cast %37 : vector<128xf32> to vector<1x128xf32>
    %cst_38 = arith.constant 7.812500e-03 : f32
    %39 = vector.broadcast %cst_38 : f32 to vector<1x128xf32>
    %40 = arith.mulf %35, %39 : vector<1x128xf32>
    %cst_39 = arith.constant 7.812500e-03 : f32
    %41 = vector.broadcast %cst_39 : f32 to vector<1x128xf32>
    %42 = arith.mulf %38, %41 : vector<1x128xf32>
    %43 = arith.mulf %40, %40 : vector<1x128xf32>
    %44 = arith.subf %42, %43 : vector<1x128xf32>
    %cst_40 = arith.constant 9.99999974E-6 : f32
    %45 = vector.broadcast %cst_40 : f32 to vector<1x128xf32>
    %46 = arith.addf %44, %45 : vector<1x128xf32>
    %47 = math.rsqrt %46 : vector<1x128xf32>
    %c0_41 = arith.constant 0 : index
    %c0_42 = arith.constant 0 : index
    %c0_43 = arith.constant 0 : index
    %48 = vector.load %arg3[%c0_41, %c0_42, %c0_43] : memref<1x1x128xf32, #tpu.memory_space<vmem>>, vector<1x1x128xf32>
    %49 = vector.shape_cast %48 : vector<1x1x128xf32> to vector<1x128xf32>
    %50 = arith.mulf %47, %49 : vector<1x128xf32>
    %c0_44 = arith.constant 0 : index
    %c0_45 = arith.constant 0 : index
    %c0_46 = arith.constant 0 : index
    %51 = vector.load %arg4[%c0_44, %c0_45, %c0_46] : memref<1x1x128xf32, #tpu.memory_space<vmem>>, vector<1x1x128xf32>
    %52 = vector.shape_cast %51 : vector<1x1x128xf32> to vector<1x128xf32>
    %53 = arith.mulf %40, %50 : vector<1x128xf32>
    %54 = arith.subf %52, %53 : vector<1x128xf32>
    %55 = vector.broadcast %50 : vector<1x128xf32> to vector<200x128xf32>
    %56 = arith.mulf %29, %55 : vector<200x128xf32>
    %57 = vector.broadcast %54 : vector<1x128xf32> to vector<200x128xf32>
    %58 = arith.addf %56, %57 : vector<200x128xf32>
    %c0_47 = arith.constant 0 : index
    %c0_48 = arith.constant 0 : index
    %c0_49 = arith.constant 0 : index
    %59 = vector.load %arg6[%c0_47, %c0_48, %c0_49] : memref<1x200x128xf32, #tpu.memory_space<vmem>>, vector<1x200x128xf32>
    %60 = vector.shape_cast %59 : vector<1x200x128xf32> to vector<200x128xf32>
    %61 = vector.shape_cast %58 : vector<200x128xf32> to vector<1x200x128xf32>
    tpu.vector_store %arg6[%c0_47, %c0_48, %c0_49], %61 {strides = array<i32>} : memref<1x200x128xf32, #tpu.memory_space<vmem>>, vector<1x200x128xf32>,
    return
  }
  func.func @transform_0(%arg0: i32) -> (i32, i32, i32) {
    %c0_i32 = arith.constant 0 : i32
    %c0_i32_0 = arith.constant 0 : i32
    %c0_i32_1 = arith.constant 0 : i32
    return %arg0, %c0_i32, %c0_i32_0 : i32, i32, i32
  }
  func.func @transform_1(%arg0: i32) -> (i32, i32, i32) {
    %c0_i32 = arith.constant 0 : i32
    %c0_i32_0 = arith.constant 0 : i32
    %c0_i32_1 = arith.constant 0 : i32
    return %arg0, %c0_i32, %c0_i32_0 : i32, i32, i32
  }
  func.func @transform_2(%arg0: i32) -> (i32, i32, i32) {
    %c0_i32 = arith.constant 0 : i32
    %c0_i32_0 = arith.constant 0 : i32
    %c0_i32_1 = arith.constant 0 : i32
    return %arg0, %c0_i32, %c0_i32_0 : i32, i32, i32
  }
  func.func @transform_3(%arg0: i32) -> (i32, i32, i32) {
    %c0_i32 = arith.constant 0 : i32
    %c0_i32_0 = arith.constant 0 : i32
    %c0_i32_1 = arith.constant 0 : i32
    return %arg0, %c0_i32, %c0_i32_0 : i32, i32, i32
  }
  func.func @transform_4(%arg0: i32) -> (i32, i32, i32) {
    %c0_i32 = arith.constant 0 : i32
    %c0_i32_0 = arith.constant 0 : i32
    %c0_i32_1 = arith.constant 0 : i32
    %c0_i32_2 = arith.constant 0 : i32
    return %c0_i32, %c0_i32_0, %c0_i32_1 : i32, i32, i32
  }
  func.func @transform_5(%arg0: i32) -> (i32, i32, i32) {
    %c0_i32 = arith.constant 0 : i32
    %c0_i32_0 = arith.constant 0 : i32
    %c0_i32_1 = arith.constant 0 : i32
    return %arg0, %c0_i32, %c0_i32_0 : i32, i32, i32
  }
}

</mosaic_0001>

<llo_original>
// kernel: tpu_custom_call.1
$region0: #{tpu_custom_call.1}
  #allocation0 [shape = 'u32[]', space=smem, size = 0x4, offset = 0x4, fixed_abs, tag = 'smem constant byte address 0x4 - core index']
  #allocation1 [shape = 'u32[144,128]{1,0:T(1,128)}', space=vmem, size = 0x12000, scoped, tag = 'internal scratch']
  #allocation2 [shape = 'bf16[232,128]{1,0:T(8,128)(2,1)}', space=vmem, size = 0xe800, scoped, tag = 'scratch operand']
  #allocation3 [shape = 'bf16[200,1152]{1,0:T(8,128)(2,1)}', space=vmem, size = 0x70800, scoped, tag = 'scratch operand']
  %s0 = inlined_call_operand.hbm [shape: bf16[4,200,128], index: 0, kind: input, shape index: {}]
  %s1 = inlined_call_operand.hbm [shape: bf16[4,1152,128], index: 1, kind: input, shape index: {}]
  %s2 = inlined_call_operand.hbm [shape: f32[4,1,128], index: 2, kind: input, shape index: {}]
  %s3 = inlined_call_operand.hbm [shape: f32[4,1,128], index: 3, kind: input, shape index: {}]
  %s4 = inlined_call_operand.vmem [shape: f32[1,200,1], index: 4, kind: input, shape index: {}]
  %s5 = inlined_call_operand.hbm [shape: f32[4,200,128], index: 5, kind: output, shape index: {}]
  %s6 = sld [smem:[#allocation0]]
  $region69: #{tpu_custom_call.1} parent=0
    _
  %s8 = ssub.s32 1, %s6
  %s9 = scalar_select 0, %s8, %s6
  $region1: #{tpu_custom_call.1} parent=0
    #allocation4 [shape = 'u8[102400]{0}', space=vmem, size = 0x19000, scoped, tag = 'input window, operand 0']
    #allocation5 [shape = 's32[2]{0}', space=sflag, size = 0x8, scoped, tag = 'scoped memory for tpu_custom_call.1']
    #allocation6 [shape = 's32[2]{0}', space=sflag, size = 0x8, scoped, tag = 'scoped memory for tpu_custom_call.1']
    #allocation7 [shape = 'u8[589824]{0}', space=vmem, size = 0x90000, scoped, tag = 'input window, operand 1']
    #allocation8 [shape = 's32[2]{0}', space=sflag, size = 0x8, scoped, tag = 'scoped memory for tpu_custom_call.1']
    #allocation9 [shape = 'u8[1024]{0}', space=vmem, size = 0x400, scoped, tag = 'input window, operand 2']
    #allocation10 [shape = 'u8[1024]{0}', space=vmem, size = 0x400, scoped, tag = 'input window, operand 3']
    #allocation11 [shape = 's32[2]{0}', space=sflag, size = 0x8, scoped, tag = 'scoped memory for tpu_custom_call.1']
    #allocation12 [shape = 'u8[204800]{0}', space=vmem, size = 0x32000, scoped, tag = 'output window, operand 0']
    %10 = vsyncpa [#allocation5], 0
    %s11 = scalar_lea.sflag [#allocation5], 1
    %12 = vsyncpa %s11, 0
    %13 = vsyncpa [#allocation8], 0
    %s14 = scalar_lea.sflag [#allocation8], 1
    %15 = vsyncpa %s14, 0
    %16 = vsyncpa [#allocation11], 0
    %s17 = scalar_lea.sflag [#allocation11], 1
    %18 = vsyncpa %s17, 0
    %19 = vsyncpa [#allocation6], 0
    %s20 = scalar_lea.sflag [#allocation6], 1
    %21 = vsyncpa %s20, 0
    loop: start=0, step=1, limit=6
    $region2: #{tpu_custom_call.1} parent=1 // loop_pre_header
      _
    $region3: #{tpu_custom_call.1} parent=1 // loop_header
      %s23 = sphi 0, %s27
      %p24 = scmp.ge.s32.totalorder %s23, 6
      %s33 = sphi 0, %s35
      %s36 = sphi 0, %s33
      %s37 = sphi 0, %s36
      %s53 = sphi 0, %s37
      %s59 = sphi 0, %s61
      %s62 = sphi 0, %s59
      %s63 = sphi 0, %s62
      %s79 = sphi 0, %s63
      %s85 = sphi 0, %s87
      %s88 = sphi 0, %s85
      %s89 = sphi 0, %s88
      %s105 = sphi 0, %s89
      %s111 = sphi 0, %s113
      %s114 = sphi 0, %s111
      %s115 = sphi 0, %s114
      %s131 = sphi 0, %s115
      %s135 = sphi 0, %s135
      %s137 = sphi 0, %s135
      %s138 = sphi 0, %s137
      %s152 = sphi 0, %s138
      %s158 = sphi 0, %s160
      %s161 = sphi 0, %s158
      %s162 = sphi 0, %s161
      %s178 = sphi 0, %s162
    $region4: #{tpu_custom_call.1} parent=1 // loop_header_branch
      %26 = sbr.rel (%p24) target = $region8
    $region5: #{tpu_custom_call.1} parent=1 // loop_body
      %s28 = ssub.s32 %s23, 1
      %s29 = ssub.s32 %s23, 2
      %s30 = sadd.s32 %s23, 1
      %s31 = ssub.s32 %s23, %s30
      %p32 = scmp.eq.s32.totalorder %s31, 0
      %s34 = sadd.s32 %s33, 1
      %s35 = scalar_select %p32, %s33, %s34
      %p38 = pneg %p32
      %p39 = scmp.eq.s32.totalorder %s23, 3
      %p40 = por %p38, %p39
      %p41 = scmp.ne.s32.totalorder %s33, %s36
      %p42 = scmp.eq.s32.totalorder %s23, 0
      %p43 = por %p41, %p42
      %p44 = scmp.ne.s32.totalorder %s33, %s36
      %p45 = scmp.eq.s32.totalorder %s28, 3
      %p46 = por %p44, %p45
      %p47 = scmp.ne.s32.totalorder %s36, %s37
      %p48 = scmp.eq.s32.totalorder %s28, 0
      %p49 = por %p47, %p48
      %p50 = scmp.ne.s32.totalorder %s36, %s37
      %p51 = scmp.eq.s32.totalorder %s29, 3
      %p52 = por %p50, %p51
      %p54 = scmp.ne.s32.totalorder %s37, %s53
      %p55 = scmp.eq.s32.totalorder %s29, 0
      %p56 = por %p54, %p55
      %s57 = ssub.s32 %s23, %s30
      %p58 = scmp.eq.s32.totalorder %s57, 0
      %s60 = sadd.s32 %s59, 1
      %s61 = scalar_select %p58, %s59, %s60
      %p64 = pneg %p58
      %p65 = scmp.eq.s32.totalorder %s23, 3
      %p66 = por %p64, %p65
      %p67 = scmp.ne.s32.totalorder %s59, %s62
      %p68 = scmp.eq.s32.totalorder %s23, 0
      %p69 = por %p67, %p68
      %p70 = scmp.ne.s32.totalorder %s59, %s62
      %p71 = scmp.eq.s32.totalorder %s28, 3
      %p72 = por %p70, %p71
      %p73 = scmp.ne.s32.totalorder %s62, %s63
      %p74 = scmp.eq.s32.totalorder %s28, 0
      %p75 = por %p73, %p74
      %p76 = scmp.ne.s32.totalorder %s62, %s63
      %p77 = scmp.eq.s32.totalorder %s29, 3
      %p78 = por %p76, %p77
      %p80 = scmp.ne.s32.totalorder %s63, %s79
      %p81 = scmp.eq.s32.totalorder %s29, 0
      %p82 = por %p80, %p81
      %s83 = ssub.s32 %s23, %s30
      %p84 = scmp.eq.s32.totalorder %s83, 0
      %s86 = sadd.s32 %s85, 1
      %s87 = scalar_select %p84, %s85, %s86
      %p90 = pneg %p84
      %p91 = scmp.eq.s32.totalorder %s23, 3
      %p92 = por %p90, %p91
      %p93 = scmp.ne.s32.totalorder %s85, %s88
      %p94 = scmp.eq.s32.totalorder %s23, 0
      %p95 = por %p93, %p94
      %p96 = scmp.ne.s32.totalorder %s85, %s88
      %p97 = scmp.eq.s32.totalorder %s28, 3
      %p98 = por %p96, %p97
      %p99 = scmp.ne.s32.totalorder %s88, %s89
      %p100 = scmp.eq.s32.totalorder %s28, 0
      %p101 = por %p99, %p100
      %p102 = scmp.ne.s32.totalorder %s88, %s89
      %p103 = scmp.eq.s32.totalorder %s29, 3
      %p104 = por %p102, %p103
      %p106 = scmp.ne.s32.totalorder %s89, %s105
      %p107 = scmp.eq.s32.totalorder %s29, 0
      %p108 = por %p106, %p107
      %s109 = ssub.s32 %s23, %s30
      %p110 = scmp.eq.s32.totalorder %s109, 0
      %s112 = sadd.s32 %s111, 1
      %s113 = scalar_select %p110, %s111, %s112
      %p116 = pneg %p110
      %p117 = scmp.eq.s32.totalorder %s23, 3
      %p118 = por %p116, %p117
      %p119 = scmp.ne.s32.totalorder %s111, %s114
      %p120 = scmp.eq.s32.totalorder %s23, 0
      %p121 = por %p119, %p120
      %p122 = scmp.ne.s32.totalorder %s111, %s114
      %p123 = scmp.eq.s32.totalorder %s28, 3
      %p124 = por %p122, %p123
      %p125 = scmp.ne.s32.totalorder %s114, %s115
      %p126 = scmp.eq.s32.totalorder %s28, 0
      %p127 = por %p125, %p126
      %p128 = scmp.ne.s32.totalorder %s114, %s115
      %p129 = scmp.eq.s32.totalorder %s29, 3
      %p130 = por %p128, %p129
      %p132 = scmp.ne.s32.totalorder %s115, %s131
      %p133 = scmp.eq.s32.totalorder %s29, 0
      %p134 = por %p132, %p133
      %s136 = sadd.s32 %s135, 1
      %p139 = scmp.eq.s32.totalorder %s23, 3
      %p140 = scmp.ne.s32.totalorder %s135, %s137
      %p141 = scmp.eq.s32.totalorder %s23, 0
      %p142 = por %p140, %p141
      %p143 = scmp.ne.s32.totalorder %s135, %s137
      %p144 = scmp.eq.s32.totalorder %s28, 3
      %p145 = por %p143, %p144
      %p146 = scmp.ne.s32.totalorder %s137, %s138
      %p147 = scmp.eq.s32.totalorder %s28, 0
      %p148 = por %p146, %p147
      %p149 = scmp.ne.s32.totalorder %s137, %s138
      %p150 = scmp.eq.s32.totalorder %s29, 3
      %p151 = por %p149, %p150
      %p153 = scmp.ne.s32.totalorder %s138, %s152
      %p154 = scmp.eq.s32.totalorder %s29, 0
      %p155 = por %p153, %p154
      %s156 = ssub.s32 %s23, %s30
      %p157 = scmp.eq.s32.totalorder %s156, 0
      %s159 = sadd.s32 %s158, 1
      %s160 = scalar_select %p157, %s158, %s159
      %p163 = pneg %p157
      %p164 = scmp.eq.s32.totalorder %s23, 3
      %p165 = por %p163, %p164
      %p166 = scmp.ne.s32.totalorder %s158, %s161
      %p167 = scmp.eq.s32.totalorder %s23, 0
      %p168 = por %p166, %p167
      %p169 = scmp.ne.s32.totalorder %s158, %s161
      %p170 = scmp.eq.s32.totalorder %s28, 3
      %p171 = por %p169, %p170
      %p172 = scmp.ne.s32.totalorder %s161, %s162
      %p173 = scmp.eq.s32.totalorder %s28, 0
      %p174 = por %p172, %p173
      %p175 = scmp.ne.s32.totalorder %s161, %s162
      %p176 = scmp.eq.s32.totalorder %s29, 3
      %p177 = por %p175, %p176
      %p179 = scmp.ne.s32.totalorder %s162, %s178
      %p180 = scmp.eq.s32.totalorder %s29, 0
      %p181 = por %p179, %p180
      %p182 = scmp.le.s32.totalorder 1, %s23
      %p183 = scmp.lt.s32.totalorder %s23, 5
      %p184 = pnand %p182, %p183
      %p185 = pneg %p184
      // Predicated region
      $region9: #{tpu_custom_call.1} parent=5 // pred_check
        _
      $region10: #{tpu_custom_call.1} parent=5 // pred_check_branch
        %187 = sbr.rel (%p184) target = $region12
      $region11: #{tpu_custom_call.1} parent=5 // pred_region
        %s188 = ssub.s32 %s23, 1
        // Predicated region
        $region13: #{tpu_custom_call.1} parent=11 // pred_check
          %p189 = pneg %p148
        $region14: #{tpu_custom_call.1} parent=11 // pred_check_branch
          %191 = sbr.rel (%p189) target = $region16
        $region15: #{tpu_custom_call.1} parent=11 // pred_region
          _
        $region16: #{tpu_custom_call.1} parent=11 // pred_fallthru
          _
      $region12: #{tpu_custom_call.1} parent=5 // pred_fallthru
        _
      %p192 = scmp.lt.s32.totalorder %s23, 4
      // Predicated region
      $region17: #{tpu_custom_call.1} parent=5 // pred_check
        %p193 = pneg %p192
      $region18: #{tpu_custom_call.1} parent=5 // pred_check_branch
        %195 = sbr.rel (%p193) target = $region20
      $region19: #{tpu_custom_call.1} parent=5 // pred_region
        // Predicated region
        $region21: #{tpu_custom_call.1} parent=19 // pred_check
          %p196 = pneg %p43
        $region22: #{tpu_custom_call.1} parent=19 // pred_check_branch
          %198 = sbr.rel (%p196) target = $region24
        $region23: #{tpu_custom_call.1} parent=19 // pred_region
          %s199 = sand.u32 %s33, 1
          %s200 = scalar_lea.sflag [#allocation5], %s199
          %s201 = sand.u32 %s33, 1
          %s202 = smul.addr %s201, 100
          %s203 = scalar_lea.vmem [#allocation4], %s202
          %s205 = ssub.s32 1600, 1600
          %206 = vsyncadd %s200, %s205
          %s207 = smul.addr %s23, 25
          %s208 = smul.addr %s207, 64
          %s209 = scalar_lea.hbm %s0, %s208
          %s210 = sshll.u32 %s203, 4
          %s211 = int_to_ptr.vmem [resolvable:$true] %s210
          %216 = dma.hbm_to_vmem [thread:$0]  %s209, 1600, %s211, %s200, 64, 64, 4
        $region24: #{tpu_custom_call.1} parent=19 // pred_fallthru
          _
        // Predicated region
        $region25: #{tpu_custom_call.1} parent=19 // pred_check
          %p217 = pneg %p69
        $region26: #{tpu_custom_call.1} parent=19 // pred_check_branch
          %219 = sbr.rel (%p217) target = $region28
        $region27: #{tpu_custom_call.1} parent=19 // pred_region
          %s220 = sand.u32 %s23, 1
          %s221 = scalar_lea.sflag [#allocation8], %s220
          %s222 = sand.u32 %s59, 1
          %s223 = smul.addr %s222, 576
          %s224 = scalar_lea.vmem [#allocation7], %s223
          %s226 = ssub.s32 9216, 9216
          %227 = vsyncadd %s221, %s226
          %s228 = smul.addr %s23, 144
          %s229 = smul.addr %s228, 64
          %s230 = scalar_lea.hbm %s1, %s229
          %s231 = sshll.u32 %s224, 4
          %s232 = int_to_ptr.vmem [resolvable:$true] %s231
          %237 = dma.hbm_to_vmem [thread:$0]  %s230, 9216, %s232, %s221, 64, 64, 4
        $region28: #{tpu_custom_call.1} parent=19 // pred_fallthru
          _
        // Predicated region
        $region29: #{tpu_custom_call.1} parent=19 // pred_check
          %p238 = pneg %p95
        $region30: #{tpu_custom_call.1} parent=19 // pred_check_branch
          %240 = sbr.rel (%p238) target = $region32
        $region31: #{tpu_custom_call.1} parent=19 // pred_region
          %s241 = sand.u32 %s23, 1
          %s242 = scalar_lea.sflag [#allocation8], %s241
          %s243 = sand.u32 %s85, 1
          %s244 = scalar_lea.vmem [#allocation9], %s243
          %s246 = ssub.s32 16, 16
          %247 = vsyncadd %s242, %s246
          %s248 = smul.addr %s23, 16
          %s249 = scalar_lea.hbm %s2, %s248
          %s251 = sshll.u32 %s244, 4
          %s252 = int_to_ptr.vmem [resolvable:$true] %s251
          %254 = dma.hbm_to_vmem [thread:$0]  %s249, 16, %s252, %s242
        $region32: #{tpu_custom_call.1} parent=19 // pred_fallthru
          _
        // Predicated region
        $region33: #{tpu_custom_call.1} parent=19 // pred_check
          %p255 = pneg %p121
        $region34: #{tpu_custom_call.1} parent=19 // pred_check_branch
          %257 = sbr.rel (%p255) target = $region36
        $region35: #{tpu_custom_call.1} parent=19 // pred_region
          %s258 = sand.u32 %s111, 1
          %s259 = scalar_lea.sflag [#allocation11], %s258
          %s260 = sand.u32 %s111, 1
          %s261 = scalar_lea.vmem [#allocation10], %s260
          %s263 = ssub.s32 16, 16
          %264 = vsyncadd %s259, %s263
          %s265 = smul.addr %s23, 16
          %s266 = scalar_lea.hbm %s3, %s265
          %s268 = sshll.u32 %s261, 4
          %s269 = int_to_ptr.vmem [resolvable:$true] %s268
          %271 = dma.hbm_to_vmem [thread:$0]  %s266, 16, %s269, %s259
        $region36: #{tpu_custom_call.1} parent=19 // pred_fallthru
          _
      $region20: #{tpu_custom_call.1} parent=5 // pred_fallthru
        _
      %p272 = scmp.le.s32.totalorder 1, %s23
      %p273 = scmp.lt.s32.totalorder %s23, 5
      %p274 = pnand %p272, %p273
      %p275 = pneg %p274
      // Predicated region
      $region37: #{tpu_custom_call.1} parent=5 // pred_check
        _
      $region38: #{tpu_custom_call.1} parent=5 // pred_check_branch
        %277 = sbr.rel (%p274) target = $region40
      $region39: #{tpu_custom_call.1} parent=5 // pred_region
        %s278 = ssub.s32 %s23, 1
        %s279 = sand.u32 %s36, 1
        %s280 = scalar_lea.sflag [#allocation5], %s279
        %s281 = sand.u32 %s36, 1
        %s282 = smul.addr %s281, 100
        %s283 = scalar_lea.vmem [#allocation4], %s282
        // Predicated region
        $region41: #{tpu_custom_call.1} parent=39 // pred_check
          %p284 = pneg %p49
        $region42: #{tpu_custom_call.1} parent=39 // pred_check_branch
          %286 = sbr.rel (%p284) target = $region44
        $region43: #{tpu_custom_call.1} parent=39 // pred_region
          %287 = dma.done %s280, 1600
        $region44: #{tpu_custom_call.1} parent=39 // pred_fallthru
          _
        %s288 = sand.u32 %s28, 1
        %s289 = scalar_lea.sflag [#allocation8], %s288
        %s290 = sand.u32 %s62, 1
        %s291 = smul.addr %s290, 576
        %s292 = scalar_lea.vmem [#allocation7], %s291
        // Predicated region
        $region45: #{tpu_custom_call.1} parent=39 // pred_check
          %p293 = pneg %p75
        $region46: #{tpu_custom_call.1} parent=39 // pred_check_branch
          %295 = sbr.rel (%p293) target = $region48
        $region47: #{tpu_custom_call.1} parent=39 // pred_region
          %296 = dma.done %s289, 9216
        $region48: #{tpu_custom_call.1} parent=39 // pred_fallthru
          _
        %s297 = sand.u32 %s28, 1
        %s298 = scalar_lea.sflag [#allocation8], %s297
        %s299 = sand.u32 %s88, 1
        %s300 = scalar_lea.vmem [#allocation9], %s299
        // Predicated region
        $region49: #{tpu_custom_call.1} parent=39 // pred_check
          %p301 = pneg %p101
        $region50: #{tpu_custom_call.1} parent=39 // pred_check_branch
          %303 = sbr.rel (%p301) target = $region52
        $region51: #{tpu_custom_call.1} parent=39 // pred_region
          %304 = dma.done %s298, 16
        $region52: #{tpu_custom_call.1} parent=39 // pred_fallthru
          _
        %s305 = sand.u32 %s114, 1
        %s306 = scalar_lea.sflag [#allocation11], %s305
        %s307 = sand.u32 %s114, 1
        %s308 = scalar_lea.vmem [#allocation10], %s307
        // Predicated region
        $region53: #{tpu_custom_call.1} parent=39 // pred_check
          %p309 = pneg %p127
        $region54: #{tpu_custom_call.1} parent=39 // pred_check_branch
          %311 = sbr.rel (%p309) target = $region56
        $region55: #{tpu_custom_call.1} parent=39 // pred_region
          %312 = dma.done %s306, 16
        $region56: #{tpu_custom_call.1} parent=39 // pred_fallthru
          _
        %s313 = sand.u32 %s36, 1
        %s314 = scalar_lea.sflag [#allocation5], %s313
        %s315 = sand.u32 %s36, 1
        %s316 = smul.addr %s315, 100
        %s317 = scalar_lea.vmem [#allocation4], %s316
        %p318 = pneg %p49
        %p319 = pneg %p46
        %s320 = sand.u32 %s28, 1
        %s321 = scalar_lea.sflag [#allocation8], %s320
        %s322 = sand.u32 %s62, 1
        %s323 = smul.addr %s322, 576
        %s324 = scalar_lea.vmem [#allocation7], %s323
        %p325 = pneg %p75
        %p326 = pneg %p72
        %s327 = sand.u32 %s28, 1
        %s328 = scalar_lea.sflag [#allocation8], %s327
        %s329 = sand.u32 %s88, 1
        %s330 = scalar_lea.vmem [#allocation9], %s329
        %p331 = pneg %p101
        %p332 = pneg %p98
        %s333 = sand.u32 %s114, 1
        %s334 = scalar_lea.sflag [#allocation11], %s333
        %s335 = sand.u32 %s114, 1
        %s336 = scalar_lea.vmem [#allocation10], %s335
        %p337 = pneg %p127
        %p338 = pneg %p124
        %p339 = pneg %p148
        %p340 = pneg %p145
        %p341 = pneg %p174
        %p342 = pneg %p171
        %s343 = sand.u32 %s161, 1
        %s344 = scalar_lea.sflag [#allocation6], %s343
        %s345 = sand.u32 %s161, 1
        %s346 = smul.addr %s345, 200
        %s347 = scalar_lea.vmem [#allocation12], %s346
        %349 = vst [vmem:[#allocation2] sm:$0xf] 0
        %350 = vst [vmem:[#allocation2 + $0x4] sm:$0xf] 0
        %351 = vst [vmem:[#allocation2 + $0x6c] sm:$0xf] 0
        %352 = vst [vmem:[#allocation2 + $0x70] sm:$0xf] 0
        %v353 = vld [vmem:[%s283] sm:$0xf]
        %v354 = vld [vmem:[%s283 + $0x4] sm:$0xf]
        %v355 = vld [vmem:[%s283 + $0x8] sm:$0xf]
        %v356 = vld [vmem:[%s283 + $0xc] sm:$0xf]
        %v357 = vld [vmem:[%s283 + $0x10] sm:$0xf]
        %v358 = vld [vmem:[%s283 + $0x14] sm:$0xf]
        %v359 = vld [vmem:[%s283 + $0x18] sm:$0xf]
        %v360 = vld [vmem:[%s283 + $0x1c] sm:$0xf]
        %v361 = vld [vmem:[%s283 + $0x20] sm:$0xf]
        %v362 = vld [vmem:[%s283 + $0x24] sm:$0xf]
        %v363 = vld [vmem:[%s283 + $0x28] sm:$0xf]
        %v364 = vld [vmem:[%s283 + $0x2c] sm:$0xf]
        %v365 = vld [vmem:[%s283 + $0x30] sm:$0xf]
        %v366 = vld [vmem:[%s283 + $0x34] sm:$0xf]
        %v367 = vld [vmem:[%s283 + $0x38] sm:$0xf]
        %v368 = vld [vmem:[%s283 + $0x3c] sm:$0xf]
        %v369 = vld [vmem:[%s283 + $0x40] sm:$0xf]
        %v370 = vld [vmem:[%s283 + $0x44] sm:$0xf]
        %v371 = vld [vmem:[%s283 + $0x48] sm:$0xf]
        %v372 = vld [vmem:[%s283 + $0x4c] sm:$0xf]
        %v373 = vld [vmem:[%s283 + $0x50] sm:$0xf]
        %v374 = vld [vmem:[%s283 + $0x54] sm:$0xf]
        %v375 = vld [vmem:[%s283 + $0x58] sm:$0xf]
        %v376 = vld [vmem:[%s283 + $0x5c] sm:$0xf]
        %v377 = vld [vmem:[%s283 + $0x60] sm:$0xf]
        %v378 = vmax.bf16 %v353, 0
        %v379 = vmax.bf16 %v354, 0
        %v380 = vmax.bf16 %v355, 0
        %v381 = vmax.bf16 %v356, 0
        %v382 = vmax.bf16 %v357, 0
        %v383 = vmax.bf16 %v358, 0
        %v384 = vmax.bf16 %v359, 0
        %v385 = vmax.bf16 %v360, 0
        %v386 = vmax.bf16 %v361, 0
        %v387 = vmax.bf16 %v362, 0
        %v388 = vmax.bf16 %v363, 0
        %v389 = vmax.bf16 %v364, 0
        %v390 = vmax.bf16 %v365, 0
        %v391 = vmax.bf16 %v366, 0
        %v392 = vmax.bf16 %v367, 0
        %v393 = vmax.bf16 %v368, 0
        %v394 = vmax.bf16 %v369, 0
        %v395 = vmax.bf16 %v370, 0
        %v396 = vmax.bf16 %v371, 0
        %v397 = vmax.bf16 %v372, 0
        %v398 = vmax.bf16 %v373, 0
        %v399 = vmax.bf16 %v374, 0
        %v400 = vmax.bf16 %v375, 0
        %v401 = vmax.bf16 %v376, 0
        %v402 = vmax.bf16 %v377, 0
        %403 = vst [vmem:[#allocation2 + $0x8] sm:$0xf] %v378
        %404 = vst [vmem:[#allocation2 + $0xc] sm:$0xf] %v379
        %405 = vst [vmem:[#allocation2 + $0x10] sm:$0xf] %v380
        %406 = vst [vmem:[#allocation2 + $0x14] sm:$0xf] %v381
        %407 = vst [vmem:[#allocation2 + $0x18] sm:$0xf] %v382
        %408 = vst [vmem:[#allocation2 + $0x1c] sm:$0xf] %v383
        %409 = vst [vmem:[#allocation2 + $0x20] sm:$0xf] %v384
        %410 = vst [vmem:[#allocation2 + $0x24] sm:$0xf] %v385
        %411 = vst [vmem:[#allocation2 + $0x28] sm:$0xf] %v386
        %412 = vst [vmem:[#allocation2 + $0x2c] sm:$0xf] %v387
        %413 = vst [vmem:[#allocation2 + $0x30] sm:$0xf] %v388
        %414 = vst [vmem:[#allocation2 + $0x34] sm:$0xf] %v389
        %415 = vst [vmem:[#allocation2 + $0x38] sm:$0xf] %v390
        %416 = vst [vmem:[#allocation2 + $0x3c] sm:$0xf] %v391
        %417 = vst [vmem:[#allocation2 + $0x40] sm:$0xf] %v392
        %418 = vst [vmem:[#allocation2 + $0x44] sm:$0xf] %v393
        %419 = vst [vmem:[#allocation2 + $0x48] sm:$0xf] %v394
        %420 = vst [vmem:[#allocation2 + $0x4c] sm:$0xf] %v395
        %421 = vst [vmem:[#allocation2 + $0x50] sm:$0xf] %v396
        %422 = vst [vmem:[#allocation2 + $0x54] sm:$0xf] %v397
        %423 = vst [vmem:[#allocation2 + $0x58] sm:$0xf] %v398
        %424 = vst [vmem:[#allocation2 + $0x5c] sm:$0xf] %v399
        %425 = vst [vmem:[#allocation2 + $0x60] sm:$0xf] %v400
        %426 = vst [vmem:[#allocation2 + $0x64] sm:$0xf] %v401
        %427 = vst [vmem:[#allocation2 + $0x68] sm:$0xf] %v402
        %v428 = vld [vmem:[#allocation2] sm:$0xc]
        %v429 = vld [vmem:[#allocation2 + $0x4] sm:$0xf]
        %v430 = vld [vmem:[#allocation2 + $0x8] sm:$0xf]
        %v431 = vld [vmem:[#allocation2 + $0xc] sm:$0xf]
        %v432 = vld [vmem:[#allocation2 + $0x10] sm:$0xf]
        %v433 = vld [vmem:[#allocation2 + $0x14] sm:$0xf]
        %v434 = vld [vmem:[#allocation2 + $0x18] sm:$0xf]
        %v435 = vld [vmem:[#allocation2 + $0x1c] sm:$0xf]
        %v436 = vld [vmem:[#allocation2 + $0x20] sm:$0xf]
        %v437 = vld [vmem:[#allocation2 + $0x24] sm:$0xf]
        %v438 = vld [vmem:[#allocation2 + $0x28] sm:$0xf]
        %v439 = vld [vmem:[#allocation2 + $0x2c] sm:$0xf]
        %v440 = vld [vmem:[#allocation2 + $0x30] sm:$0xf]
        %v441 = vld [vmem:[#allocation2 + $0x34] sm:$0xf]
        %v442 = vld [vmem:[#allocation2 + $0x38] sm:$0xf]
        %v443 = vld [vmem:[#allocation2 + $0x3c] sm:$0xf]
        %v444 = vld [vmem:[#allocation2 + $0x40] sm:$0xf]
        %v445 = vld [vmem:[#allocation2 + $0x44] sm:$0xf]
        %v446 = vld [vmem:[#allocation2 + $0x48] sm:$0xf]
        %v447 = vld [vmem:[#allocation2 + $0x4c] sm:$0xf]
        %v448 = vld [vmem:[#allocation2 + $0x50] sm:$0xf]
        %v449 = vld [vmem:[#allocation2 + $0x54] sm:$0xf]
        %v450 = vld [vmem:[#allocation2 + $0x58] sm:$0xf]
        %v451 = vld [vmem:[#allocation2 + $0x5c] sm:$0xf]
        %v452 = vld [vmem:[#allocation2 + $0x60] sm:$0xf]
        %v453 = vld [vmem:[#allocation2 + $0x64] sm:$0x7]
        %vm454 = vsmask.f32 1280
        %vm455 = vsmask.f32 5392
        %vm456 = vmor %vm454, %vm455
        %v458 = vshrl.u32 %v428, 16
        %v460 = vrot.slane %v458, 6
        %v461 = vshll.u32 %v428, 16
        %v463 = vrot.slane %v461, 7
        %v464 = vor.u32 %v460, %v463
        %v465 = vrot.slane %v464, 4
        %v467 = vshrl.u32 %v429, 16
        %v469 = vrot.slane %v467, 6
        %v470 = vshll.u32 %v429, 16
        %v472 = vrot.slane %v470, 7
        %v473 = vor.u32 %v469, %v472
        %v474 = vsel %vm456, %v465, %v473
        %v475 = vrot.slane %v473, 4
        %v477 = vshrl.u32 %v430, 16
        %v479 = vrot.slane %v477, 6
        %v480 = vshll.u32 %v430, 16
        %v482 = vrot.slane %v480, 7
        %v483 = vor.u32 %v479, %v482
        %v484 = vsel %vm456, %v475, %v483
        %v485 = vrot.slane %v483, 4
        %v487 = vshrl.u32 %v431, 16
        %v489 = vrot.slane %v487, 6
        %v490 = vshll.u32 %v431, 16
        %v492 = vrot.slane %v490, 7
        %v493 = vor.u32 %v489, %v492
        %v494 = vsel %vm456, %v485, %v493
        %v495 = vrot.slane %v493, 4
        %v497 = vshrl.u32 %v432, 16
        %v499 = vrot.slane %v497, 6
        %v500 = vshll.u32 %v432, 16
        %v502 = vrot.slane %v500, 7
        %v503 = vor.u32 %v499, %v502
        %v504 = vsel %vm456, %v495, %v503
        %v505 = vrot.slane %v503, 4
        %v507 = vshrl.u32 %v433, 16
        %v509 = vrot.slane %v507, 6
        %v510 = vshll.u32 %v433, 16
        %v512 = vrot.slane %v510, 7
        %v513 = vor.u32 %v509, %v512
        %v514 = vsel %vm456, %v505, %v513
        %v515 = vrot.slane %v513, 4
        %v517 = vshrl.u32 %v434, 16
        %v519 = vrot.slane %v517, 6
        %v520 = vshll.u32 %v434, 16
        %v522 = vrot.slane %v520, 7
        %v523 = vor.u32 %v519, %v522
        %v524 = vsel %vm456, %v515, %v523
        %v525 = vrot.slane %v523, 4
        %v527 = vshrl.u32 %v435, 16
        %v529 = vrot.slane %v527, 6
        %v530 = vshll.u32 %v435, 16
        %v532 = vrot.slane %v530, 7
        %v533 = vor.u32 %v529, %v532
        %v534 = vsel %vm456, %v525, %v533
        %v535 = vrot.slane %v533, 4
        %v537 = vshrl.u32 %v436, 16
        %v539 = vrot.slane %v537, 6
        %v540 = vshll.u32 %v436, 16
        %v542 = vrot.slane %v540, 7
        %v543 = vor.u32 %v539, %v542
        %v544 = vsel %vm456, %v535, %v543
        %v545 = vrot.slane %v543, 4
        %v547 = vshrl.u32 %v437, 16
        %v549 = vrot.slane %v547, 6
        %v550 = vshll.u32 %v437, 16
        %v552 = vrot.slane %v550, 7
        %v553 = vor.u32 %v549, %v552
        %v554 = vsel %vm456, %v545, %v553
        %v555 = vrot.slane %v553, 4
        %v557 = vshrl.u32 %v438, 16
        %v559 = vrot.slane %v557, 6
        %v560 = vshll.u32 %v438, 16
        %v562 = vrot.slane %v560, 7
        %v563 = vor.u32 %v559, %v562
        %v564 = vsel %vm456, %v555, %v563
        %v565 = vrot.slane %v563, 4
        %v567 = vshrl.u32 %v439, 16
        %v569 = vrot.slane %v567, 6
        %v570 = vshll.u32 %v439, 16
        %v572 = vrot.slane %v570, 7
        %v573 = vor.u32 %v569, %v572
        %v574 = vsel %vm456, %v565, %v573
        %v575 = vrot.slane %v573, 4
        %v577 = vshrl.u32 %v440, 16
        %v579 = vrot.slane %v577, 6
        %v580 = vshll.u32 %v440, 16
        %v582 = vrot.slane %v580, 7
        %v583 = vor.u32 %v579, %v582
        %v584 = vsel %vm456, %v575, %v583
        %v585 = vrot.slane %v583, 4
        %v587 = vshrl.u32 %v441, 16
        %v589 = vrot.slane %v587, 6
        %v590 = vshll.u32 %v441, 16
        %v592 = vrot.slane %v590, 7
        %v593 = vor.u32 %v589, %v592
        %v594 = vsel %vm456, %v585, %v593
        %v595 = vrot.slane %v593, 4
        %v597 = vshrl.u32 %v442, 16
        %v599 = vrot.slane %v597, 6
        %v600 = vshll.u32 %v442, 16
        %v602 = vrot.slane %v600, 7
        %v603 = vor.u32 %v599, %v602
        %v604 = vsel %vm456, %v595, %v603
        %v605 = vrot.slane %v603, 4
        %v607 = vshrl.u32 %v443, 16
        %v609 = vrot.slane %v607, 6
        %v610 = vshll.u32 %v443, 16
        %v612 = vrot.slane %v610, 7
        %v613 = vor.u32 %v609, %v612
        %v614 = vsel %vm456, %v605, %v613
        %v615 = vrot.slane %v613, 4
        %v617 = vshrl.u32 %v444, 16
        %v619 = vrot.slane %v617, 6
        %v620 = vshll.u32 %v444, 16
        %v622 = vrot.slane %v620, 7
        %v623 = vor.u32 %v619, %v622
        %v624 = vsel %vm456, %v615, %v623
        %v625 = vrot.slane %v623, 4
        %v627 = vshrl.u32 %v445, 16
        %v629 = vrot.slane %v627, 6
        %v630 = vshll.u32 %v445, 16
        %v632 = vrot.slane %v630, 7
        %v633 = vor.u32 %v629, %v632
        %v634 = vsel %vm456, %v625, %v633
        %v635 = vrot.slane %v633, 4
        %v637 = vshrl.u32 %v446, 16
        %v639 = vrot.slane %v637, 6
        %v640 = vshll.u32 %v446, 16
        %v642 = vrot.slane %v640, 7
        %v643 = vor.u32 %v639, %v642
        %v644 = vsel %vm456, %v635, %v643
        %v645 = vrot.slane %v643, 4
        %v647 = vshrl.u32 %v447, 16
        %v649 = vrot.slane %v647, 6
        %v650 = vshll.u32 %v447, 16
        %v652 = vrot.slane %v650, 7
        %v653 = vor.u32 %v649, %v652
        %v654 = vsel %vm456, %v645, %v653
        %v655 = vrot.slane %v653, 4
        %v657 = vshrl.u32 %v448, 16
        %v659 = vrot.slane %v657, 6
        %v660 = vshll.u32 %v448, 16
        %v662 = vrot.slane %v660, 7
        %v663 = vor.u32 %v659, %v662
        %v664 = vsel %vm456, %v655, %v663
        %v665 = vrot.slane %v663, 4
        %v667 = vshrl.u32 %v449, 16
        %v669 = vrot.slane %v667, 6
        %v670 = vshll.u32 %v449, 16
        %v672 = vrot.slane %v670, 7
        %v673 = vor.u32 %v669, %v672
        %v674 = vsel %vm456, %v665, %v673
        %v675 = vrot.slane %v673, 4
        %v677 = vshrl.u32 %v450, 16
        %v679 = vrot.slane %v677, 6
        %v680 = vshll.u32 %v450, 16
        %v682 = vrot.slane %v680, 7
        %v683 = vor.u32 %v679, %v682
        %v684 = vsel %vm456, %v675, %v683
        %v685 = vrot.slane %v683, 4
        %v687 = vshrl.u32 %v451, 16
        %v689 = vrot.slane %v687, 6
        %v690 = vshll.u32 %v451, 16
        %v692 = vrot.slane %v690, 7
        %v693 = vor.u32 %v689, %v692
        %v694 = vsel %vm456, %v685, %v693
        %v695 = vrot.slane %v693, 4
        %v697 = vshrl.u32 %v452, 16
        %v699 = vrot.slane %v697, 6
        %v700 = vshll.u32 %v452, 16
        %v702 = vrot.slane %v700, 7
        %v703 = vor.u32 %v699, %v702
        %v704 = vsel %vm456, %v695, %v703
        %v705 = vrot.slane %v703, 4
        %v707 = vshrl.u32 %v453, 16
        %v709 = vrot.slane %v707, 6
        %v710 = vshll.u32 %v453, 16
        %v712 = vrot.slane %v710, 7
        %v713 = vor.u32 %v709, %v712
        %v714 = vsel %vm456, %v705, %v713
        %740 = vst [vmem:[#allocation3] sm:$0xf] %v474
        %741 = vst [vmem:[#allocation3 + $0x24] sm:$0xf] %v484
        %742 = vst [vmem:[#allocation3 + $0x48] sm:$0xf] %v494
        %743 = vst [vmem:[#allocation3 + $0x6c] sm:$0xf] %v504
        %744 = vst [vmem:[#allocation3 + $0x90] sm:$0xf] %v514
        %745 = vst [vmem:[#allocation3 + $0xb4] sm:$0xf] %v524
        %746 = vst [vmem:[#allocation3 + $0xd8] sm:$0xf] %v534
        %747 = vst [vmem:[#allocation3 + $0xfc] sm:$0xf] %v544
        %748 = vst [vmem:[#allocation3 + $0x120] sm:$0xf] %v554
        %749 = vst [vmem:[#allocation3 + $0x144] sm:$0xf] %v564
        %750 = vst [vmem:[#allocation3 + $0x168] sm:$0xf] %v574
        %751 = vst [vmem:[#allocation3 + $0x18c] sm:$0xf] %v584
        %752 = vst [vmem:[#allocation3 + $0x1b0] sm:$0xf] %v594
        %753 = vst [vmem:[#allocation3 + $0x1d4] sm:$0xf] %v604
        %754 = vst [vmem:[#allocation3 + $0x1f8] sm:$0xf] %v614
        %755 = vst [vmem:[#allocation3 + $0x21c] sm:$0xf] %v624
        %756 = vst [vmem:[#allocation3 + $0x240] sm:$0xf] %v634
        %757 = vst [vmem:[#allocation3 + $0x264] sm:$0xf] %v644
        %758 = vst [vmem:[#allocation3 + $0x288] sm:$0xf] %v654
        %759 = vst [vmem:[#allocation3 + $0x2ac] sm:$0xf] %v664
        %760 = vst [vmem:[#allocation3 + $0x2d0] sm:$0xf] %v674
        %761 = vst [vmem:[#allocation3 + $0x2f4] sm:$0xf] %v684
        %762 = vst [vmem:[#allocation3 + $0x318] sm:$0xf] %v694
        %763 = vst [vmem:[#allocation3 + $0x33c] sm:$0xf] %v704
        %764 = vst [vmem:[#allocation3 + $0x360] sm:$0xf] %v714
        %v765 = vld [vmem:[#allocation2] sm:$0x8]
        %v766 = vld [vmem:[#allocation2 + $0x4] sm:$0xf]
        %v767 = vld [vmem:[#allocation2 + $0x8] sm:$0xf]
        %v768 = vld [vmem:[#allocation2 + $0xc] sm:$0xf]
        %v769 = vld [vmem:[#allocation2 + $0x10] sm:$0xf]
        %v770 = vld [vmem:[#allocation2 + $0x14] sm:$0xf]
        %v771 = vld [vmem:[#allocation2 + $0x18] sm:$0xf]
        %v772 = vld [vmem:[#allocation2 + $0x1c] sm:$0xf]
        %v773 = vld [vmem:[#allocation2 + $0x20] sm:$0xf]
        %v774 = vld [vmem:[#allocation2 + $0x24] sm:$0xf]
        %v775 = vld [vmem:[#allocation2 + $0x28] sm:$0xf]
        %v776 = vld [vmem:[#allocation2 + $0x2c] sm:$0xf]
        %v777 = vld [vmem:[#allocation2 + $0x30] sm:$0xf]
        %v778 = vld [vmem:[#allocation2 + $0x34] sm:$0xf]
        %v779 = vld [vmem:[#allocation2 + $0x38] sm:$0xf]
        %v780 = vld [vmem:[#allocation2 + $0x3c] sm:$0xf]
        %v781 = vld [vmem:[#allocation2 + $0x40] sm:$0xf]
        %v782 = vld [vmem:[#allocation2 + $0x44] sm:$0xf]
        %v783 = vld [vmem:[#allocation2 + $0x48] sm:$0xf]
        %v784 = vld [vmem:[#allocation2 + $0x4c] sm:$0xf]
        %v785 = vld [vmem:[#allocation2 + $0x50] sm:$0xf]
        %v786 = vld [vmem:[#allocation2 + $0x54] sm:$0xf]
        %v787 = vld [vmem:[#allocation2 + $0x58] sm:$0xf]
        %v788 = vld [vmem:[#allocation2 + $0x5c] sm:$0xf]
        %v789 = vld [vmem:[#allocation2 + $0x60] sm:$0xf]
        %v790 = vld [vmem:[#allocation2 + $0x64] sm:$0x7]
        %vm817 = vcmask 1040384
        %vm818 = vcmask 1044484
        %vm819 = vmor %vm817, %vm818
        %v820 = vrot.slane %v765, 7
        %v821 = vrot.slane %v820, 4
        %v822 = vrot.slane %v766, 7
        %v823 = vsel %vm819, %v821, %v822
        %v824 = vrot.slane %v822, 4
        %v825 = vrot.slane %v767, 7
        %v826 = vsel %vm819, %v824, %v825
        %v827 = vrot.slane %v825, 4
        %v828 = vrot.slane %v768, 7
        %v829 = vsel %vm819, %v827, %v828
        %v830 = vrot.slane %v828, 4
        %v831 = vrot.slane %v769, 7
        %v832 = vsel %vm819, %v830, %v831
        %v833 = vrot.slane %v831, 4
        %v834 = vrot.slane %v770, 7
        %v835 = vsel %vm819, %v833, %v834
        %v836 = vrot.slane %v834, 4
        %v837 = vrot.slane %v771, 7
        %v838 = vsel %vm819, %v836, %v837
        %v839 = vrot.slane %v837, 4
        %v840 = vrot.slane %v772, 7
        %v841 = vsel %vm819, %v839, %v840
        %v842 = vrot.slane %v840, 4
        %v843 = vrot.slane %v773, 7
        %v844 = vsel %vm819, %v842, %v843
        %v845 = vrot.slane %v843, 4
        %v846 = vrot.slane %v774, 7
        %v847 = vsel %vm819, %v845, %v846
        %v848 = vrot.slane %v846, 4
        %v849 = vrot.slane %v775, 7
        %v850 = vsel %vm819, %v848, %v849
        %v851 = vrot.slane %v849, 4
        %v852 = vrot.slane %v776, 7
        %v853 = vsel %vm819, %v851, %v852
        %v854 = vrot.slane %v852, 4
        %v855 = vrot.slane %v777, 7
        %v856 = vsel %vm819, %v854, %v855
        %v857 = vrot.slane %v855, 4
        %v858 = vrot.slane %v778, 7
        %v859 = vsel %vm819, %v857, %v858
        %v860 = vrot.slane %v858, 4
        %v861 = vrot.slane %v779, 7
        %v862 = vsel %vm819, %v860, %v861
        %v863 = vrot.slane %v861, 4
        %v864 = vrot.slane %v780, 7
        %v865 = vsel %vm819, %v863, %v864
        %v866 = vrot.slane %v864, 4
        %v867 = vrot.slane %v781, 7
        %v868 = vsel %vm819, %v866, %v867
        %v869 = vrot.slane %v867, 4
        %v870 = vrot.slane %v782, 7
        %v871 = vsel %vm819, %v869, %v870
        %v872 = vrot.slane %v870, 4
        %v873 = vrot.slane %v783, 7
        %v874 = vsel %vm819, %v872, %v873
        %v875 = vrot.slane %v873, 4
        %v876 = vrot.slane %v784, 7
        %v877 = vsel %vm819, %v875, %v876
        %v878 = vrot.slane %v876, 4
        %v879 = vrot.slane %v785, 7
        %v880 = vsel %vm819, %v878, %v879
        %v881 = vrot.slane %v879, 4
        %v882 = vrot.slane %v786, 7
        %v883 = vsel %vm819, %v881, %v882
        %v884 = vrot.slane %v882, 4
        %v885 = vrot.slane %v787, 7
        %v886 = vsel %vm819, %v884, %v885
        %v887 = vrot.slane %v885, 4
        %v888 = vrot.slane %v788, 7
        %v889 = vsel %vm819, %v887, %v888
        %v890 = vrot.slane %v888, 4
        %v891 = vrot.slane %v789, 7
        %v892 = vsel %vm819, %v890, %v891
        %v893 = vrot.slane %v891, 4
        %v894 = vrot.slane %v790, 7
        %v895 = vsel %vm819, %v893, %v894
        %921 = vst [vmem:[#allocation3 + $0x4] sm:$0xf] %v823
        %922 = vst [vmem:[#allocation3 + $0x28] sm:$0xf] %v826
        %923 = vst [vmem:[#allocation3 + $0x4c] sm:$0xf] %v829
        %924 = vst [vmem:[#allocation3 + $0x70] sm:$0xf] %v832
        %925 = vst [vmem:[#allocation3 + $0x94] sm:$0xf] %v835
        %926 = vst [vmem:[#allocation3 + $0xb8] sm:$0xf] %v838
        %927 = vst [vmem:[#allocation3 + $0xdc] sm:$0xf] %v841
        %928 = vst [vmem:[#allocation3 + $0x100] sm:$0xf] %v844
        %929 = vst [vmem:[#allocation3 + $0x124] sm:$0xf] %v847
        %930 = vst [vmem:[#allocation3 + $0x148] sm:$0xf] %v850
        %931 = vst [vmem:[#allocation3 + $0x16c] sm:$0xf] %v853
        %932 = vst [vmem:[#allocation3 + $0x190] sm:$0xf] %v856
        %933 = vst [vmem:[#allocation3 + $0x1b4] sm:$0xf] %v859
        %934 = vst [vmem:[#allocation3 + $0x1d8] sm:$0xf] %v862
        %935 = vst [vmem:[#allocation3 + $0x1fc] sm:$0xf] %v865
        %936 = vst [vmem:[#allocation3 + $0x220] sm:$0xf] %v868
        %937 = vst [vmem:[#allocation3 + $0x244] sm:$0xf] %v871
        %938 = vst [vmem:[#allocation3 + $0x268] sm:$0xf] %v874
        %939 = vst [vmem:[#allocation3 + $0x28c] sm:$0xf] %v877
        %940 = vst [vmem:[#allocation3 + $0x2b0] sm:$0xf] %v880
        %941 = vst [vmem:[#allocation3 + $0x2d4] sm:$0xf] %v883
        %942 = vst [vmem:[#allocation3 + $0x2f8] sm:$0xf] %v886
        %943 = vst [vmem:[#allocation3 + $0x31c] sm:$0xf] %v889
        %944 = vst [vmem:[#allocation3 + $0x340] sm:$0xf] %v892
        %945 = vst [vmem:[#allocation3 + $0x364] sm:$0xf] %v895
        %v946 = vld [vmem:[#allocation2] sm:$0x8]
        %v947 = vld [vmem:[#allocation2 + $0x4] sm:$0xf]
        %v948 = vld [vmem:[#allocation2 + $0x8] sm:$0xf]
        %v949 = vld [vmem:[#allocation2 + $0xc] sm:$0xf]
        %v950 = vld [vmem:[#allocation2 + $0x10] sm:$0xf]
        %v951 = vld [vmem:[#allocation2 + $0x14] sm:$0xf]
        %v952 = vld [vmem:[#allocation2 + $0x18] sm:$0xf]
        %v953 = vld [vmem:[#allocation2 + $0x1c] sm:$0xf]
        %v954 = vld [vmem:[#allocation2 + $0x20] sm:$0xf]
        %v955 = vld [vmem:[#allocation2 + $0x24] sm:$0xf]
        %v956 = vld [vmem:[#allocation2 + $0x28] sm:$0xf]
        %v957 = vld [vmem:[#allocation2 + $0x2c] sm:$0xf]
        %v958 = vld [vmem:[#allocation2 + $0x30] sm:$0xf]
        %v959 = vld [vmem:[#allocation2 + $0x34] sm:$0xf]
        %v960 = vld [vmem:[#allocation2 + $0x38] sm:$0xf]
        %v961 = vld [vmem:[#allocation2 + $0x3c] sm:$0xf]
        %v962 = vld [vmem:[#allocation2 + $0x40] sm:$0xf]
        %v963 = vld [vmem:[#allocation2 + $0x44] sm:$0xf]
        %v964 = vld [vmem:[#allocation2 + $0x48] sm:$0xf]
        %v965 = vld [vmem:[#allocation2 + $0x4c] sm:$0xf]
        %v966 = vld [vmem:[#allocation2 + $0x50] sm:$0xf]
        %v967 = vld [vmem:[#allocation2 + $0x54] sm:$0xf]
        %v968 = vld [vmem:[#allocation2 + $0x58] sm:$0xf]
        %v969 = vld [vmem:[#allocation2 + $0x5c] sm:$0xf]
        %v970 = vld [vmem:[#allocation2 + $0x60] sm:$0xf]
        %v971 = vld [vmem:[#allocation2 + $0x64] sm:$0xf]
        %vm972 = vsmask.f32 256
        %vm973 = vsmask.f32 4368
        %vm974 = vmor %vm972, %vm973
        %v976 = vshrl.u32 %v946, 16
        %v978 = vrot.slane %v976, 7
        %v979 = vrot.slane %v978, 4
        %v981 = vshrl.u32 %v947, 16
        %v983 = vrot.slane %v981, 7
        %v984 = vshll.u32 %v947, 16
        %v986 = vor.u32 %v983, %v984
        %v987 = vsel %vm974, %v979, %v986
        %v988 = vrot.slane %v983, 4
        %v990 = vshrl.u32 %v948, 16
        %v992 = vrot.slane %v990, 7
        %v993 = vshll.u32 %v948, 16
        %v995 = vor.u32 %v992, %v993
        %v996 = vsel %vm974, %v988, %v995
        %v997 = vrot.slane %v992, 4
        %v999 = vshrl.u32 %v949, 16
        %v1001 = vrot.slane %v999, 7
        %v1002 = vshll.u32 %v949, 16
        %v1004 = vor.u32 %v1001, %v1002
        %v1005 = vsel %vm974, %v997, %v1004
        %v1006 = vrot.slane %v1001, 4
        %v1008 = vshrl.u32 %v950, 16
        %v1010 = vrot.slane %v1008, 7
        %v1011 = vshll.u32 %v950, 16
        %v1013 = vor.u32 %v1010, %v1011
        %v1014 = vsel %vm974, %v1006, %v1013
        %v1015 = vrot.slane %v1010, 4
        %v1017 = vshrl.u32 %v951, 16
        %v1019 = vrot.slane %v1017, 7
        %v1020 = vshll.u32 %v951, 16
        %v1022 = vor.u32 %v1019, %v1020
        %v1023 = vsel %vm974, %v1015, %v1022
        %v1024 = vrot.slane %v1019, 4
        %v1026 = vshrl.u32 %v952, 16
        %v1028 = vrot.slane %v1026, 7
        %v1029 = vshll.u32 %v952, 16
        %v1031 = vor.u32 %v1028, %v1029
        %v1032 = vsel %vm974, %v1024, %v1031
        %v1033 = vrot.slane %v1028, 4
        %v1035 = vshrl.u32 %v953, 16
        %v1037 = vrot.slane %v1035, 7
        %v1038 = vshll.u32 %v953, 16
        %v1040 = vor.u32 %v1037, %v1038
        %v1041 = vsel %vm974, %v1033, %v1040
        %v1042 = vrot.slane %v1037, 4
        %v1044 = vshrl.u32 %v954, 16
        %v1046 = vrot.slane %v1044, 7
        %v1047 = vshll.u32 %v954, 16
        %v1049 = vor.u32 %v1046, %v1047
        %v1050 = vsel %vm974, %v1042, %v1049
        %v1051 = vrot.slane %v1046, 4
        %v1053 = vshrl.u32 %v955, 16
        %v1055 = vrot.slane %v1053, 7
        %v1056 = vshll.u32 %v955, 16
        %v1058 = vor.u32 %v1055, %v1056
        %v1059 = vsel %vm974, %v1051, %v1058
        %v1060 = vrot.slane %v1055, 4
        %v1062 = vshrl.u32 %v956, 16
        %v1064 = vrot.slane %v1062, 7
        %v1065 = vshll.u32 %v956, 16
        %v1067 = vor.u32 %v1064, %v1065
        %v1068 = vsel %vm974, %v1060, %v1067
        %v1069 = vrot.slane %v1064, 4
        %v1071 = vshrl.u32 %v957, 16
        %v1073 = vrot.slane %v1071, 7
        %v1074 = vshll.u32 %v957, 16
        %v1076 = vor.u32 %v1073, %v1074
        %v1077 = vsel %vm974, %v1069, %v1076
        %v1078 = vrot.slane %v1073, 4
        %v1080 = vshrl.u32 %v958, 16
        %v1082 = vrot.slane %v1080, 7
        %v1083 = vshll.u32 %v958, 16
        %v1085 = vor.u32 %v1082, %v1083
        %v1086 = vsel %vm974, %v1078, %v1085
        %v1087 = vrot.slane %v1082, 4
        %v1089 = vshrl.u32 %v959, 16
        %v1091 = vrot.slane %v1089, 7
        %v1092 = vshll.u32 %v959, 16
        %v1094 = vor.u32 %v1091, %v1092
        %v1095 = vsel %vm974, %v1087, %v1094
        %v1096 = vrot.slane %v1091, 4
        %v1098 = vshrl.u32 %v960, 16
        %v1100 = vrot.slane %v1098, 7
        %v1101 = vshll.u32 %v960, 16
        %v1103 = vor.u32 %v1100, %v1101
        %v1104 = vsel %vm974, %v1096, %v1103
        %v1105 = vrot.slane %v1100, 4
        %v1107 = vshrl.u32 %v961, 16
        %v1109 = vrot.slane %v1107, 7
        %v1110 = vshll.u32 %v961, 16
        %v1112 = vor.u32 %v1109, %v1110
        %v1113 = vsel %vm974, %v1105, %v1112
        %v1114 = vrot.slane %v1109, 4
        %v1116 = vshrl.u32 %v962, 16
        %v1118 = vrot.slane %v1116, 7
        %v1119 = vshll.u32 %v962, 16
        %v1121 = vor.u32 %v1118, %v1119
        %v1122 = vsel %vm974, %v1114, %v1121
        %v1123 = vrot.slane %v1118, 4
        %v1125 = vshrl.u32 %v963, 16
        %v1127 = vrot.slane %v1125, 7
        %v1128 = vshll.u32 %v963, 16
        %v1130 = vor.u32 %v1127, %v1128
        %v1131 = vsel %vm974, %v1123, %v1130
        %v1132 = vrot.slane %v1127, 4
        %v1134 = vshrl.u32 %v964, 16
        %v1136 = vrot.slane %v1134, 7
        %v1137 = vshll.u32 %v964, 16
        %v1139 = vor.u32 %v1136, %v1137
        %v1140 = vsel %vm974, %v1132, %v1139
        %v1141 = vrot.slane %v1136, 4
        %v1143 = vshrl.u32 %v965, 16
        %v1145 = vrot.slane %v1143, 7
        %v1146 = vshll.u32 %v965, 16
        %v1148 = vor.u32 %v1145, %v1146
        %v1149 = vsel %vm974, %v1141, %v1148
        %v1150 = vrot.slane %v1145, 4
        %v1152 = vshrl.u32 %v966, 16
        %v1154 = vrot.slane %v1152, 7
        %v1155 = vshll.u32 %v966, 16
        %v1157 = vor.u32 %v1154, %v1155
        %v1158 = vsel %vm974, %v1150, %v1157
        %v1159 = vrot.slane %v1154, 4
        %v1161 = vshrl.u32 %v967, 16
        %v1163 = vrot.slane %v1161, 7
        %v1164 = vshll.u32 %v967, 16
        %v1166 = vor.u32 %v1163, %v1164
        %v1167 = vsel %vm974, %v1159, %v1166
        %v1168 = vrot.slane %v1163, 4
        %v1170 = vshrl.u32 %v968, 16
        %v1172 = vrot.slane %v1170, 7
        %v1173 = vshll.u32 %v968, 16
        %v1175 = vor.u32 %v1172, %v1173
        %v1176 = vsel %vm974, %v1168, %v1175
        %v1177 = vrot.slane %v1172, 4
        %v1179 = vshrl.u32 %v969, 16
        %v1181 = vrot.slane %v1179, 7
        %v1182 = vshll.u32 %v969, 16
        %v1184 = vor.u32 %v1181, %v1182
        %v1185 = vsel %vm974, %v1177, %v1184
        %v1186 = vrot.slane %v1181, 4
        %v1188 = vshrl.u32 %v970, 16
        %v1190 = vrot.slane %v1188, 7
        %v1191 = vshll.u32 %v970, 16
        %v1193 = vor.u32 %v1190, %v1191
        %v1194 = vsel %vm974, %v1186, %v1193
        %v1195 = vrot.slane %v1190, 4
        %v1197 = vshrl.u32 %v971, 16
        %v1199 = vrot.slane %v1197, 7
        %v1200 = vshll.u32 %v971, 16
        %v1202 = vor.u32 %v1199, %v1200
        %v1203 = vsel %vm974, %v1195, %v1202
        %1229 = vst [vmem:[#allocation3 + $0x8] sm:$0xf] %v987
        %1230 = vst [vmem:[#allocation3 + $0x2c] sm:$0xf] %v996
        %1231 = vst [vmem:[#allocation3 + $0x50] sm:$0xf] %v1005
        %1232 = vst [vmem:[#allocation3 + $0x74] sm:$0xf] %v1014
        %1233 = vst [vmem:[#allocation3 + $0x98] sm:$0xf] %v1023
        %1234 = vst [vmem:[#allocation3 + $0xbc] sm:$0xf] %v1032
        %1235 = vst [vmem:[#allocation3 + $0xe0] sm:$0xf] %v1041
        %1236 = vst [vmem:[#allocation3 + $0x104] sm:$0xf] %v1050
        %1237 = vst [vmem:[#allocation3 + $0x128] sm:$0xf] %v1059
        %1238 = vst [vmem:[#allocation3 + $0x14c] sm:$0xf] %v1068
        %1239 = vst [vmem:[#allocation3 + $0x170] sm:$0xf] %v1077
        %1240 = vst [vmem:[#allocation3 + $0x194] sm:$0xf] %v1086
        %1241 = vst [vmem:[#allocation3 + $0x1b8] sm:$0xf] %v1095
        %1242 = vst [vmem:[#allocation3 + $0x1dc] sm:$0xf] %v1104
        %1243 = vst [vmem:[#allocation3 + $0x200] sm:$0xf] %v1113
        %1244 = vst [vmem:[#allocation3 + $0x224] sm:$0xf] %v1122
        %1245 = vst [vmem:[#allocation3 + $0x248] sm:$0xf] %v1131
        %1246 = vst [vmem:[#allocation3 + $0x26c] sm:$0xf] %v1140
        %1247 = vst [vmem:[#allocation3 + $0x290] sm:$0xf] %v1149
        %1248 = vst [vmem:[#allocation3 + $0x2b4] sm:$0xf] %v1158
        %1249 = vst [vmem:[#allocation3 + $0x2d8] sm:$0xf] %v1167
        %1250 = vst [vmem:[#allocation3 + $0x2fc] sm:$0xf] %v1176
        %1251 = vst [vmem:[#allocation3 + $0x320] sm:$0xf] %v1185
        %1252 = vst [vmem:[#allocation3 + $0x344] sm:$0xf] %v1194
        %1253 = vst [vmem:[#allocation3 + $0x368] sm:$0xf] %v1203
        %v1254 = vld [vmem:[#allocation2 + $0x4] sm:$0x8]
        %v1255 = vld [vmem:[#allocation2 + $0x8] sm:$0xf]
        %v1256 = vld [vmem:[#allocation2 + $0xc] sm:$0xf]
        %v1257 = vld [vmem:[#allocation2 + $0x10] sm:$0xf]
        %v1258 = vld [vmem:[#allocation2 + $0x14] sm:$0xf]
        %v1259 = vld [vmem:[#allocation2 + $0x18] sm:$0xf]
        %v1260 = vld [vmem:[#allocation2 + $0x1c] sm:$0xf]
        %v1261 = vld [vmem:[#allocation2 + $0x20] sm:$0xf]
        %v1262 = vld [vmem:[#allocation2 + $0x24] sm:$0xf]
        %v1263 = vld [vmem:[#allocation2 + $0x28] sm:$0xf]
        %v1264 = vld [vmem:[#allocation2 + $0x2c] sm:$0xf]
        %v1265 = vld [vmem:[#allocation2 + $0x30] sm:$0xf]
        %v1266 = vld [vmem:[#allocation2 + $0x34] sm:$0xf]
        %v1267 = vld [vmem:[#allocation2 + $0x38] sm:$0xf]
        %v1268 = vld [vmem:[#allocation2 + $0x3c] sm:$0xf]
        %v1269 = vld [vmem:[#allocation2 + $0x40] sm:$0xf]
        %v1270 = vld [vmem:[#allocation2 + $0x44] sm:$0xf]
        %v1271 = vld [vmem:[#allocation2 + $0x48] sm:$0xf]
        %v1272 = vld [vmem:[#allocation2 + $0x4c] sm:$0xf]
        %v1273 = vld [vmem:[#allocation2 + $0x50] sm:$0xf]
        %v1274 = vld [vmem:[#allocation2 + $0x54] sm:$0xf]
        %v1275 = vld [vmem:[#allocation2 + $0x58] sm:$0xf]
        %v1276 = vld [vmem:[#allocation2 + $0x5c] sm:$0xf]
        %v1277 = vld [vmem:[#allocation2 + $0x60] sm:$0xf]
        %v1278 = vld [vmem:[#allocation2 + $0x64] sm:$0xf]
        %v1279 = vld [vmem:[#allocation2 + $0x68] sm:$0xf]
        %v1281 = vshrl.u32 %v1254, 16
        %v1283 = vrot.slane %v1281, 7
        %v1284 = vrot.slane %v1283, 4
        %v1286 = vshrl.u32 %v1255, 16
        %v1288 = vrot.slane %v1286, 7
        %v1289 = vshll.u32 %v1255, 16
        %v1291 = vor.u32 %v1288, %v1289
        %v1292 = vsel %vm974, %v1284, %v1291
        %v1293 = vrot.slane %v1288, 4
        %v1295 = vshrl.u32 %v1256, 16
        %v1297 = vrot.slane %v1295, 7
        %v1298 = vshll.u32 %v1256, 16
        %v1300 = vor.u32 %v1297, %v1298
        %v1301 = vsel %vm974, %v1293, %v1300
        %v1302 = vrot.slane %v1297, 4
        %v1304 = vshrl.u32 %v1257, 16
        %v1306 = vrot.slane %v1304, 7
        %v1307 = vshll.u32 %v1257, 16
        %v1309 = vor.u32 %v1306, %v1307
        %v1310 = vsel %vm974, %v1302, %v1309
        %v1311 = vrot.slane %v1306, 4
        %v1313 = vshrl.u32 %v1258, 16
        %v1315 = vrot.slane %v1313, 7
        %v1316 = vshll.u32 %v1258, 16
        %v1318 = vor.u32 %v1315, %v1316
        %v1319 = vsel %vm974, %v1311, %v1318
        %v1320 = vrot.slane %v1315, 4
        %v1322 = vshrl.u32 %v1259, 16
        %v1324 = vrot.slane %v1322, 7
        %v1325 = vshll.u32 %v1259, 16
        %v1327 = vor.u32 %v1324, %v1325
        %v1328 = vsel %vm974, %v1320, %v1327
        %v1329 = vrot.slane %v1324, 4
        %v1331 = vshrl.u32 %v1260, 16
        %v1333 = vrot.slane %v1331, 7
        %v1334 = vshll.u32 %v1260, 16
        %v1336 = vor.u32 %v1333, %v1334
        %v1337 = vsel %vm974, %v1329, %v1336
        %v1338 = vrot.slane %v1333, 4
        %v1340 = vshrl.u32 %v1261, 16
        %v1342 = vrot.slane %v1340, 7
        %v1343 = vshll.u32 %v1261, 16
        %v1345 = vor.u32 %v1342, %v1343
        %v1346 = vsel %vm974, %v1338, %v1345
        %v1347 = vrot.slane %v1342, 4
        %v1349 = vshrl.u32 %v1262, 16
        %v1351 = vrot.slane %v1349, 7
        %v1352 = vshll.u32 %v1262, 16
        %v1354 = vor.u32 %v1351, %v1352
        %v1355 = vsel %vm974, %v1347, %v1354
        %v1356 = vrot.slane %v1351, 4
        %v1358 = vshrl.u32 %v1263, 16
        %v1360 = vrot.slane %v1358, 7
        %v1361 = vshll.u32 %v1263, 16
        %v1363 = vor.u32 %v1360, %v1361
        %v1364 = vsel %vm974, %v1356, %v1363
        %v1365 = vrot.slane %v1360, 4
        %v1367 = vshrl.u32 %v1264, 16
        %v1369 = vrot.slane %v1367, 7
        %v1370 = vshll.u32 %v1264, 16
        %v1372 = vor.u32 %v1369, %v1370
        %v1373 = vsel %vm974, %v1365, %v1372
        %v1374 = vrot.slane %v1369, 4
        %v1376 = vshrl.u32 %v1265, 16
        %v1378 = vrot.slane %v1376, 7
        %v1379 = vshll.u32 %v1265, 16
        %v1381 = vor.u32 %v1378, %v1379
        %v1382 = vsel %vm974, %v1374, %v1381
        %v1383 = vrot.slane %v1378, 4
        %v1385 = vshrl.u32 %v1266, 16
        %v1387 = vrot.slane %v1385, 7
        %v1388 = vshll.u32 %v1266, 16
        %v1390 = vor.u32 %v1387, %v1388
        %v1391 = vsel %vm974, %v1383, %v1390
        %v1392 = vrot.slane %v1387, 4
        %v1394 = vshrl.u32 %v1267, 16
        %v1396 = vrot.slane %v1394, 7
        %v1397 = vshll.u32 %v1267, 16
        %v1399 = vor.u32 %v1396, %v1397
        %v1400 = vsel %vm974, %v1392, %v1399
        %v1401 = vrot.slane %v1396, 4
        %v1403 = vshrl.u32 %v1268, 16
        %v1405 = vrot.slane %v1403, 7
        %v1406 = vshll.u32 %v1268, 16
        %v1408 = vor.u32 %v1405, %v1406
        %v1409 = vsel %vm974, %v1401, %v1408
        %v1410 = vrot.slane %v1405, 4
        %v1412 = vshrl.u32 %v1269, 16
        %v1414 = vrot.slane %v1412, 7
        %v1415 = vshll.u32 %v1269, 16
        %v1417 = vor.u32 %v1414, %v1415
        %v1418 = vsel %vm974, %v1410, %v1417
        %v1419 = vrot.slane %v1414, 4
        %v1421 = vshrl.u32 %v1270, 16
        %v1423 = vrot.slane %v1421, 7
        %v1424 = vshll.u32 %v1270, 16
        %v1426 = vor.u32 %v1423, %v1424
        %v1427 = vsel %vm974, %v1419, %v1426
        %v1428 = vrot.slane %v1423, 4
        %v1430 = vshrl.u32 %v1271, 16
        %v1432 = vrot.slane %v1430, 7
        %v1433 = vshll.u32 %v1271, 16
        %v1435 = vor.u32 %v1432, %v1433
        %v1436 = vsel %vm974, %v1428, %v1435
        %v1437 = vrot.slane %v1432, 4
        %v1439 = vshrl.u32 %v1272, 16
        %v1441 = vrot.slane %v1439, 7
        %v1442 = vshll.u32 %v1272, 16
        %v1444 = vor.u32 %v1441, %v1442
        %v1445 = vsel %vm974, %v1437, %v1444
        %v1446 = vrot.slane %v1441, 4
        %v1448 = vshrl.u32 %v1273, 16
        %v1450 = vrot.slane %v1448, 7
        %v1451 = vshll.u32 %v1273, 16
        %v1453 = vor.u32 %v1450, %v1451
        %v1454 = vsel %vm974, %v1446, %v1453
        %v1455 = vrot.slane %v1450, 4
        %v1457 = vshrl.u32 %v1274, 16
        %v1459 = vrot.slane %v1457, 7
        %v1460 = vshll.u32 %v1274, 16
        %v1462 = vor.u32 %v1459, %v1460
        %v1463 = vsel %vm974, %v1455, %v1462
        %v1464 = vrot.slane %v1459, 4
        %v1466 = vshrl.u32 %v1275, 16
        %v1468 = vrot.slane %v1466, 7
        %v1469 = vshll.u32 %v1275, 16
        %v1471 = vor.u32 %v1468, %v1469
        %v1472 = vsel %vm974, %v1464, %v1471
        %v1473 = vrot.slane %v1468, 4
        %v1475 = vshrl.u32 %v1276, 16
        %v1477 = vrot.slane %v1475, 7
        %v1478 = vshll.u32 %v1276, 16
        %v1480 = vor.u32 %v1477, %v1478
        %v1481 = vsel %vm974, %v1473, %v1480
        %v1482 = vrot.slane %v1477, 4
        %v1484 = vshrl.u32 %v1277, 16
        %v1486 = vrot.slane %v1484, 7
        %v1487 = vshll.u32 %v1277, 16
        %v1489 = vor.u32 %v1486, %v1487
        %v1490 = vsel %vm974, %v1482, %v1489
        %v1491 = vrot.slane %v1486, 4
        %v1493 = vshrl.u32 %v1278, 16
        %v1495 = vrot.slane %v1493, 7
        %v1496 = vshll.u32 %v1278, 16
        %v1498 = vor.u32 %v1495, %v1496
        %v1499 = vsel %vm974, %v1491, %v1498
        %v1500 = vrot.slane %v1495, 4
        %v1502 = vshrl.u32 %v1279, 16
        %v1504 = vrot.slane %v1502, 7
        %v1505 = vshll.u32 %v1279, 16
        %v1507 = vor.u32 %v1504, %v1505
        %v1508 = vsel %vm974, %v1500, %v1507
        %1534 = vst [vmem:[#allocation3 + $0xc] sm:$0xf] %v1292
        %1535 = vst [vmem:[#allocation3 + $0x30] sm:$0xf] %v1301
        %1536 = vst [vmem:[#allocation3 + $0x54] sm:$0xf] %v1310
        %1537 = vst [vmem:[#allocation3 + $0x78] sm:$0xf] %v1319
        %1538 = vst [vmem:[#allocation3 + $0x9c] sm:$0xf] %v1328
        %1539 = vst [vmem:[#allocation3 + $0xc0] sm:$0xf] %v1337
        %1540 = vst [vmem:[#allocation3 + $0xe4] sm:$0xf] %v1346
        %1541 = vst [vmem:[#allocation3 + $0x108] sm:$0xf] %v1355
        %1542 = vst [vmem:[#allocation3 + $0x12c] sm:$0xf] %v1364
        %1543 = vst [vmem:[#allocation3 + $0x150] sm:$0xf] %v1373
        %1544 = vst [vmem:[#allocation3 + $0x174] sm:$0xf] %v1382
        %1545 = vst [vmem:[#allocation3 + $0x198] sm:$0xf] %v1391
        %1546 = vst [vmem:[#allocation3 + $0x1bc] sm:$0xf] %v1400
        %1547 = vst [vmem:[#allocation3 + $0x1e0] sm:$0xf] %v1409
        %1548 = vst [vmem:[#allocation3 + $0x204] sm:$0xf] %v1418
        %1549 = vst [vmem:[#allocation3 + $0x228] sm:$0xf] %v1427
        %1550 = vst [vmem:[#allocation3 + $0x24c] sm:$0xf] %v1436
        %1551 = vst [vmem:[#allocation3 + $0x270] sm:$0xf] %v1445
        %1552 = vst [vmem:[#allocation3 + $0x294] sm:$0xf] %v1454
        %1553 = vst [vmem:[#allocation3 + $0x2b8] sm:$0xf] %v1463
        %1554 = vst [vmem:[#allocation3 + $0x2dc] sm:$0xf] %v1472
        %1555 = vst [vmem:[#allocation3 + $0x300] sm:$0xf] %v1481
        %1556 = vst [vmem:[#allocation3 + $0x324] sm:$0xf] %v1490
        %1557 = vst [vmem:[#allocation3 + $0x348] sm:$0xf] %v1499
        %1558 = vst [vmem:[#allocation3 + $0x36c] sm:$0xf] %v1508
        %v1559 = vld [vmem:[#allocation2 + $0x8] sm:$0xf]
        %v1560 = vld [vmem:[#allocation2 + $0xc] sm:$0xf]
        %v1561 = vld [vmem:[#allocation2 + $0x10] sm:$0xf]
        %v1562 = vld [vmem:[#allocation2 + $0x14] sm:$0xf]
        %v1563 = vld [vmem:[#allocation2 + $0x18] sm:$0xf]
        %v1564 = vld [vmem:[#allocation2 + $0x1c] sm:$0xf]
        %v1565 = vld [vmem:[#allocation2 + $0x20] sm:$0xf]
        %v1566 = vld [vmem:[#allocation2 + $0x24] sm:$0xf]
        %v1567 = vld [vmem:[#allocation2 + $0x28] sm:$0xf]
        %v1568 = vld [vmem:[#allocation2 + $0x2c] sm:$0xf]
        %v1569 = vld [vmem:[#allocation2 + $0x30] sm:$0xf]
        %v1570 = vld [vmem:[#allocation2 + $0x34] sm:$0xf]
        %v1571 = vld [vmem:[#allocation2 + $0x38] sm:$0xf]
        %v1572 = vld [vmem:[#allocation2 + $0x3c] sm:$0xf]
        %v1573 = vld [vmem:[#allocation2 + $0x40] sm:$0xf]
        %v1574 = vld [vmem:[#allocation2 + $0x44] sm:$0xf]
        %v1575 = vld [vmem:[#allocation2 + $0x48] sm:$0xf]
        %v1576 = vld [vmem:[#allocation2 + $0x4c] sm:$0xf]
        %v1577 = vld [vmem:[#allocation2 + $0x50] sm:$0xf]
        %v1578 = vld [vmem:[#allocation2 + $0x54] sm:$0xf]
        %v1579 = vld [vmem:[#allocation2 + $0x58] sm:$0xf]
        %v1580 = vld [vmem:[#allocation2 + $0x5c] sm:$0xf]
        %v1581 = vld [vmem:[#allocation2 + $0x60] sm:$0xf]
        %v1582 = vld [vmem:[#allocation2 + $0x64] sm:$0xf]
        %v1583 = vld [vmem:[#allocation2 + $0x68] sm:$0xf]
        %1584 = vst [vmem:[#allocation3 + $0x10] sm:$0xf] %v1559
        %1585 = vst [vmem:[#allocation3 + $0x34] sm:$0xf] %v1560
        %1586 = vst [vmem:[#allocation3 + $0x58] sm:$0xf] %v1561
        %1587 = vst [vmem:[#allocation3 + $0x7c] sm:$0xf] %v1562
        %1588 = vst [vmem:[#allocation3 + $0xa0] sm:$0xf] %v1563
        %1589 = vst [vmem:[#allocation3 + $0xc4] sm:$0xf] %v1564
        %1590 = vst [vmem:[#allocation3 + $0xe8] sm:$0xf] %v1565
        %1591 = vst [vmem:[#allocation3 + $0x10c] sm:$0xf] %v1566
        %1592 = vst [vmem:[#allocation3 + $0x130] sm:$0xf] %v1567
        %1593 = vst [vmem:[#allocation3 + $0x154] sm:$0xf] %v1568
        %1594 = vst [vmem:[#allocation3 + $0x178] sm:$0xf] %v1569
        %1595 = vst [vmem:[#allocation3 + $0x19c] sm:$0xf] %v1570
        %1596 = vst [vmem:[#allocation3 + $0x1c0] sm:$0xf] %v1571
        %1597 = vst [vmem:[#allocation3 + $0x1e4] sm:$0xf] %v1572
        %1598 = vst [vmem:[#allocation3 + $0x208] sm:$0xf] %v1573
        %1599 = vst [vmem:[#allocation3 + $0x22c] sm:$0xf] %v1574
        %1600 = vst [vmem:[#allocation3 + $0x250] sm:$0xf] %v1575
        %1601 = vst [vmem:[#allocation3 + $0x274] sm:$0xf] %v1576
        %1602 = vst [vmem:[#allocation3 + $0x298] sm:$0xf] %v1577
        %1603 = vst [vmem:[#allocation3 + $0x2bc] sm:$0xf] %v1578
        %1604 = vst [vmem:[#allocation3 + $0x2e0] sm:$0xf] %v1579
        %1605 = vst [vmem:[#allocation3 + $0x304] sm:$0xf] %v1580
        %1606 = vst [vmem:[#allocation3 + $0x328] sm:$0xf] %v1581
        %1607 = vst [vmem:[#allocation3 + $0x34c] sm:$0xf] %v1582
        %1608 = vst [vmem:[#allocation3 + $0x370] sm:$0xf] %v1583
        %v1609 = vld [vmem:[#allocation2 + $0x8] sm:$0xf]
        %v1610 = vld [vmem:[#allocation2 + $0xc] sm:$0xf]
        %v1611 = vld [vmem:[#allocation2 + $0x10] sm:$0xf]
        %v1612 = vld [vmem:[#allocation2 + $0x14] sm:$0xf]
        %v1613 = vld [vmem:[#allocation2 + $0x18] sm:$0xf]
        %v1614 = vld [vmem:[#allocation2 + $0x1c] sm:$0xf]
        %v1615 = vld [vmem:[#allocation2 + $0x20] sm:$0xf]
        %v1616 = vld [vmem:[#allocation2 + $0x24] sm:$0xf]
        %v1617 = vld [vmem:[#allocation2 + $0x28] sm:$0xf]
        %v1618 = vld [vmem:[#allocation2 + $0x2c] sm:$0xf]
        %v1619 = vld [vmem:[#allocation2 + $0x30] sm:$0xf]
        %v1620 = vld [vmem:[#allocation2 + $0x34] sm:$0xf]
        %v1621 = vld [vmem:[#allocation2 + $0x38] sm:$0xf]
        %v1622 = vld [vmem:[#allocation2 + $0x3c] sm:$0xf]
        %v1623 = vld [vmem:[#allocation2 + $0x40] sm:$0xf]
        %v1624 = vld [vmem:[#allocation2 + $0x44] sm:$0xf]
        %v1625 = vld [vmem:[#allocation2 + $0x48] sm:$0xf]
        %v1626 = vld [vmem:[#allocation2 + $0x4c] sm:$0xf]
        %v1627 = vld [vmem:[#allocation2 + $0x50] sm:$0xf]
        %v1628 = vld [vmem:[#allocation2 + $0x54] sm:$0xf]
        %v1629 = vld [vmem:[#allocation2 + $0x58] sm:$0xf]
        %v1630 = vld [vmem:[#allocation2 + $0x5c] sm:$0xf]
        %v1631 = vld [vmem:[#allocation2 + $0x60] sm:$0xf]
        %v1632 = vld [vmem:[#allocation2 + $0x64] sm:$0xf]
        %v1633 = vld [vmem:[#allocation2 + $0x68] sm:$0xf]
        %v1634 = vld [vmem:[#allocation2 + $0x6c] sm:$0x1]
        %vm1635 = vsmask.f32 3328
        %vm1636 = vsmask.f32 7440
        %vm1637 = vmor %vm1635, %vm1636
        %v1639 = vshrl.u32 %v1609, 16
        %v1641 = vrot.slane %v1639, 4
        %v1642 = vshll.u32 %v1609, 16
        %v1644 = vrot.slane %v1642, 5
        %v1645 = vor.u32 %v1641, %v1644
        %v1646 = vrot.slane %v1645, 4
        %v1648 = vshll.u32 %v1610, 16
        %v1650 = vrot.slane %v1648, 5
        %v1651 = vsel %vm1637, %v1646, %v1650
        %v1652 = vshrl.u32 %v1610, 16
        %v1654 = vrot.slane %v1652, 4
        %v1655 = vor.u32 %v1654, %v1650
        %v1656 = vrot.slane %v1655, 4
        %v1658 = vshll.u32 %v1611, 16
        %v1660 = vrot.slane %v1658, 5
        %v1661 = vsel %vm1637, %v1656, %v1660
        %v1662 = vshrl.u32 %v1611, 16
        %v1664 = vrot.slane %v1662, 4
        %v1665 = vor.u32 %v1664, %v1660
        %v1666 = vrot.slane %v1665, 4
        %v1668 = vshll.u32 %v1612, 16
        %v1670 = vrot.slane %v1668, 5
        %v1671 = vsel %vm1637, %v1666, %v1670
        %v1672 = vshrl.u32 %v1612, 16
        %v1674 = vrot.slane %v1672, 4
        %v1675 = vor.u32 %v1674, %v1670
        %v1676 = vrot.slane %v1675, 4
        %v1678 = vshll.u32 %v1613, 16
        %v1680 = vrot.slane %v1678, 5
        %v1681 = vsel %vm1637, %v1676, %v1680
        %v1682 = vshrl.u32 %v1613, 16
        %v1684 = vrot.slane %v1682, 4
        %v1685 = vor.u32 %v1684, %v1680
        %v1686 = vrot.slane %v1685, 4
        %v1688 = vshll.u32 %v1614, 16
        %v1690 = vrot.slane %v1688, 5
        %v1691 = vsel %vm1637, %v1686, %v1690
        %v1692 = vshrl.u32 %v1614, 16
        %v1694 = vrot.slane %v1692, 4
        %v1695 = vor.u32 %v1694, %v1690
        %v1696 = vrot.slane %v1695, 4
        %v1698 = vshll.u32 %v1615, 16
        %v1700 = vrot.slane %v1698, 5
        %v1701 = vsel %vm1637, %v1696, %v1700
        %v1702 = vshrl.u32 %v1615, 16
        %v1704 = vrot.slane %v1702, 4
        %v1705 = vor.u32 %v1704, %v1700
        %v1706 = vrot.slane %v1705, 4
        %v1708 = vshll.u32 %v1616, 16
        %v1710 = vrot.slane %v1708, 5
        %v1711 = vsel %vm1637, %v1706, %v1710
        %v1712 = vshrl.u32 %v1616, 16
        %v1714 = vrot.slane %v1712, 4
        %v1715 = vor.u32 %v1714, %v1710
        %v1716 = vrot.slane %v1715, 4
        %v1718 = vshll.u32 %v1617, 16
        %v1720 = vrot.slane %v1718, 5
        %v1721 = vsel %vm1637, %v1716, %v1720
        %v1722 = vshrl.u32 %v1617, 16
        %v1724 = vrot.slane %v1722, 4
        %v1725 = vor.u32 %v1724, %v1720
        %v1726 = vrot.slane %v1725, 4
        %v1728 = vshll.u32 %v1618, 16
        %v1730 = vrot.slane %v1728, 5
        %v1731 = vsel %vm1637, %v1726, %v1730
        %v1732 = vshrl.u32 %v1618, 16
        %v1734 = vrot.slane %v1732, 4
        %v1735 = vor.u32 %v1734, %v1730
        %v1736 = vrot.slane %v1735, 4
        %v1738 = vshll.u32 %v1619, 16
        %v1740 = vrot.slane %v1738, 5
        %v1741 = vsel %vm1637, %v1736, %v1740
        %v1742 = vshrl.u32 %v1619, 16
        %v1744 = vrot.slane %v1742, 4
        %v1745 = vor.u32 %v1744, %v1740
        %v1746 = vrot.slane %v1745, 4
        %v1748 = vshll.u32 %v1620, 16
        %v1750 = vrot.slane %v1748, 5
        %v1751 = vsel %vm1637, %v1746, %v1750
        %v1752 = vshrl.u32 %v1620, 16
        %v1754 = vrot.slane %v1752, 4
        %v1755 = vor.u32 %v1754, %v1750
        %v1756 = vrot.slane %v1755, 4
        %v1758 = vshll.u32 %v1621, 16
        %v1760 = vrot.slane %v1758, 5
        %v1761 = vsel %vm1637, %v1756, %v1760
        %v1762 = vshrl.u32 %v1621, 16
        %v1764 = vrot.slane %v1762, 4
        %v1765 = vor.u32 %v1764, %v1760
        %v1766 = vrot.slane %v1765, 4
        %v1768 = vshll.u32 %v1622, 16
        %v1770 = vrot.slane %v1768, 5
        %v1771 = vsel %vm1637, %v1766, %v1770
        %v1772 = vshrl.u32 %v1622, 16
        %v1774 = vrot.slane %v1772, 4
        %v1775 = vor.u32 %v1774, %v1770
        %v1776 = vrot.slane %v1775, 4
        %v1778 = vshll.u32 %v1623, 16
        %v1780 = vrot.slane %v1778, 5
        %v1781 = vsel %vm1637, %v1776, %v1780
        %v1782 = vshrl.u32 %v1623, 16
        %v1784 = vrot.slane %v1782, 4
        %v1785 = vor.u32 %v1784, %v1780
        %v1786 = vrot.slane %v1785, 4
        %v1788 = vshll.u32 %v1624, 16
        %v1790 = vrot.slane %v1788, 5
        %v1791 = vsel %vm1637, %v1786, %v1790
        %v1792 = vshrl.u32 %v1624, 16
        %v1794 = vrot.slane %v1792, 4
        %v1795 = vor.u32 %v1794, %v1790
        %v1796 = vrot.slane %v1795, 4
        %v1798 = vshll.u32 %v1625, 16
        %v1800 = vrot.slane %v1798, 5
        %v1801 = vsel %vm1637, %v1796, %v1800
        %v1802 = vshrl.u32 %v1625, 16
        %v1804 = vrot.slane %v1802, 4
        %v1805 = vor.u32 %v1804, %v1800
        %v1806 = vrot.slane %v1805, 4
        %v1808 = vshll.u32 %v1626, 16
        %v1810 = vrot.slane %v1808, 5
        %v1811 = vsel %vm1637, %v1806, %v1810
        %v1812 = vshrl.u32 %v1626, 16
        %v1814 = vrot.slane %v1812, 4
        %v1815 = vor.u32 %v1814, %v1810
        %v1816 = vrot.slane %v1815, 4
        %v1818 = vshll.u32 %v1627, 16
        %v1820 = vrot.slane %v1818, 5
        %v1821 = vsel %vm1637, %v1816, %v1820
        %v1822 = vshrl.u32 %v1627, 16
        %v1824 = vrot.slane %v1822, 4
        %v1825 = vor.u32 %v1824, %v1820
        %v1826 = vrot.slane %v1825, 4
        %v1828 = vshll.u32 %v1628, 16
        %v1830 = vrot.slane %v1828, 5
        %v1831 = vsel %vm1637, %v1826, %v1830
        %v1832 = vshrl.u32 %v1628, 16
        %v1834 = vrot.slane %v1832, 4
        %v1835 = vor.u32 %v1834, %v1830
        %v1836 = vrot.slane %v1835, 4
        %v1838 = vshll.u32 %v1629, 16
        %v1840 = vrot.slane %v1838, 5
        %v1841 = vsel %vm1637, %v1836, %v1840
        %v1842 = vshrl.u32 %v1629, 16
        %v1844 = vrot.slane %v1842, 4
        %v1845 = vor.u32 %v1844, %v1840
        %v1846 = vrot.slane %v1845, 4
        %v1848 = vshll.u32 %v1630, 16
        %v1850 = vrot.slane %v1848, 5
        %v1851 = vsel %vm1637, %v1846, %v1850
        %v1852 = vshrl.u32 %v1630, 16
        %v1854 = vrot.slane %v1852, 4
        %v1855 = vor.u32 %v1854, %v1850
        %v1856 = vrot.slane %v1855, 4
        %v1858 = vshll.u32 %v1631, 16
        %v1860 = vrot.slane %v1858, 5
        %v1861 = vsel %vm1637, %v1856, %v1860
        %v1862 = vshrl.u32 %v1631, 16
        %v1864 = vrot.slane %v1862, 4
        %v1865 = vor.u32 %v1864, %v1860
        %v1866 = vrot.slane %v1865, 4
        %v1868 = vshll.u32 %v1632, 16
        %v1870 = vrot.slane %v1868, 5
        %v1871 = vsel %vm1637, %v1866, %v1870
        %v1872 = vshrl.u32 %v1632, 16
        %v1874 = vrot.slane %v1872, 4
        %v1875 = vor.u32 %v1874, %v1870
        %v1876 = vrot.slane %v1875, 4
        %v1878 = vshll.u32 %v1633, 16
        %v1880 = vrot.slane %v1878, 5
        %v1881 = vsel %vm1637, %v1876, %v1880
        %v1882 = vshrl.u32 %v1633, 16
        %v1884 = vrot.slane %v1882, 4
        %v1885 = vor.u32 %v1884, %v1880
        %v1886 = vrot.slane %v1885, 4
        %v1888 = vshll.u32 %v1634, 16
        %v1890 = vrot.slane %v1888, 5
        %v1891 = vsel %vm1637, %v1886, %v1890
        %1917 = vst [vmem:[#allocation3 + $0x14] sm:$0xf] %v1651
        %1918 = vst [vmem:[#allocation3 + $0x38] sm:$0xf] %v1661
        %1919 = vst [vmem:[#allocation3 + $0x5c] sm:$0xf] %v1671
        %1920 = vst [vmem:[#allocation3 + $0x80] sm:$0xf] %v1681
        %1921 = vst [vmem:[#allocation3 + $0xa4] sm:$0xf] %v1691
        %1922 = vst [vmem:[#allocation3 + $0xc8] sm:$0xf] %v1701
        %1923 = vst [vmem:[#allocation3 + $0xec] sm:$0xf] %v1711
        %1924 = vst [vmem:[#allocation3 + $0x110] sm:$0xf] %v1721
        %1925 = vst [vmem:[#allocation3 + $0x134] sm:$0xf] %v1731
        %1926 = vst [vmem:[#allocation3 + $0x158] sm:$0xf] %v1741
        %1927 = vst [vmem:[#allocation3 + $0x17c] sm:$0xf] %v1751
        %1928 = vst [vmem:[#allocation3 + $0x1a0] sm:$0xf] %v1761
        %1929 = vst [vmem:[#allocation3 + $0x1c4] sm:$0xf] %v1771
        %1930 = vst [vmem:[#allocation3 + $0x1e8] sm:$0xf] %v1781
        %1931 = vst [vmem:[#allocation3 + $0x20c] sm:$0xf] %v1791
        %1932 = vst [vmem:[#allocation3 + $0x230] sm:$0xf] %v1801
        %1933 = vst [vmem:[#allocation3 + $0x254] sm:$0xf] %v1811
        %1934 = vst [vmem:[#allocation3 + $0x278] sm:$0xf] %v1821
        %1935 = vst [vmem:[#allocation3 + $0x29c] sm:$0xf] %v1831
        %1936 = vst [vmem:[#allocation3 + $0x2c0] sm:$0xf] %v1841
        %1937 = vst [vmem:[#allocation3 + $0x2e4] sm:$0xf] %v1851
        %1938 = vst [vmem:[#allocation3 + $0x308] sm:$0xf] %v1861
        %1939 = vst [vmem:[#allocation3 + $0x32c] sm:$0xf] %v1871
        %1940 = vst [vmem:[#allocation3 + $0x350] sm:$0xf] %v1881
        %1941 = vst [vmem:[#allocation3 + $0x374] sm:$0xf] %v1891
        %v1942 = vld [vmem:[#allocation2 + $0xc] sm:$0xf]
        %v1943 = vld [vmem:[#allocation2 + $0x10] sm:$0xf]
        %v1944 = vld [vmem:[#allocation2 + $0x14] sm:$0xf]
        %v1945 = vld [vmem:[#allocation2 + $0x18] sm:$0xf]
        %v1946 = vld [vmem:[#allocation2 + $0x1c] sm:$0xf]
        %v1947 = vld [vmem:[#allocation2 + $0x20] sm:$0xf]
        %v1948 = vld [vmem:[#allocation2 + $0x24] sm:$0xf]
        %v1949 = vld [vmem:[#allocation2 + $0x28] sm:$0xf]
        %v1950 = vld [vmem:[#allocation2 + $0x2c] sm:$0xf]
        %v1951 = vld [vmem:[#allocation2 + $0x30] sm:$0xf]
        %v1952 = vld [vmem:[#allocation2 + $0x34] sm:$0xf]
        %v1953 = vld [vmem:[#allocation2 + $0x38] sm:$0xf]
        %v1954 = vld [vmem:[#allocation2 + $0x3c] sm:$0xf]
        %v1955 = vld [vmem:[#allocation2 + $0x40] sm:$0xf]
        %v1956 = vld [vmem:[#allocation2 + $0x44] sm:$0xf]
        %v1957 = vld [vmem:[#allocation2 + $0x48] sm:$0xf]
        %v1958 = vld [vmem:[#allocation2 + $0x4c] sm:$0xf]
        %v1959 = vld [vmem:[#allocation2 + $0x50] sm:$0xf]
        %v1960 = vld [vmem:[#allocation2 + $0x54] sm:$0xf]
        %v1961 = vld [vmem:[#allocation2 + $0x58] sm:$0xf]
        %v1962 = vld [vmem:[#allocation2 + $0x5c] sm:$0xf]
        %v1963 = vld [vmem:[#allocation2 + $0x60] sm:$0xf]
        %v1964 = vld [vmem:[#allocation2 + $0x64] sm:$0xf]
        %v1965 = vld [vmem:[#allocation2 + $0x68] sm:$0xf]
        %v1966 = vld [vmem:[#allocation2 + $0x6c] sm:$0xf]
        %v1967 = vld [vmem:[#allocation2 + $0x70] sm:$0x1]
        %v1969 = vshrl.u32 %v1942, 16
        %v1971 = vrot.slane %v1969, 4
        %v1972 = vshll.u32 %v1942, 16
        %v1974 = vrot.slane %v1972, 5
        %v1975 = vor.u32 %v1971, %v1974
        %v1976 = vrot.slane %v1975, 4
        %v1978 = vshll.u32 %v1943, 16
        %v1980 = vrot.slane %v1978, 5
        %v1981 = vsel %vm1637, %v1976, %v1980
        %v1982 = vshrl.u32 %v1943, 16
        %v1984 = vrot.slane %v1982, 4
        %v1985 = vor.u32 %v1984, %v1980
        %v1986 = vrot.slane %v1985, 4
        %v1988 = vshll.u32 %v1944, 16
        %v1990 = vrot.slane %v1988, 5
        %v1991 = vsel %vm1637, %v1986, %v1990
        %v1992 = vshrl.u32 %v1944, 16
        %v1994 = vrot.slane %v1992, 4
        %v1995 = vor.u32 %v1994, %v1990
        %v1996 = vrot.slane %v1995, 4
        %v1998 = vshll.u32 %v1945, 16
        %v2000 = vrot.slane %v1998, 5
        %v2001 = vsel %vm1637, %v1996, %v2000
        %v2002 = vshrl.u32 %v1945, 16
        %v2004 = vrot.slane %v2002, 4
        %v2005 = vor.u32 %v2004, %v2000
        %v2006 = vrot.slane %v2005, 4
        %v2008 = vshll.u32 %v1946, 16
        %v2010 = vrot.slane %v2008, 5
        %v2011 = vsel %vm1637, %v2006, %v2010
        %v2012 = vshrl.u32 %v1946, 16
        %v2014 = vrot.slane %v2012, 4
        %v2015 = vor.u32 %v2014, %v2010
        %v2016 = vrot.slane %v2015, 4
        %v2018 = vshll.u32 %v1947, 16
        %v2020 = vrot.slane %v2018, 5
        %v2021 = vsel %vm1637, %v2016, %v2020
        %v2022 = vshrl.u32 %v1947, 16
        %v2024 = vrot.slane %v2022, 4
        %v2025 = vor.u32 %v2024, %v2020
        %v2026 = vrot.slane %v2025, 4
        %v2028 = vshll.u32 %v1948, 16
        %v2030 = vrot.slane %v2028, 5
        %v2031 = vsel %vm1637, %v2026, %v2030
        %v2032 = vshrl.u32 %v1948, 16
        %v2034 = vrot.slane %v2032, 4
        %v2035 = vor.u32 %v2034, %v2030
        %v2036 = vrot.slane %v2035, 4
        %v2038 = vshll.u32 %v1949, 16
        %v2040 = vrot.slane %v2038, 5
        %v2041 = vsel %vm1637, %v2036, %v2040
        %v2042 = vshrl.u32 %v1949, 16
        %v2044 = vrot.slane %v2042, 4
        %v2045 = vor.u32 %v2044, %v2040
        %v2046 = vrot.slane %v2045, 4
        %v2048 = vshll.u32 %v1950, 16
        %v2050 = vrot.slane %v2048, 5
        %v2051 = vsel %vm1637, %v2046, %v2050
        %v2052 = vshrl.u32 %v1950, 16
        %v2054 = vrot.slane %v2052, 4
        %v2055 = vor.u32 %v2054, %v2050
        %v2056 = vrot.slane %v2055, 4
        %v2058 = vshll.u32 %v1951, 16
        %v2060 = vrot.slane %v2058, 5
        %v2061 = vsel %vm1637, %v2056, %v2060
        %v2062 = vshrl.u32 %v1951, 16
        %v2064 = vrot.slane %v2062, 4
        %v2065 = vor.u32 %v2064, %v2060
        %v2066 = vrot.slane %v2065, 4
        %v2068 = vshll.u32 %v1952, 16
        %v2070 = vrot.slane %v2068, 5
        %v2071 = vsel %vm1637, %v2066, %v2070
        %v2072 = vshrl.u32 %v1952, 16
        %v2074 = vrot.slane %v2072, 4
        %v2075 = vor.u32 %v2074, %v2070
        %v2076 = vrot.slane %v2075, 4
        %v2078 = vshll.u32 %v1953, 16
        %v2080 = vrot.slane %v2078, 5
        %v2081 = vsel %vm1637, %v2076, %v2080
        %v2082 = vshrl.u32 %v1953, 16
        %v2084 = vrot.slane %v2082, 4
        %v2085 = vor.u32 %v2084, %v2080
        %v2086 = vrot.slane %v2085, 4
        %v2088 = vshll.u32 %v1954, 16
        %v2090 = vrot.slane %v2088, 5
        %v2091 = vsel %vm1637, %v2086, %v2090
        %v2092 = vshrl.u32 %v1954, 16
        %v2094 = vrot.slane %v2092, 4
        %v2095 = vor.u32 %v2094, %v2090
        %v2096 = vrot.slane %v2095, 4
        %v2098 = vshll.u32 %v1955, 16
        %v2100 = vrot.slane %v2098, 5
        %v2101 = vsel %vm1637, %v2096, %v2100
        %v2102 = vshrl.u32 %v1955, 16
        %v2104 = vrot.slane %v2102, 4
        %v2105 = vor.u32 %v2104, %v2100
        %v2106 = vrot.slane %v2105, 4
        %v2108 = vshll.u32 %v1956, 16
        %v2110 = vrot.slane %v2108, 5
        %v2111 = vsel %vm1637, %v2106, %v2110
        %v2112 = vshrl.u32 %v1956, 16
        %v2114 = vrot.slane %v2112, 4
        %v2115 = vor.u32 %v2114, %v2110
        %v2116 = vrot.slane %v2115, 4
        %v2118 = vshll.u32 %v1957, 16
        %v2120 = vrot.slane %v2118, 5
        %v2121 = vsel %vm1637, %v2116, %v2120
        %v2122 = vshrl.u32 %v1957, 16
        %v2124 = vrot.slane %v2122, 4
        %v2125 = vor.u32 %v2124, %v2120
        %v2126 = vrot.slane %v2125, 4
        %v2128 = vshll.u32 %v1958, 16
        %v2130 = vrot.slane %v2128, 5
        %v2131 = vsel %vm1637, %v2126, %v2130
        %v2132 = vshrl.u32 %v1958, 16
        %v2134 = vrot.slane %v2132, 4
        %v2135 = vor.u32 %v2134, %v2130
        %v2136 = vrot.slane %v2135, 4
        %v2138 = vshll.u32 %v1959, 16
        %v2140 = vrot.slane %v2138, 5
        %v2141 = vsel %vm1637, %v2136, %v2140
        %v2142 = vshrl.u32 %v1959, 16
        %v2144 = vrot.slane %v2142, 4
        %v2145 = vor.u32 %v2144, %v2140
        %v2146 = vrot.slane %v2145, 4
        %v2148 = vshll.u32 %v1960, 16
        %v2150 = vrot.slane %v2148, 5
        %v2151 = vsel %vm1637, %v2146, %v2150
        %v2152 = vshrl.u32 %v1960, 16
        %v2154 = vrot.slane %v2152, 4
        %v2155 = vor.u32 %v2154, %v2150
        %v2156 = vrot.slane %v2155, 4
        %v2158 = vshll.u32 %v1961, 16
        %v2160 = vrot.slane %v2158, 5
        %v2161 = vsel %vm1637, %v2156, %v2160
        %v2162 = vshrl.u32 %v1961, 16
        %v2164 = vrot.slane %v2162, 4
        %v2165 = vor.u32 %v2164, %v2160
        %v2166 = vrot.slane %v2165, 4
        %v2168 = vshll.u32 %v1962, 16
        %v2170 = vrot.slane %v2168, 5
        %v2171 = vsel %vm1637, %v2166, %v2170
        %v2172 = vshrl.u32 %v1962, 16
        %v2174 = vrot.slane %v2172, 4
        %v2175 = vor.u32 %v2174, %v2170
        %v2176 = vrot.slane %v2175, 4
        %v2178 = vshll.u32 %v1963, 16
        %v2180 = vrot.slane %v2178, 5
        %v2181 = vsel %vm1637, %v2176, %v2180
        %v2182 = vshrl.u32 %v1963, 16
        %v2184 = vrot.slane %v2182, 4
        %v2185 = vor.u32 %v2184, %v2180
        %v2186 = vrot.slane %v2185, 4
        %v2188 = vshll.u32 %v1964, 16
        %v2190 = vrot.slane %v2188, 5
        %v2191 = vsel %vm1637, %v2186, %v2190
        %v2192 = vshrl.u32 %v1964, 16
        %v2194 = vrot.slane %v2192, 4
        %v2195 = vor.u32 %v2194, %v2190
        %v2196 = vrot.slane %v2195, 4
        %v2198 = vshll.u32 %v1965, 16
        %v2200 = vrot.slane %v2198, 5
        %v2201 = vsel %vm1637, %v2196, %v2200
        %v2202 = vshrl.u32 %v1965, 16
        %v2204 = vrot.slane %v2202, 4
        %v2205 = vor.u32 %v2204, %v2200
        %v2206 = vrot.slane %v2205, 4
        %v2208 = vshll.u32 %v1966, 16
        %v2210 = vrot.slane %v2208, 5
        %v2211 = vsel %vm1637, %v2206, %v2210
        %v2212 = vshrl.u32 %v1966, 16
        %v2214 = vrot.slane %v2212, 4
        %v2215 = vor.u32 %v2214, %v2210
        %v2216 = vrot.slane %v2215, 4
        %v2218 = vshll.u32 %v1967, 16
        %v2220 = vrot.slane %v2218, 5
        %v2221 = vsel %vm1637, %v2216, %v2220
        %2247 = vst [vmem:[#allocation3 + $0x18] sm:$0xf] %v1981
        %2248 = vst [vmem:[#allocation3 + $0x3c] sm:$0xf] %v1991
        %2249 = vst [vmem:[#allocation3 + $0x60] sm:$0xf] %v2001
        %2250 = vst [vmem:[#allocation3 + $0x84] sm:$0xf] %v2011
        %2251 = vst [vmem:[#allocation3 + $0xa8] sm:$0xf] %v2021
        %2252 = vst [vmem:[#allocation3 + $0xcc] sm:$0xf] %v2031
        %2253 = vst [vmem:[#allocation3 + $0xf0] sm:$0xf] %v2041
        %2254 = vst [vmem:[#allocation3 + $0x114] sm:$0xf] %v2051
        %2255 = vst [vmem:[#allocation3 + $0x138] sm:$0xf] %v2061
        %2256 = vst [vmem:[#allocation3 + $0x15c] sm:$0xf] %v2071
        %2257 = vst [vmem:[#allocation3 + $0x180] sm:$0xf] %v2081
        %2258 = vst [vmem:[#allocation3 + $0x1a4] sm:$0xf] %v2091
        %2259 = vst [vmem:[#allocation3 + $0x1c8] sm:$0xf] %v2101
        %2260 = vst [vmem:[#allocation3 + $0x1ec] sm:$0xf] %v2111
        %2261 = vst [vmem:[#allocation3 + $0x210] sm:$0xf] %v2121
        %2262 = vst [vmem:[#allocation3 + $0x234] sm:$0xf] %v2131
        %2263 = vst [vmem:[#allocation3 + $0x258] sm:$0xf] %v2141
        %2264 = vst [vmem:[#allocation3 + $0x27c] sm:$0xf] %v2151
        %2265 = vst [vmem:[#allocation3 + $0x2a0] sm:$0xf] %v2161
        %2266 = vst [vmem:[#allocation3 + $0x2c4] sm:$0xf] %v2171
        %2267 = vst [vmem:[#allocation3 + $0x2e8] sm:$0xf] %v2181
        %2268 = vst [vmem:[#allocation3 + $0x30c] sm:$0xf] %v2191
        %2269 = vst [vmem:[#allocation3 + $0x330] sm:$0xf] %v2201
        %2270 = vst [vmem:[#allocation3 + $0x354] sm:$0xf] %v2211
        %2271 = vst [vmem:[#allocation3 + $0x378] sm:$0xf] %v2221
        %v2272 = vld [vmem:[#allocation2 + $0xc] sm:$0xe]
        %v2273 = vld [vmem:[#allocation2 + $0x10] sm:$0xf]
        %v2274 = vld [vmem:[#allocation2 + $0x14] sm:$0xf]
        %v2275 = vld [vmem:[#allocation2 + $0x18] sm:$0xf]
        %v2276 = vld [vmem:[#allocation2 + $0x1c] sm:$0xf]
        %v2277 = vld [vmem:[#allocation2 + $0x20] sm:$0xf]
        %v2278 = vld [vmem:[#allocation2 + $0x24] sm:$0xf]
        %v2279 = vld [vmem:[#allocation2 + $0x28] sm:$0xf]
        %v2280 = vld [vmem:[#allocation2 + $0x2c] sm:$0xf]
        %v2281 = vld [vmem:[#allocation2 + $0x30] sm:$0xf]
        %v2282 = vld [vmem:[#allocation2 + $0x34] sm:$0xf]
        %v2283 = vld [vmem:[#allocation2 + $0x38] sm:$0xf]
        %v2284 = vld [vmem:[#allocation2 + $0x3c] sm:$0xf]
        %v2285 = vld [vmem:[#allocation2 + $0x40] sm:$0xf]
        %v2286 = vld [vmem:[#allocation2 + $0x44] sm:$0xf]
        %v2287 = vld [vmem:[#allocation2 + $0x48] sm:$0xf]
        %v2288 = vld [vmem:[#allocation2 + $0x4c] sm:$0xf]
        %v2289 = vld [vmem:[#allocation2 + $0x50] sm:$0xf]
        %v2290 = vld [vmem:[#allocation2 + $0x54] sm:$0xf]
        %v2291 = vld [vmem:[#allocation2 + $0x58] sm:$0xf]
        %v2292 = vld [vmem:[#allocation2 + $0x5c] sm:$0xf]
        %v2293 = vld [vmem:[#allocation2 + $0x60] sm:$0xf]
        %v2294 = vld [vmem:[#allocation2 + $0x64] sm:$0xf]
        %v2295 = vld [vmem:[#allocation2 + $0x68] sm:$0xf]
        %v2296 = vld [vmem:[#allocation2 + $0x6c] sm:$0xf]
        %v2297 = vld [vmem:[#allocation2 + $0x70] sm:$0x1]
        %vm2324 = vcmask 1042432
        %vm2325 = vcmask 1046532
        %vm2326 = vmor %vm2324, %vm2325
        %v2327 = vrot.slane %v2272, 5
        %v2328 = vrot.slane %v2327, 4
        %v2329 = vrot.slane %v2273, 5
        %v2330 = vsel %vm2326, %v2328, %v2329
        %v2331 = vrot.slane %v2329, 4
        %v2332 = vrot.slane %v2274, 5
        %v2333 = vsel %vm2326, %v2331, %v2332
        %v2334 = vrot.slane %v2332, 4
        %v2335 = vrot.slane %v2275, 5
        %v2336 = vsel %vm2326, %v2334, %v2335
        %v2337 = vrot.slane %v2335, 4
        %v2338 = vrot.slane %v2276, 5
        %v2339 = vsel %vm2326, %v2337, %v2338
        %v2340 = vrot.slane %v2338, 4
        %v2341 = vrot.slane %v2277, 5
        %v2342 = vsel %vm2326, %v2340, %v2341
        %v2343 = vrot.slane %v2341, 4
        %v2344 = vrot.slane %v2278, 5
        %v2345 = vsel %vm2326, %v2343, %v2344
        %v2346 = vrot.slane %v2344, 4
        %v2347 = vrot.slane %v2279, 5
        %v2348 = vsel %vm2326, %v2346, %v2347
        %v2349 = vrot.slane %v2347, 4
        %v2350 = vrot.slane %v2280, 5
        %v2351 = vsel %vm2326, %v2349, %v2350
        %v2352 = vrot.slane %v2350, 4
        %v2353 = vrot.slane %v2281, 5
        %v2354 = vsel %vm2326, %v2352, %v2353
        %v2355 = vrot.slane %v2353, 4
        %v2356 = vrot.slane %v2282, 5
        %v2357 = vsel %vm2326, %v2355, %v2356
        %v2358 = vrot.slane %v2356, 4
        %v2359 = vrot.slane %v2283, 5
        %v2360 = vsel %vm2326, %v2358, %v2359
        %v2361 = vrot.slane %v2359, 4
        %v2362 = vrot.slane %v2284, 5
        %v2363 = vsel %vm2326, %v2361, %v2362
        %v2364 = vrot.slane %v2362, 4
        %v2365 = vrot.slane %v2285, 5
        %v2366 = vsel %vm2326, %v2364, %v2365
        %v2367 = vrot.slane %v2365, 4
        %v2368 = vrot.slane %v2286, 5
        %v2369 = vsel %vm2326, %v2367, %v2368
        %v2370 = vrot.slane %v2368, 4
        %v2371 = vrot.slane %v2287, 5
        %v2372 = vsel %vm2326, %v2370, %v2371
        %v2373 = vrot.slane %v2371, 4
        %v2374 = vrot.slane %v2288, 5
        %v2375 = vsel %vm2326, %v2373, %v2374
        %v2376 = vrot.slane %v2374, 4
        %v2377 = vrot.slane %v2289, 5
        %v2378 = vsel %vm2326, %v2376, %v2377
        %v2379 = vrot.slane %v2377, 4
        %v2380 = vrot.slane %v2290, 5
        %v2381 = vsel %vm2326, %v2379, %v2380
        %v2382 = vrot.slane %v2380, 4
        %v2383 = vrot.slane %v2291, 5
        %v2384 = vsel %vm2326, %v2382, %v2383
        %v2385 = vrot.slane %v2383, 4
        %v2386 = vrot.slane %v2292, 5
        %v2387 = vsel %vm2326, %v2385, %v2386
        %v2388 = vrot.slane %v2386, 4
        %v2389 = vrot.slane %v2293, 5
        %v2390 = vsel %vm2326, %v2388, %v2389
        %v2391 = vrot.slane %v2389, 4
        %v2392 = vrot.slane %v2294, 5
        %v2393 = vsel %vm2326, %v2391, %v2392
        %v2394 = vrot.slane %v2392, 4
        %v2395 = vrot.slane %v2295, 5
        %v2396 = vsel %vm2326, %v2394, %v2395
        %v2397 = vrot.slane %v2395, 4
        %v2398 = vrot.slane %v2296, 5
        %v2399 = vsel %vm2326, %v2397, %v2398
        %v2400 = vrot.slane %v2398, 4
        %v2401 = vrot.slane %v2297, 5
        %v2402 = vsel %vm2326, %v2400, %v2401
        %2428 = vst [vmem:[#allocation3 + $0x1c] sm:$0xf] %v2330
        %2429 = vst [vmem:[#allocation3 + $0x40] sm:$0xf] %v2333
        %2430 = vst [vmem:[#allocation3 + $0x64] sm:$0xf] %v2336
        %2431 = vst [vmem:[#allocation3 + $0x88] sm:$0xf] %v2339
        %2432 = vst [vmem:[#allocation3 + $0xac] sm:$0xf] %v2342
        %2433 = vst [vmem:[#allocation3 + $0xd0] sm:$0xf] %v2345
        %2434 = vst [vmem:[#allocation3 + $0xf4] sm:$0xf] %v2348
        %2435 = vst [vmem:[#allocation3 + $0x118] sm:$0xf] %v2351
        %2436 = vst [vmem:[#allocation3 + $0x13c] sm:$0xf] %v2354
        %2437 = vst [vmem:[#allocation3 + $0x160] sm:$0xf] %v2357
        %2438 = vst [vmem:[#allocation3 + $0x184] sm:$0xf] %v2360
        %2439 = vst [vmem:[#allocation3 + $0x1a8] sm:$0xf] %v2363
        %2440 = vst [vmem:[#allocation3 + $0x1cc] sm:$0xf] %v2366
        %2441 = vst [vmem:[#allocation3 + $0x1f0] sm:$0xf] %v2369
        %2442 = vst [vmem:[#allocation3 + $0x214] sm:$0xf] %v2372
        %2443 = vst [vmem:[#allocation3 + $0x238] sm:$0xf] %v2375
        %2444 = vst [vmem:[#allocation3 + $0x25c] sm:$0xf] %v2378
        %2445 = vst [vmem:[#allocation3 + $0x280] sm:$0xf] %v2381
        %2446 = vst [vmem:[#allocation3 + $0x2a4] sm:$0xf] %v2384
        %2447 = vst [vmem:[#allocation3 + $0x2c8] sm:$0xf] %v2387
        %2448 = vst [vmem:[#allocation3 + $0x2ec] sm:$0xf] %v2390
        %2449 = vst [vmem:[#allocation3 + $0x310] sm:$0xf] %v2393
        %2450 = vst [vmem:[#allocation3 + $0x334] sm:$0xf] %v2396
        %2451 = vst [vmem:[#allocation3 + $0x358] sm:$0xf] %v2399
        %2452 = vst [vmem:[#allocation3 + $0x37c] sm:$0xf] %v2402
        %v2453 = vld [vmem:[#allocation2 + $0xc] sm:$0xe]
        %v2454 = vld [vmem:[#allocation2 + $0x10] sm:$0xf]
        %v2455 = vld [vmem:[#allocation2 + $0x14] sm:$0xf]
        %v2456 = vld [vmem:[#allocation2 + $0x18] sm:$0xf]
        %v2457 = vld [vmem:[#allocation2 + $0x1c] sm:$0xf]
        %v2458 = vld [vmem:[#allocation2 + $0x20] sm:$0xf]
        %v2459 = vld [vmem:[#allocation2 + $0x24] sm:$0xf]
        %v2460 = vld [vmem:[#allocation2 + $0x28] sm:$0xf]
        %v2461 = vld [vmem:[#allocation2 + $0x2c] sm:$0xf]
        %v2462 = vld [vmem:[#allocation2 + $0x30] sm:$0xf]
        %v2463 = vld [vmem:[#allocation2 + $0x34] sm:$0xf]
        %v2464 = vld [vmem:[#allocation2 + $0x38] sm:$0xf]
        %v2465 = vld [vmem:[#allocation2 + $0x3c] sm:$0xf]
        %v2466 = vld [vmem:[#allocation2 + $0x40] sm:$0xf]
        %v2467 = vld [vmem:[#allocation2 + $0x44] sm:$0xf]
        %v2468 = vld [vmem:[#allocation2 + $0x48] sm:$0xf]
        %v2469 = vld [vmem:[#allocation2 + $0x4c] sm:$0xf]
        %v2470 = vld [vmem:[#allocation2 + $0x50] sm:$0xf]
        %v2471 = vld [vmem:[#allocation2 + $0x54] sm:$0xf]
        %v2472 = vld [vmem:[#allocation2 + $0x58] sm:$0xf]
        %v2473 = vld [vmem:[#allocation2 + $0x5c] sm:$0xf]
        %v2474 = vld [vmem:[#allocation2 + $0x60] sm:$0xf]
        %v2475 = vld [vmem:[#allocation2 + $0x64] sm:$0xf]
        %v2476 = vld [vmem:[#allocation2 + $0x68] sm:$0xf]
        %v2477 = vld [vmem:[#allocation2 + $0x6c] sm:$0xf]
        %v2478 = vld [vmem:[#allocation2 + $0x70] sm:$0x3]
        %vm2479 = vsmask.f32 2304
        %vm2480 = vsmask.f32 6416
        %vm2481 = vmor %vm2479, %vm2480
        %v2483 = vshrl.u32 %v2453, 16
        %v2485 = vrot.slane %v2483, 5
        %v2486 = vshll.u32 %v2453, 16
        %v2488 = vrot.slane %v2486, 6
        %v2489 = vor.u32 %v2485, %v2488
        %v2490 = vrot.slane %v2489, 4
        %v2492 = vshrl.u32 %v2454, 16
        %v2494 = vrot.slane %v2492, 5
        %v2495 = vshll.u32 %v2454, 16
        %v2497 = vrot.slane %v2495, 6
        %v2498 = vor.u32 %v2494, %v2497
        %v2499 = vsel %vm2481, %v2490, %v2498
        %v2500 = vrot.slane %v2498, 4
        %v2502 = vshrl.u32 %v2455, 16
        %v2504 = vrot.slane %v2502, 5
        %v2505 = vshll.u32 %v2455, 16
        %v2507 = vrot.slane %v2505, 6
        %v2508 = vor.u32 %v2504, %v2507
        %v2509 = vsel %vm2481, %v2500, %v2508
        %v2510 = vrot.slane %v2508, 4
        %v2512 = vshrl.u32 %v2456, 16
        %v2514 = vrot.slane %v2512, 5
        %v2515 = vshll.u32 %v2456, 16
        %v2517 = vrot.slane %v2515, 6
        %v2518 = vor.u32 %v2514, %v2517
        %v2519 = vsel %vm2481, %v2510, %v2518
        %v2520 = vrot.slane %v2518, 4
        %v2522 = vshrl.u32 %v2457, 16
        %v2524 = vrot.slane %v2522, 5
        %v2525 = vshll.u32 %v2457, 16
        %v2527 = vrot.slane %v2525, 6
        %v2528 = vor.u32 %v2524, %v2527
        %v2529 = vsel %vm2481, %v2520, %v2528
        %v2530 = vrot.slane %v2528, 4
        %v2532 = vshrl.u32 %v2458, 16
        %v2534 = vrot.slane %v2532, 5
        %v2535 = vshll.u32 %v2458, 16
        %v2537 = vrot.slane %v2535, 6
        %v2538 = vor.u32 %v2534, %v2537
        %v2539 = vsel %vm2481, %v2530, %v2538
        %v2540 = vrot.slane %v2538, 4
        %v2542 = vshrl.u32 %v2459, 16
        %v2544 = vrot.slane %v2542, 5
        %v2545 = vshll.u32 %v2459, 16
        %v2547 = vrot.slane %v2545, 6
        %v2548 = vor.u32 %v2544, %v2547
        %v2549 = vsel %vm2481, %v2540, %v2548
        %v2550 = vrot.slane %v2548, 4
        %v2552 = vshrl.u32 %v2460, 16
        %v2554 = vrot.slane %v2552, 5
        %v2555 = vshll.u32 %v2460, 16
        %v2557 = vrot.slane %v2555, 6
        %v2558 = vor.u32 %v2554, %v2557
        %v2559 = vsel %vm2481, %v2550, %v2558
        %v2560 = vrot.slane %v2558, 4
        %v2562 = vshrl.u32 %v2461, 16
        %v2564 = vrot.slane %v2562, 5
        %v2565 = vshll.u32 %v2461, 16
        %v2567 = vrot.slane %v2565, 6
        %v2568 = vor.u32 %v2564, %v2567
        %v2569 = vsel %vm2481, %v2560, %v2568
        %v2570 = vrot.slane %v2568, 4
        %v2572 = vshrl.u32 %v2462, 16
        %v2574 = vrot.slane %v2572, 5
        %v2575 = vshll.u32 %v2462, 16
        %v2577 = vrot.slane %v2575, 6
        %v2578 = vor.u32 %v2574, %v2577
        %v2579 = vsel %vm2481, %v2570, %v2578
        %v2580 = vrot.slane %v2578, 4
        %v2582 = vshrl.u32 %v2463, 16
        %v2584 = vrot.slane %v2582, 5
        %v2585 = vshll.u32 %v2463, 16
        %v2587 = vrot.slane %v2585, 6
        %v2588 = vor.u32 %v2584, %v2587
        %v2589 = vsel %vm2481, %v2580, %v2588
        %v2590 = vrot.slane %v2588, 4
        %v2592 = vshrl.u32 %v2464, 16
        %v2594 = vrot.slane %v2592, 5
        %v2595 = vshll.u32 %v2464, 16
        %v2597 = vrot.slane %v2595, 6
        %v2598 = vor.u32 %v2594, %v2597
        %v2599 = vsel %vm2481, %v2590, %v2598
        %v2600 = vrot.slane %v2598, 4
        %v2602 = vshrl.u32 %v2465, 16
        %v2604 = vrot.slane %v2602, 5
        %v2605 = vshll.u32 %v2465, 16
        %v2607 = vrot.slane %v2605, 6
        %v2608 = vor.u32 %v2604, %v2607
        %v2609 = vsel %vm2481, %v2600, %v2608
        %v2610 = vrot.slane %v2608, 4
        %v2612 = vshrl.u32 %v2466, 16
        %v2614 = vrot.slane %v2612, 5
        %v2615 = vshll.u32 %v2466, 16
        %v2617 = vrot.slane %v2615, 6
        %v2618 = vor.u32 %v2614, %v2617
        %v2619 = vsel %vm2481, %v2610, %v2618
        %v2620 = vrot.slane %v2618, 4
        %v2622 = vshrl.u32 %v2467, 16
        %v2624 = vrot.slane %v2622, 5
        %v2625 = vshll.u32 %v2467, 16
        %v2627 = vrot.slane %v2625, 6
        %v2628 = vor.u32 %v2624, %v2627
        %v2629 = vsel %vm2481, %v2620, %v2628
        %v2630 = vrot.slane %v2628, 4
        %v2632 = vshrl.u32 %v2468, 16
        %v2634 = vrot.slane %v2632, 5
        %v2635 = vshll.u32 %v2468, 16
        %v2637 = vrot.slane %v2635, 6
        %v2638 = vor.u32 %v2634, %v2637
        %v2639 = vsel %vm2481, %v2630, %v2638
        %v2640 = vrot.slane %v2638, 4
        %v2642 = vshrl.u32 %v2469, 16
        %v2644 = vrot.slane %v2642, 5
        %v2645 = vshll.u32 %v2469, 16
        %v2647 = vrot.slane %v2645, 6
        %v2648 = vor.u32 %v2644, %v2647
        %v2649 = vsel %vm2481, %v2640, %v2648
        %v2650 = vrot.slane %v2648, 4
        %v2652 = vshrl.u32 %v2470, 16
        %v2654 = vrot.slane %v2652, 5
        %v2655 = vshll.u32 %v2470, 16
        %v2657 = vrot.slane %v2655, 6
        %v2658 = vor.u32 %v2654, %v2657
        %v2659 = vsel %vm2481, %v2650, %v2658
        %v2660 = vrot.slane %v2658, 4
        %v2662 = vshrl.u32 %v2471, 16
        %v2664 = vrot.slane %v2662, 5
        %v2665 = vshll.u32 %v2471, 16
        %v2667 = vrot.slane %v2665, 6
        %v2668 = vor.u32 %v2664, %v2667
        %v2669 = vsel %vm2481, %v2660, %v2668
        %v2670 = vrot.slane %v2668, 4
        %v2672 = vshrl.u32 %v2472, 16
        %v2674 = vrot.slane %v2672, 5
        %v2675 = vshll.u32 %v2472, 16
        %v2677 = vrot.slane %v2675, 6
        %v2678 = vor.u32 %v2674, %v2677
        %v2679 = vsel %vm2481, %v2670, %v2678
        %v2680 = vrot.slane %v2678, 4
        %v2682 = vshrl.u32 %v2473, 16
        %v2684 = vrot.slane %v2682, 5
        %v2685 = vshll.u32 %v2473, 16
        %v2687 = vrot.slane %v2685, 6
        %v2688 = vor.u32 %v2684, %v2687
        %v2689 = vsel %vm2481, %v2680, %v2688
        %v2690 = vrot.slane %v2688, 4
        %v2692 = vshrl.u32 %v2474, 16
        %v2694 = vrot.slane %v2692, 5
        %v2695 = vshll.u32 %v2474, 16
        %v2697 = vrot.slane %v2695, 6
        %v2698 = vor.u32 %v2694, %v2697
        %v2699 = vsel %vm2481, %v2690, %v2698
        %v2700 = vrot.slane %v2698, 4
        %v2702 = vshrl.u32 %v2475, 16
        %v2704 = vrot.slane %v2702, 5
        %v2705 = vshll.u32 %v2475, 16
        %v2707 = vrot.slane %v2705, 6
        %v2708 = vor.u32 %v2704, %v2707
        %v2709 = vsel %vm2481, %v2700, %v2708
        %v2710 = vrot.slane %v2708, 4
        %v2712 = vshrl.u32 %v2476, 16
        %v2714 = vrot.slane %v2712, 5
        %v2715 = vshll.u32 %v2476, 16
        %v2717 = vrot.slane %v2715, 6
        %v2718 = vor.u32 %v2714, %v2717
        %v2719 = vsel %vm2481, %v2710, %v2718
        %v2720 = vrot.slane %v2718, 4
        %v2722 = vshrl.u32 %v2477, 16
        %v2724 = vrot.slane %v2722, 5
        %v2725 = vshll.u32 %v2477, 16
        %v2727 = vrot.slane %v2725, 6
        %v2728 = vor.u32 %v2724, %v2727
        %v2729 = vsel %vm2481, %v2720, %v2728
        %v2730 = vrot.slane %v2728, 4
        %v2732 = vshrl.u32 %v2478, 16
        %v2734 = vrot.slane %v2732, 5
        %v2735 = vshll.u32 %v2478, 16
        %v2737 = vrot.slane %v2735, 6
        %v2738 = vor.u32 %v2734, %v2737
        %v2739 = vsel %vm2481, %v2730, %v2738
        %2765 = vst [vmem:[#allocation3 + $0x20] sm:$0xf] %v2499
        %2766 = vst [vmem:[#allocation3 + $0x44] sm:$0xf] %v2509
        %2767 = vst [vmem:[#allocation3 + $0x68] sm:$0xf] %v2519
        %2768 = vst [vmem:[#allocation3 + $0x8c] sm:$0xf] %v2529
        %2769 = vst [vmem:[#allocation3 + $0xb0] sm:$0xf] %v2539
        %2770 = vst [vmem:[#allocation3 + $0xd4] sm:$0xf] %v2549
        %2771 = vst [vmem:[#allocation3 + $0xf8] sm:$0xf] %v2559
        %2772 = vst [vmem:[#allocation3 + $0x11c] sm:$0xf] %v2569
        %2773 = vst [vmem:[#allocation3 + $0x140] sm:$0xf] %v2579
        %2774 = vst [vmem:[#allocation3 + $0x164] sm:$0xf] %v2589
        %2775 = vst [vmem:[#allocation3 + $0x188] sm:$0xf] %v2599
        %2776 = vst [vmem:[#allocation3 + $0x1ac] sm:$0xf] %v2609
        %2777 = vst [vmem:[#allocation3 + $0x1d0] sm:$0xf] %v2619
        %2778 = vst [vmem:[#allocation3 + $0x1f4] sm:$0xf] %v2629
        %2779 = vst [vmem:[#allocation3 + $0x218] sm:$0xf] %v2639
        %2780 = vst [vmem:[#allocation3 + $0x23c] sm:$0xf] %v2649
        %2781 = vst [vmem:[#allocation3 + $0x260] sm:$0xf] %v2659
        %2782 = vst [vmem:[#allocation3 + $0x284] sm:$0xf] %v2669
        %2783 = vst [vmem:[#allocation3 + $0x2a8] sm:$0xf] %v2679
        %2784 = vst [vmem:[#allocation3 + $0x2cc] sm:$0xf] %v2689
        %2785 = vst [vmem:[#allocation3 + $0x2f0] sm:$0xf] %v2699
        %2786 = vst [vmem:[#allocation3 + $0x314] sm:$0xf] %v2709
        %2787 = vst [vmem:[#allocation3 + $0x338] sm:$0xf] %v2719
        %2788 = vst [vmem:[#allocation3 + $0x35c] sm:$0xf] %v2729
        %2789 = vst [vmem:[#allocation3 + $0x380] sm:$0xf] %v2739
        %v2790 = vld [vmem:[#allocation3] sm:$0xff]
        %v2791 = vld [vmem:[#allocation3 + $0x8] sm:$0xff]
        %v2792 = vld [vmem:[#allocation3 + $0x10] sm:$0xff]
        %v2793 = vld [vmem:[#allocation3 + $0x18] sm:$0xff]
        %v2794 = vld [vmem:[#allocation3 + $0x20] sm:$0xf]
        %v2795 = vld [vmem:[#allocation3 + $0x24] sm:$0xff]
        %v2796 = vld [vmem:[#allocation3 + $0x2c] sm:$0xff]
        %v2797 = vld [vmem:[#allocation3 + $0x34] sm:$0xff]
        %v2798 = vld [vmem:[#allocation3 + $0x3c] sm:$0xff]
        %v2799 = vld [vmem:[#allocation3 + $0x44] sm:$0xf]
        %v2800 = vld [vmem:[#allocation3 + $0x48] sm:$0xff]
        %v2801 = vld [vmem:[#allocation3 + $0x50] sm:$0xff]
        %v2802 = vld [vmem:[#allocation3 + $0x58] sm:$0xff]
        %v2803 = vld [vmem:[#allocation3 + $0x60] sm:$0xff]
        %v2804 = vld [vmem:[#allocation3 + $0x68] sm:$0xf]
        %v2805 = vld [vmem:[#allocation3 + $0x6c] sm:$0xff]
        %v2806 = vld [vmem:[#allocation3 + $0x74] sm:$0xff]
        %v2807 = vld [vmem:[#allocation3 + $0x7c] sm:$0xff]
        %v2808 = vld [vmem:[#allocation3 + $0x84] sm:$0xff]
        %v2809 = vld [vmem:[#allocation3 + $0x8c] sm:$0xf]
        %v2810 = vld [vmem:[#allocation3 + $0x90] sm:$0xff]
        %v2811 = vld [vmem:[#allocation3 + $0x98] sm:$0xff]
        %v2812 = vld [vmem:[#allocation3 + $0xa0] sm:$0xff]
        %v2813 = vld [vmem:[#allocation3 + $0xa8] sm:$0xff]
        %v2814 = vld [vmem:[#allocation3 + $0xb0] sm:$0xf]
        %v2815 = vld [vmem:[#allocation3 + $0xb4] sm:$0xff]
        %v2816 = vld [vmem:[#allocation3 + $0xbc] sm:$0xff]
        %v2817 = vld [vmem:[#allocation3 + $0xc4] sm:$0xff]
        %v2818 = vld [vmem:[#allocation3 + $0xcc] sm:$0xff]
        %v2819 = vld [vmem:[#allocation3 + $0xd4] sm:$0xf]
        %v2820 = vld [vmem:[#allocation3 + $0xd8] sm:$0xff]
        %v2821 = vld [vmem:[#allocation3 + $0xe0] sm:$0xff]
        %v2822 = vld [vmem:[#allocation3 + $0xe8] sm:$0xff]
        %v2823 = vld [vmem:[#allocation3 + $0xf0] sm:$0xff]
        %v2824 = vld [vmem:[#allocation3 + $0xf8] sm:$0xf]
        %v2825 = vld [vmem:[#allocation3 + $0xfc] sm:$0xff]
        %v2826 = vld [vmem:[#allocation3 + $0x104] sm:$0xff]
        %v2827 = vld [vmem:[#allocation3 + $0x10c] sm:$0xff]
        %v2828 = vld [vmem:[#allocation3 + $0x114] sm:$0xff]
        %v2829 = vld [vmem:[#allocation3 + $0x11c] sm:$0xf]
        %v2830 = vld [vmem:[#allocation3 + $0x120] sm:$0xff]
        %v2831 = vld [vmem:[#allocation3 + $0x128] sm:$0xff]
        %v2832 = vld [vmem:[#allocation3 + $0x130] sm:$0xff]
        %v2833 = vld [vmem:[#allocation3 + $0x138] sm:$0xff]
        %v2834 = vld [vmem:[#allocation3 + $0x140] sm:$0xf]
        %v2835 = vld [vmem:[#allocation3 + $0x144] sm:$0xff]
        %v2836 = vld [vmem:[#allocation3 + $0x14c] sm:$0xff]
        %v2837 = vld [vmem:[#allocation3 + $0x154] sm:$0xff]
        %v2838 = vld [vmem:[#allocation3 + $0x15c] sm:$0xff]
        %v2839 = vld [vmem:[#allocation3 + $0x164] sm:$0xf]
        %v2840 = vld [vmem:[#allocation3 + $0x168] sm:$0xff]
        %v2841 = vld [vmem:[#allocation3 + $0x170] sm:$0xff]
        %v2842 = vld [vmem:[#allocation3 + $0x178] sm:$0xff]
        %v2843 = vld [vmem:[#allocation3 + $0x180] sm:$0xff]
        %v2844 = vld [vmem:[#allocation3 + $0x188] sm:$0xf]
        %v2845 = vld [vmem:[#allocation3 + $0x18c] sm:$0xff]
        %v2846 = vld [vmem:[#allocation3 + $0x194] sm:$0xff]
        %v2847 = vld [vmem:[#allocation3 + $0x19c] sm:$0xff]
        %v2848 = vld [vmem:[#allocation3 + $0x1a4] sm:$0xff]
        %v2849 = vld [vmem:[#allocation3 + $0x1ac] sm:$0xf]
        %v2850 = vld [vmem:[#allocation3 + $0x1b0] sm:$0xff]
        %v2851 = vld [vmem:[#allocation3 + $0x1b8] sm:$0xff]
        %v2852 = vld [vmem:[#allocation3 + $0x1c0] sm:$0xff]
        %v2853 = vld [vmem:[#allocation3 + $0x1c8] sm:$0xff]
        %v2854 = vld [vmem:[#allocation3 + $0x1d0] sm:$0xf]
        %v2855 = vld [vmem:[#allocation3 + $0x1d4] sm:$0xff]
        %v2856 = vld [vmem:[#allocation3 + $0x1dc] sm:$0xff]
        %v2857 = vld [vmem:[#allocation3 + $0x1e4] sm:$0xff]
        %v2858 = vld [vmem:[#allocation3 + $0x1ec] sm:$0xff]
        %v2859 = vld [vmem:[#allocation3 + $0x1f4] sm:$0xf]
        %v2860 = vld [vmem:[#allocation3 + $0x1f8] sm:$0xff]
        %v2861 = vld [vmem:[#allocation3 + $0x200] sm:$0xff]
        %v2862 = vld [vmem:[#allocation3 + $0x208] sm:$0xff]
        %v2863 = vld [vmem:[#allocation3 + $0x210] sm:$0xff]
        %v2864 = vld [vmem:[#allocation3 + $0x218] sm:$0xf]
        %v2865 = vld [vmem:[#allocation3 + $0x21c] sm:$0xff]
        %v2866 = vld [vmem:[#allocation3 + $0x224] sm:$0xff]
        %v2867 = vld [vmem:[#allocation3 + $0x22c] sm:$0xff]
        %v2868 = vld [vmem:[#allocation3 + $0x234] sm:$0xff]
        %v2869 = vld [vmem:[#allocation3 + $0x23c] sm:$0xf]
        %v2870 = vld [vmem:[#allocation3 + $0x240] sm:$0xff]
        %v2871 = vld [vmem:[#allocation3 + $0x248] sm:$0xff]
        %v2872 = vld [vmem:[#allocation3 + $0x250] sm:$0xff]
        %v2873 = vld [vmem:[#allocation3 + $0x258] sm:$0xff]
        %v2874 = vld [vmem:[#allocation3 + $0x260] sm:$0xf]
        %v2875 = vld [vmem:[#allocation3 + $0x264] sm:$0xff]
        %v2876 = vld [vmem:[#allocation3 + $0x26c] sm:$0xff]
        %v2877 = vld [vmem:[#allocation3 + $0x274] sm:$0xff]
        %v2878 = vld [vmem:[#allocation3 + $0x27c] sm:$0xff]
        %v2879 = vld [vmem:[#allocation3 + $0x284] sm:$0xf]
        %v2880 = vld [vmem:[#allocation3 + $0x288] sm:$0xff]
        %v2881 = vld [vmem:[#allocation3 + $0x290] sm:$0xff]
        %v2882 = vld [vmem:[#allocation3 + $0x298] sm:$0xff]
        %v2883 = vld [vmem:[#allocation3 + $0x2a0] sm:$0xff]
        %v2884 = vld [vmem:[#allocation3 + $0x2a8] sm:$0xf]
        %v2885 = vld [vmem:[#allocation3 + $0x2ac] sm:$0xff]
        %v2886 = vld [vmem:[#allocation3 + $0x2b4] sm:$0xff]
        %v2887 = vld [vmem:[#allocation3 + $0x2bc] sm:$0xff]
        %v2888 = vld [vmem:[#allocation3 + $0x2c4] sm:$0xff]
        %v2889 = vld [vmem:[#allocation3 + $0x2cc] sm:$0xf]
        %v2890 = vld [vmem:[#allocation3 + $0x2d0] sm:$0xff]
        %v2891 = vld [vmem:[#allocation3 + $0x2d8] sm:$0xff]
        %v2892 = vld [vmem:[#allocation3 + $0x2e0] sm:$0xff]
        %v2893 = vld [vmem:[#allocation3 + $0x2e8] sm:$0xff]
        %v2894 = vld [vmem:[#allocation3 + $0x2f0] sm:$0xf]
        %v2895 = vld [vmem:[#allocation3 + $0x2f4] sm:$0xff]
        %v2896 = vld [vmem:[#allocation3 + $0x2fc] sm:$0xff]
        %v2897 = vld [vmem:[#allocation3 + $0x304] sm:$0xff]
        %v2898 = vld [vmem:[#allocation3 + $0x30c] sm:$0xff]
        %v2899 = vld [vmem:[#allocation3 + $0x314] sm:$0xf]
        %v2900 = vld [vmem:[#allocation3 + $0x318] sm:$0xff]
        %v2901 = vld [vmem:[#allocation3 + $0x320] sm:$0xff]
        %v2902 = vld [vmem:[#allocation3 + $0x328] sm:$0xff]
        %v2903 = vld [vmem:[#allocation3 + $0x330] sm:$0xff]
        %v2904 = vld [vmem:[#allocation3 + $0x338] sm:$0xf]
        %v2905 = vld [vmem:[#allocation3 + $0x33c] sm:$0xff]
        %v2906 = vld [vmem:[#allocation3 + $0x344] sm:$0xff]
        %v2907 = vld [vmem:[#allocation3 + $0x34c] sm:$0xff]
        %v2908 = vld [vmem:[#allocation3 + $0x354] sm:$0xff]
        %v2909 = vld [vmem:[#allocation3 + $0x35c] sm:$0xf]
        %v2910 = vld [vmem:[#allocation3 + $0x360] sm:$0xff]
        %v2911 = vld [vmem:[#allocation3 + $0x368] sm:$0xff]
        %v2912 = vld [vmem:[#allocation3 + $0x370] sm:$0xff]
        %v2913 = vld [vmem:[#allocation3 + $0x378] sm:$0xff]
        %v2914 = vld [vmem:[#allocation3 + $0x380] sm:$0xf]
        %v2915 = vld [vmem:[%s292] sm:$0xf]
        %v2916 = vld [vmem:[%s292 + $0x4] sm:$0xf]
        %v2917 = vld [vmem:[%s292 + $0x8] sm:$0xf]
        %v2918 = vld [vmem:[%s292 + $0xc] sm:$0xf]
        %v2919 = vld [vmem:[%s292 + $0x10] sm:$0xf]
        %v2920 = vld [vmem:[%s292 + $0x14] sm:$0xf]
        %v2921 = vld [vmem:[%s292 + $0x18] sm:$0xf]
        %v2922 = vld [vmem:[%s292 + $0x1c] sm:$0xf]
        %v2923 = vld [vmem:[%s292 + $0x20] sm:$0xf]
        %v2924 = vld [vmem:[%s292 + $0x24] sm:$0xf]
        %v2925 = vld [vmem:[%s292 + $0x28] sm:$0xf]
        %v2926 = vld [vmem:[%s292 + $0x2c] sm:$0xf]
        %v2927 = vld [vmem:[%s292 + $0x30] sm:$0xf]
        %v2928 = vld [vmem:[%s292 + $0x34] sm:$0xf]
        %v2929 = vld [vmem:[%s292 + $0x38] sm:$0xf]
        %v2930 = vld [vmem:[%s292 + $0x3c] sm:$0xf]
        %v2931 = vld [vmem:[%s292 + $0x40] sm:$0xf]
        %v2932 = vld [vmem:[%s292 + $0x44] sm:$0xf]
        %v2933 = vld [vmem:[%s292 + $0x48] sm:$0xf]
        %v2934 = vld [vmem:[%s292 + $0x4c] sm:$0xf]
        %v2935 = vld [vmem:[%s292 + $0x50] sm:$0xf]
        %v2936 = vld [vmem:[%s292 + $0x54] sm:$0xf]
        %v2937 = vld [vmem:[%s292 + $0x58] sm:$0xf]
        %v2938 = vld [vmem:[%s292 + $0x5c] sm:$0xf]
        %v2939 = vld [vmem:[%s292 + $0x60] sm:$0xf]
        %v2940 = vld [vmem:[%s292 + $0x64] sm:$0xf]
        %v2941 = vld [vmem:[%s292 + $0x68] sm:$0xf]
        %v2942 = vld [vmem:[%s292 + $0x6c] sm:$0xf]
        %v2943 = vld [vmem:[%s292 + $0x70] sm:$0xf]
        %v2944 = vld [vmem:[%s292 + $0x74] sm:$0xf]
        %v2945 = vld [vmem:[%s292 + $0x78] sm:$0xf]
        %v2946 = vld [vmem:[%s292 + $0x7c] sm:$0xf]
        %v2947 = vld [vmem:[%s292 + $0x80] sm:$0xf]
        %v2948 = vld [vmem:[%s292 + $0x84] sm:$0xf]
        %v2949 = vld [vmem:[%s292 + $0x88] sm:$0xf]
        %v2950 = vld [vmem:[%s292 + $0x8c] sm:$0xf]
        %v2951 = vld [vmem:[%s292 + $0x90] sm:$0xf]
        %v2952 = vld [vmem:[%s292 + $0x94] sm:$0xf]
        %v2953 = vld [vmem:[%s292 + $0x98] sm:$0xf]
        %v2954 = vld [vmem:[%s292 + $0x9c] sm:$0xf]
        %v2955 = vld [vmem:[%s292 + $0xa0] sm:$0xf]
        %v2956 = vld [vmem:[%s292 + $0xa4] sm:$0xf]
        %v2957 = vld [vmem:[%s292 + $0xa8] sm:$0xf]
        %v2958 = vld [vmem:[%s292 + $0xac] sm:$0xf]
        %v2959 = vld [vmem:[%s292 + $0xb0] sm:$0xf]
        %v2960 = vld [vmem:[%s292 + $0xb4] sm:$0xf]
        %v2961 = vld [vmem:[%s292 + $0xb8] sm:$0xf]
        %v2962 = vld [vmem:[%s292 + $0xbc] sm:$0xf]
        %v2963 = vld [vmem:[%s292 + $0xc0] sm:$0xf]
        %v2964 = vld [vmem:[%s292 + $0xc4] sm:$0xf]
        %v2965 = vld [vmem:[%s292 + $0xc8] sm:$0xf]
        %v2966 = vld [vmem:[%s292 + $0xcc] sm:$0xf]
        %v2967 = vld [vmem:[%s292 + $0xd0] sm:$0xf]
        %v2968 = vld [vmem:[%s292 + $0xd4] sm:$0xf]
        %v2969 = vld [vmem:[%s292 + $0xd8] sm:$0xf]
        %v2970 = vld [vmem:[%s292 + $0xdc] sm:$0xf]
        %v2971 = vld [vmem:[%s292 + $0xe0] sm:$0xf]
        %v2972 = vld [vmem:[%s292 + $0xe4] sm:$0xf]
        %v2973 = vld [vmem:[%s292 + $0xe8] sm:$0xf]
        %v2974 = vld [vmem:[%s292 + $0xec] sm:$0xf]
        %v2975 = vld [vmem:[%s292 + $0xf0] sm:$0xf]
        %v2976 = vld [vmem:[%s292 + $0xf4] sm:$0xf]
        %v2977 = vld [vmem:[%s292 + $0xf8] sm:$0xf]
        %v2978 = vld [vmem:[%s292 + $0xfc] sm:$0xf]
        %v2979 = vld [vmem:[%s292 + $0x100] sm:$0xf]
        %v2980 = vld [vmem:[%s292 + $0x104] sm:$0xf]
        %v2981 = vld [vmem:[%s292 + $0x108] sm:$0xf]
        %v2982 = vld [vmem:[%s292 + $0x10c] sm:$0xf]
        %v2983 = vld [vmem:[%s292 + $0x110] sm:$0xf]
        %v2984 = vld [vmem:[%s292 + $0x114] sm:$0xf]
        %v2985 = vld [vmem:[%s292 + $0x118] sm:$0xf]
        %v2986 = vld [vmem:[%s292 + $0x11c] sm:$0xf]
        %v2987 = vld [vmem:[%s292 + $0x120] sm:$0xf]
        %v2988 = vld [vmem:[%s292 + $0x124] sm:$0xf]
        %v2989 = vld [vmem:[%s292 + $0x128] sm:$0xf]
        %v2990 = vld [vmem:[%s292 + $0x12c] sm:$0xf]
        %v2991 = vld [vmem:[%s292 + $0x130] sm:$0xf]
        %v2992 = vld [vmem:[%s292 + $0x134] sm:$0xf]
        %v2993 = vld [vmem:[%s292 + $0x138] sm:$0xf]
        %v2994 = vld [vmem:[%s292 + $0x13c] sm:$0xf]
        %v2995 = vld [vmem:[%s292 + $0x140] sm:$0xf]
        %v2996 = vld [vmem:[%s292 + $0x144] sm:$0xf]
        %v2997 = vld [vmem:[%s292 + $0x148] sm:$0xf]
        %v2998 = vld [vmem:[%s292 + $0x14c] sm:$0xf]
        %v2999 = vld [vmem:[%s292 + $0x150] sm:$0xf]
        %v3000 = vld [vmem:[%s292 + $0x154] sm:$0xf]
        %v3001 = vld [vmem:[%s292 + $0x158] sm:$0xf]
        %v3002 = vld [vmem:[%s292 + $0x15c] sm:$0xf]
        %v3003 = vld [vmem:[%s292 + $0x160] sm:$0xf]
        %v3004 = vld [vmem:[%s292 + $0x164] sm:$0xf]
        %v3005 = vld [vmem:[%s292 + $0x168] sm:$0xf]
        %v3006 = vld [vmem:[%s292 + $0x16c] sm:$0xf]
        %v3007 = vld [vmem:[%s292 + $0x170] sm:$0xf]
        %v3008 = vld [vmem:[%s292 + $0x174] sm:$0xf]
        %v3009 = vld [vmem:[%s292 + $0x178] sm:$0xf]
        %v3010 = vld [vmem:[%s292 + $0x17c] sm:$0xf]
        %v3011 = vld [vmem:[%s292 + $0x180] sm:$0xf]
        %v3012 = vld [vmem:[%s292 + $0x184] sm:$0xf]
        %v3013 = vld [vmem:[%s292 + $0x188] sm:$0xf]
        %v3014 = vld [vmem:[%s292 + $0x18c] sm:$0xf]
        %v3015 = vld [vmem:[%s292 + $0x190] sm:$0xf]
        %v3016 = vld [vmem:[%s292 + $0x194] sm:$0xf]
        %v3017 = vld [vmem:[%s292 + $0x198] sm:$0xf]
        %v3018 = vld [vmem:[%s292 + $0x19c] sm:$0xf]
        %v3019 = vld [vmem:[%s292 + $0x1a0] sm:$0xf]
        %v3020 = vld [vmem:[%s292 + $0x1a4] sm:$0xf]
        %v3021 = vld [vmem:[%s292 + $0x1a8] sm:$0xf]
        %v3022 = vld [vmem:[%s292 + $0x1ac] sm:$0xf]
        %v3023 = vld [vmem:[%s292 + $0x1b0] sm:$0xf]
        %v3024 = vld [vmem:[%s292 + $0x1b4] sm:$0xf]
        %v3025 = vld [vmem:[%s292 + $0x1b8] sm:$0xf]
        %v3026 = vld [vmem:[%s292 + $0x1bc] sm:$0xf]
        %v3027 = vld [vmem:[%s292 + $0x1c0] sm:$0xf]
        %v3028 = vld [vmem:[%s292 + $0x1c4] sm:$0xf]
        %v3029 = vld [vmem:[%s292 + $0x1c8] sm:$0xf]
        %v3030 = vld [vmem:[%s292 + $0x1cc] sm:$0xf]
        %v3031 = vld [vmem:[%s292 + $0x1d0] sm:$0xf]
        %v3032 = vld [vmem:[%s292 + $0x1d4] sm:$0xf]
        %v3033 = vld [vmem:[%s292 + $0x1d8] sm:$0xf]
        %v3034 = vld [vmem:[%s292 + $0x1dc] sm:$0xf]
        %v3035 = vld [vmem:[%s292 + $0x1e0] sm:$0xf]
        %v3036 = vld [vmem:[%s292 + $0x1e4] sm:$0xf]
        %v3037 = vld [vmem:[%s292 + $0x1e8] sm:$0xf]
        %v3038 = vld [vmem:[%s292 + $0x1ec] sm:$0xf]
        %v3039 = vld [vmem:[%s292 + $0x1f0] sm:$0xf]
        %v3040 = vld [vmem:[%s292 + $0x1f4] sm:$0xf]
        %v3041 = vld [vmem:[%s292 + $0x1f8] sm:$0xf]
        %v3042 = vld [vmem:[%s292 + $0x1fc] sm:$0xf]
        %v3043 = vld [vmem:[%s292 + $0x200] sm:$0xf]
        %v3044 = vld [vmem:[%s292 + $0x204] sm:$0xf]
        %v3045 = vld [vmem:[%s292 + $0x208] sm:$0xf]
        %v3046 = vld [vmem:[%s292 + $0x20c] sm:$0xf]
        %v3047 = vld [vmem:[%s292 + $0x210] sm:$0xf]
        %v3048 = vld [vmem:[%s292 + $0x214] sm:$0xf]
        %v3049 = vld [vmem:[%s292 + $0x218] sm:$0xf]
        %v3050 = vld [vmem:[%s292 + $0x21c] sm:$0xf]
        %v3051 = vld [vmem:[%s292 + $0x220] sm:$0xf]
        %v3052 = vld [vmem:[%s292 + $0x224] sm:$0xf]
        %v3053 = vld [vmem:[%s292 + $0x228] sm:$0xf]
        %v3054 = vld [vmem:[%s292 + $0x22c] sm:$0xf]
        %v3055 = vld [vmem:[%s292 + $0x230] sm:$0xf]
        %v3056 = vld [vmem:[%s292 + $0x234] sm:$0xf]
        %v3057 = vld [vmem:[%s292 + $0x238] sm:$0xf]
        %v3058 = vld [vmem:[%s292 + $0x23c] sm:$0xf]
        %v3184 = vunpack.c.l.b16 %v2790
        %v3185 = vunpack.c.h.b16 %v2790
        %v3186 = vunpack.c.l.b16 %v2791
        %v3187 = vunpack.c.h.b16 %v2791
        %v3188 = vunpack.c.l.b16 %v2792
        %v3189 = vunpack.c.h.b16 %v2792
        %v3190 = vunpack.c.l.b16 %v2793
        %v3191 = vunpack.c.h.b16 %v2793
        %v3192 = vunpack.c.l.b16 %v2794
        %v3193 = vunpack.c.l.b16 %v2795
        %v3194 = vunpack.c.h.b16 %v2795
        %v3195 = vunpack.c.l.b16 %v2796
        %v3196 = vunpack.c.h.b16 %v2796
        %v3197 = vunpack.c.l.b16 %v2797
        %v3198 = vunpack.c.h.b16 %v2797
        %v3199 = vunpack.c.l.b16 %v2798
        %v3200 = vunpack.c.h.b16 %v2798
        %v3201 = vunpack.c.l.b16 %v2799
        %v3202 = vunpack.c.l.b16 %v2800
        %v3203 = vunpack.c.h.b16 %v2800
        %v3204 = vunpack.c.l.b16 %v2801
        %v3205 = vunpack.c.h.b16 %v2801
        %v3206 = vunpack.c.l.b16 %v2802
        %v3207 = vunpack.c.h.b16 %v2802
        %v3208 = vunpack.c.l.b16 %v2803
        %v3209 = vunpack.c.h.b16 %v2803
        %v3210 = vunpack.c.l.b16 %v2804
        %v3211 = vunpack.c.l.b16 %v2805
        %v3212 = vunpack.c.h.b16 %v2805
        %v3213 = vunpack.c.l.b16 %v2806
        %v3214 = vunpack.c.h.b16 %v2806
        %v3215 = vunpack.c.l.b16 %v2807
        %v3216 = vunpack.c.h.b16 %v2807
        %v3217 = vunpack.c.l.b16 %v2808
        %v3218 = vunpack.c.h.b16 %v2808
        %v3219 = vunpack.c.l.b16 %v2809
        %v3220 = vunpack.c.l.b16 %v2810
        %v3221 = vunpack.c.h.b16 %v2810
        %v3222 = vunpack.c.l.b16 %v2811
        %v3223 = vunpack.c.h.b16 %v2811
        %v3224 = vunpack.c.l.b16 %v2812
        %v3225 = vunpack.c.h.b16 %v2812
        %v3226 = vunpack.c.l.b16 %v2813
        %v3227 = vunpack.c.h.b16 %v2813
        %v3228 = vunpack.c.l.b16 %v2814
        %v3229 = vunpack.c.l.b16 %v2815
        %v3230 = vunpack.c.h.b16 %v2815
        %v3231 = vunpack.c.l.b16 %v2816
        %v3232 = vunpack.c.h.b16 %v2816
        %v3233 = vunpack.c.l.b16 %v2817
        %v3234 = vunpack.c.h.b16 %v2817
        %v3235 = vunpack.c.l.b16 %v2818
        %v3236 = vunpack.c.h.b16 %v2818
        %v3237 = vunpack.c.l.b16 %v2819
        %v3238 = vunpack.c.l.b16 %v2820
        %v3239 = vunpack.c.h.b16 %v2820
        %v3240 = vunpack.c.l.b16 %v2821
        %v3241 = vunpack.c.h.b16 %v2821
        %v3242 = vunpack.c.l.b16 %v2822
        %v3243 = vunpack.c.h.b16 %v2822
        %v3244 = vunpack.c.l.b16 %v2823
        %v3245 = vunpack.c.h.b16 %v2823
        %v3246 = vunpack.c.l.b16 %v2824
        %v3247 = vunpack.c.l.b16 %v2825
        %v3248 = vunpack.c.h.b16 %v2825
        %v3249 = vunpack.c.l.b16 %v2826
        %v3250 = vunpack.c.h.b16 %v2826
        %v3251 = vunpack.c.l.b16 %v2827
        %v3252 = vunpack.c.h.b16 %v2827
        %v3253 = vunpack.c.l.b16 %v2828
        %v3254 = vunpack.c.h.b16 %v2828
        %v3255 = vunpack.c.l.b16 %v2829
        %v3256 = vunpack.c.l.b16 %v2830
        %v3257 = vunpack.c.h.b16 %v2830
        %v3258 = vunpack.c.l.b16 %v2831
        %v3259 = vunpack.c.h.b16 %v2831
        %v3260 = vunpack.c.l.b16 %v2832
        %v3261 = vunpack.c.h.b16 %v2832
        %v3262 = vunpack.c.l.b16 %v2833
        %v3263 = vunpack.c.h.b16 %v2833
        %v3264 = vunpack.c.l.b16 %v2834
        %v3265 = vunpack.c.l.b16 %v2835
        %v3266 = vunpack.c.h.b16 %v2835
        %v3267 = vunpack.c.l.b16 %v2836
        %v3268 = vunpack.c.h.b16 %v2836
        %v3269 = vunpack.c.l.b16 %v2837
        %v3270 = vunpack.c.h.b16 %v2837
        %v3271 = vunpack.c.l.b16 %v2838
        %v3272 = vunpack.c.h.b16 %v2838
        %v3273 = vunpack.c.l.b16 %v2839
        %v3274 = vunpack.c.l.b16 %v2840
        %v3275 = vunpack.c.h.b16 %v2840
        %v3276 = vunpack.c.l.b16 %v2841
        %v3277 = vunpack.c.h.b16 %v2841
        %v3278 = vunpack.c.l.b16 %v2842
        %v3279 = vunpack.c.h.b16 %v2842
        %v3280 = vunpack.c.l.b16 %v2843
        %v3281 = vunpack.c.h.b16 %v2843
        %v3282 = vunpack.c.l.b16 %v2844
        %v3283 = vunpack.c.l.b16 %v2845
        %v3284 = vunpack.c.h.b16 %v2845
        %v3285 = vunpack.c.l.b16 %v2846
        %v3286 = vunpack.c.h.b16 %v2846
        %v3287 = vunpack.c.l.b16 %v2847
        %v3288 = vunpack.c.h.b16 %v2847
        %v3289 = vunpack.c.l.b16 %v2848
        %v3290 = vunpack.c.h.b16 %v2848
        %v3291 = vunpack.c.l.b16 %v2849
        %v3292 = vunpack.c.l.b16 %v2850
        %v3293 = vunpack.c.h.b16 %v2850
        %v3294 = vunpack.c.l.b16 %v2851
        %v3295 = vunpack.c.h.b16 %v2851
        %v3296 = vunpack.c.l.b16 %v2852
        %v3297 = vunpack.c.h.b16 %v2852
        %v3298 = vunpack.c.l.b16 %v2853
        %v3299 = vunpack.c.h.b16 %v2853
        %v3300 = vunpack.c.l.b16 %v2854
        %v3301 = vunpack.c.l.b16 %v2855
        %v3302 = vunpack.c.h.b16 %v2855
        %v3303 = vunpack.c.l.b16 %v2856
        %v3304 = vunpack.c.h.b16 %v2856
        %v3305 = vunpack.c.l.b16 %v2857
        %v3306 = vunpack.c.h.b16 %v2857
        %v3307 = vunpack.c.l.b16 %v2858
        %v3308 = vunpack.c.h.b16 %v2858
        %v3309 = vunpack.c.l.b16 %v2859
        %v3310 = vunpack.c.l.b16 %v2860
        %v3311 = vunpack.c.h.b16 %v2860
        %v3312 = vunpack.c.l.b16 %v2861
        %v3313 = vunpack.c.h.b16 %v2861
        %v3314 = vunpack.c.l.b16 %v2862
        %v3315 = vunpack.c.h.b16 %v2862
        %v3316 = vunpack.c.l.b16 %v2863
        %v3317 = vunpack.c.h.b16 %v2863
        %v3318 = vunpack.c.l.b16 %v2864
        %v3319 = vunpack.c.l.b16 %v2865
        %v3320 = vunpack.c.h.b16 %v2865
        %v3321 = vunpack.c.l.b16 %v2866
        %v3322 = vunpack.c.h.b16 %v2866
        %v3323 = vunpack.c.l.b16 %v2867
        %v3324 = vunpack.c.h.b16 %v2867
        %v3325 = vunpack.c.l.b16 %v2868
        %v3326 = vunpack.c.h.b16 %v2868
        %v3327 = vunpack.c.l.b16 %v2869
        %v3328 = vunpack.c.l.b16 %v2870
        %v3329 = vunpack.c.h.b16 %v2870
        %v3330 = vunpack.c.l.b16 %v2871
        %v3331 = vunpack.c.h.b16 %v2871
        %v3332 = vunpack.c.l.b16 %v2872
        %v3333 = vunpack.c.h.b16 %v2872
        %v3334 = vunpack.c.l.b16 %v2873
        %v3335 = vunpack.c.h.b16 %v2873
        %v3336 = vunpack.c.l.b16 %v2874
        %v3337 = vunpack.c.l.b16 %v2875
        %v3338 = vunpack.c.h.b16 %v2875
        %v3339 = vunpack.c.l.b16 %v2876
        %v3340 = vunpack.c.h.b16 %v2876
        %v3341 = vunpack.c.l.b16 %v2877
        %v3342 = vunpack.c.h.b16 %v2877
        %v3343 = vunpack.c.l.b16 %v2878
        %v3344 = vunpack.c.h.b16 %v2878
        %v3345 = vunpack.c.l.b16 %v2879
        %v3346 = vunpack.c.l.b16 %v2880
        %v3347 = vunpack.c.h.b16 %v2880
        %v3348 = vunpack.c.l.b16 %v2881
        %v3349 = vunpack.c.h.b16 %v2881
        %v3350 = vunpack.c.l.b16 %v2882
        %v3351 = vunpack.c.h.b16 %v2882
        %v3352 = vunpack.c.l.b16 %v2883
        %v3353 = vunpack.c.h.b16 %v2883
        %v3354 = vunpack.c.l.b16 %v2884
        %v3355 = vunpack.c.l.b16 %v2885
        %v3356 = vunpack.c.h.b16 %v2885
        %v3357 = vunpack.c.l.b16 %v2886
        %v3358 = vunpack.c.h.b16 %v2886
        %v3359 = vunpack.c.l.b16 %v2887
        %v3360 = vunpack.c.h.b16 %v2887
        %v3361 = vunpack.c.l.b16 %v2888
        %v3362 = vunpack.c.h.b16 %v2888
        %v3363 = vunpack.c.l.b16 %v2889
        %v3364 = vunpack.c.l.b16 %v2890
        %v3365 = vunpack.c.h.b16 %v2890
        %v3366 = vunpack.c.l.b16 %v2891
        %v3367 = vunpack.c.h.b16 %v2891
        %v3368 = vunpack.c.l.b16 %v2892
        %v3369 = vunpack.c.h.b16 %v2892
        %v3370 = vunpack.c.l.b16 %v2893
        %v3371 = vunpack.c.h.b16 %v2893
        %v3372 = vunpack.c.l.b16 %v2894
        %v3373 = vunpack.c.l.b16 %v2895
        %v3374 = vunpack.c.h.b16 %v2895
        %v3375 = vunpack.c.l.b16 %v2896
        %v3376 = vunpack.c.h.b16 %v2896
        %v3377 = vunpack.c.l.b16 %v2897
        %v3378 = vunpack.c.h.b16 %v2897
        %v3379 = vunpack.c.l.b16 %v2898
        %v3380 = vunpack.c.h.b16 %v2898
        %v3381 = vunpack.c.l.b16 %v2899
        %v3382 = vunpack.c.l.b16 %v2900
        %v3383 = vunpack.c.h.b16 %v2900
        %v3384 = vunpack.c.l.b16 %v2901
        %v3385 = vunpack.c.h.b16 %v2901
        %v3386 = vunpack.c.l.b16 %v2902
        %v3387 = vunpack.c.h.b16 %v2902
        %v3388 = vunpack.c.l.b16 %v2903
        %v3389 = vunpack.c.h.b16 %v2903
        %v3390 = vunpack.c.l.b16 %v2904
        %v3391 = vunpack.c.l.b16 %v2905
        %v3392 = vunpack.c.h.b16 %v2905
        %v3393 = vunpack.c.l.b16 %v2906
        %v3394 = vunpack.c.h.b16 %v2906
        %v3395 = vunpack.c.l.b16 %v2907
        %v3396 = vunpack.c.h.b16 %v2907
        %v3397 = vunpack.c.l.b16 %v2908
        %v3398 = vunpack.c.h.b16 %v2908
        %v3399 = vunpack.c.l.b16 %v2909
        %v3400 = vunpack.c.l.b16 %v2910
        %v3401 = vunpack.c.h.b16 %v2910
        %v3402 = vunpack.c.l.b16 %v2911
        %v3403 = vunpack.c.h.b16 %v2911
        %v3404 = vunpack.c.l.b16 %v2912
        %v3405 = vunpack.c.h.b16 %v2912
        %v3406 = vunpack.c.l.b16 %v2913
        %v3407 = vunpack.c.h.b16 %v2913
        %v3408 = vunpack.c.l.b16 %v2914
        %v3409 = vpack.c.b16 %v3193, %v3184
        %v3410 = vpack.c.b16 %v3194, %v3185
        %v3411 = vpack.c.b16 %v3195, %v3186
        %v3412 = vpack.c.b16 %v3196, %v3187
        %v3413 = vpack.c.b16 %v3197, %v3188
        %v3414 = vpack.c.b16 %v3198, %v3189
        %v3415 = vpack.c.b16 %v3199, %v3190
        %v3416 = vpack.c.b16 %v3200, %v3191
        %v3417 = vpack.c.b16 %v3201, %v3192
        %v3418 = vpack.c.b16 %v3211, %v3202
        %v3419 = vpack.c.b16 %v3212, %v3203
        %v3420 = vpack.c.b16 %v3213, %v3204
        %v3421 = vpack.c.b16 %v3214, %v3205
        %v3422 = vpack.c.b16 %v3215, %v3206
        %v3423 = vpack.c.b16 %v3216, %v3207
        %v3424 = vpack.c.b16 %v3217, %v3208
        %v3425 = vpack.c.b16 %v3218, %v3209
        %v3426 = vpack.c.b16 %v3219, %v3210
        %v3427 = vpack.c.b16 %v3229, %v3220
        %v3428 = vpack.c.b16 %v3230, %v3221
        %v3429 = vpack.c.b16 %v3231, %v3222
        %v3430 = vpack.c.b16 %v3232, %v3223
        %v3431 = vpack.c.b16 %v3233, %v3224
        %v3432 = vpack.c.b16 %v3234, %v3225
        %v3433 = vpack.c.b16 %v3235, %v3226
        %v3434 = vpack.c.b16 %v3236, %v3227
        %v3435 = vpack.c.b16 %v3237, %v3228
        %v3436 = vpack.c.b16 %v3247, %v3238
        %v3437 = vpack.c.b16 %v3248, %v3239
        %v3438 = vpack.c.b16 %v3249, %v3240
        %v3439 = vpack.c.b16 %v3250, %v3241
        %v3440 = vpack.c.b16 %v3251, %v3242
        %v3441 = vpack.c.b16 %v3252, %v3243
        %v3442 = vpack.c.b16 %v3253, %v3244
        %v3443 = vpack.c.b16 %v3254, %v3245
        %v3444 = vpack.c.b16 %v3255, %v3246
        %v3445 = vpack.c.b16 %v3265, %v3256
        %v3446 = vpack.c.b16 %v3266, %v3257
        %v3447 = vpack.c.b16 %v3267, %v3258
        %v3448 = vpack.c.b16 %v3268, %v3259
        %v3449 = vpack.c.b16 %v3269, %v3260
        %v3450 = vpack.c.b16 %v3270, %v3261
        %v3451 = vpack.c.b16 %v3271, %v3262
        %v3452 = vpack.c.b16 %v3272, %v3263
        %v3453 = vpack.c.b16 %v3273, %v3264
        %v3454 = vpack.c.b16 %v3283, %v3274
        %v3455 = vpack.c.b16 %v3284, %v3275
        %v3456 = vpack.c.b16 %v3285, %v3276
        %v3457 = vpack.c.b16 %v3286, %v3277
        %v3458 = vpack.c.b16 %v3287, %v3278
        %v3459 = vpack.c.b16 %v3288, %v3279
        %v3460 = vpack.c.b16 %v3289, %v3280
        %v3461 = vpack.c.b16 %v3290, %v3281
        %v3462 = vpack.c.b16 %v3291, %v3282
        %v3463 = vpack.c.b16 %v3301, %v3292
        %v3464 = vpack.c.b16 %v3302, %v3293
        %v3465 = vpack.c.b16 %v3303, %v3294
        %v3466 = vpack.c.b16 %v3304, %v3295
        %v3467 = vpack.c.b16 %v3305, %v3296
        %v3468 = vpack.c.b16 %v3306, %v3297
        %v3469 = vpack.c.b16 %v3307, %v3298
        %v3470 = vpack.c.b16 %v3308, %v3299
        %v3471 = vpack.c.b16 %v3309, %v3300
        %v3472 = vpack.c.b16 %v3319, %v3310
        %v3473 = vpack.c.b16 %v3320, %v3311
        %v3474 = vpack.c.b16 %v3321, %v3312
        %v3475 = vpack.c.b16 %v3322, %v3313
        %v3476 = vpack.c.b16 %v3323, %v3314
        %v3477 = vpack.c.b16 %v3324, %v3315
        %v3478 = vpack.c.b16 %v3325, %v3316
        %v3479 = vpack.c.b16 %v3326, %v3317
        %v3480 = vpack.c.b16 %v3327, %v3318
        %v3481 = vpack.c.b16 %v3337, %v3328
        %v3482 = vpack.c.b16 %v3338, %v3329
        %v3483 = vpack.c.b16 %v3339, %v3330
        %v3484 = vpack.c.b16 %v3340, %v3331
        %v3485 = vpack.c.b16 %v3341, %v3332
        %v3486 = vpack.c.b16 %v3342, %v3333
        %v3487 = vpack.c.b16 %v3343, %v3334
        %v3488 = vpack.c.b16 %v3344, %v3335
        %v3489 = vpack.c.b16 %v3345, %v3336
        %v3490 = vpack.c.b16 %v3355, %v3346
        %v3491 = vpack.c.b16 %v3356, %v3347
        %v3492 = vpack.c.b16 %v3357, %v3348
        %v3493 = vpack.c.b16 %v3358, %v3349
        %v3494 = vpack.c.b16 %v3359, %v3350
        %v3495 = vpack.c.b16 %v3360, %v3351
        %v3496 = vpack.c.b16 %v3361, %v3352
        %v3497 = vpack.c.b16 %v3362, %v3353
        %v3498 = vpack.c.b16 %v3363, %v3354
        %v3499 = vpack.c.b16 %v3373, %v3364
        %v3500 = vpack.c.b16 %v3374, %v3365
        %v3501 = vpack.c.b16 %v3375, %v3366
        %v3502 = vpack.c.b16 %v3376, %v3367
        %v3503 = vpack.c.b16 %v3377, %v3368
        %v3504 = vpack.c.b16 %v3378, %v3369
        %v3505 = vpack.c.b16 %v3379, %v3370
        %v3506 = vpack.c.b16 %v3380, %v3371
        %v3507 = vpack.c.b16 %v3381, %v3372
        %v3508 = vpack.c.b16 %v3391, %v3382
        %v3509 = vpack.c.b16 %v3392, %v3383
        %v3510 = vpack.c.b16 %v3393, %v3384
        %v3511 = vpack.c.b16 %v3394, %v3385
        %v3512 = vpack.c.b16 %v3395, %v3386
        %v3513 = vpack.c.b16 %v3396, %v3387
        %v3514 = vpack.c.b16 %v3397, %v3388
        %v3515 = vpack.c.b16 %v3398, %v3389
        %v3516 = vpack.c.b16 %v3399, %v3390
        %v3517 = vpack.c.b16 %v3400, %v3400
        %v3518 = vpack.c.b16 %v3401, %v3401
        %v3519 = vpack.c.b16 %v3402, %v3402
        %v3520 = vpack.c.b16 %v3403, %v3403
        %v3521 = vpack.c.b16 %v3404, %v3404
        %v3522 = vpack.c.b16 %v3405, %v3405
        %v3523 = vpack.c.b16 %v3406, %v3406
        %v3524 = vpack.c.b16 %v3407, %v3407
        %v3525 = vpack.c.b16 %v3408, %v3408
        %v3787 = vunpack.c.l.b16 %v2915
        %v3788 = vunpack.c.l.b16 %v2916
        %v3789 = vunpack.c.l.b16 %v2917
        %v3790 = vunpack.c.l.b16 %v2918
        %v3791 = vunpack.c.l.b16 %v2919
        %v3792 = vunpack.c.l.b16 %v2920
        %v3793 = vunpack.c.l.b16 %v2921
        %v3794 = vunpack.c.l.b16 %v2922
        %v3795 = vunpack.c.l.b16 %v2923
        %v3796 = vunpack.c.l.b16 %v2924
        %v3797 = vunpack.c.l.b16 %v2925
        %v3798 = vunpack.c.l.b16 %v2926
        %v3799 = vunpack.c.l.b16 %v2927
        %v3800 = vunpack.c.l.b16 %v2928
        %v3801 = vunpack.c.l.b16 %v2929
        %v3802 = vunpack.c.l.b16 %v2930
        %v3803 = vunpack.c.l.b16 %v2931
        %v3804 = vunpack.c.l.b16 %v2932
        %v3805 = vunpack.c.l.b16 %v2933
        %v3806 = vunpack.c.l.b16 %v2934
        %v3807 = vunpack.c.l.b16 %v2935
        %v3808 = vunpack.c.l.b16 %v2936
        %v3809 = vunpack.c.l.b16 %v2937
        %v3810 = vunpack.c.l.b16 %v2938
        %v3811 = vunpack.c.l.b16 %v2939
        %v3812 = vunpack.c.l.b16 %v2940
        %v3813 = vunpack.c.l.b16 %v2941
        %v3814 = vunpack.c.l.b16 %v2942
        %v3815 = vunpack.c.l.b16 %v2943
        %v3816 = vunpack.c.l.b16 %v2944
        %v3817 = vunpack.c.l.b16 %v2945
        %v3818 = vunpack.c.l.b16 %v2946
        %v3819 = vunpack.c.l.b16 %v2947
        %v3820 = vunpack.c.l.b16 %v2948
        %v3821 = vunpack.c.l.b16 %v2949
        %v3822 = vunpack.c.l.b16 %v2950
        %v3823 = vunpack.c.l.b16 %v2951
        %v3824 = vunpack.c.l.b16 %v2952
        %v3825 = vunpack.c.l.b16 %v2953
        %v3826 = vunpack.c.l.b16 %v2954
        %v3827 = vunpack.c.l.b16 %v2955
        %v3828 = vunpack.c.l.b16 %v2956
        %v3829 = vunpack.c.l.b16 %v2957
        %v3830 = vunpack.c.l.b16 %v2958
        %v3831 = vunpack.c.l.b16 %v2959
        %v3832 = vunpack.c.l.b16 %v2960
        %v3833 = vunpack.c.l.b16 %v2961
        %v3834 = vunpack.c.l.b16 %v2962
        %v3835 = vunpack.c.l.b16 %v2963
        %v3836 = vunpack.c.l.b16 %v2964
        %v3837 = vunpack.c.l.b16 %v2965
        %v3838 = vunpack.c.l.b16 %v2966
        %v3839 = vunpack.c.l.b16 %v2967
        %v3840 = vunpack.c.l.b16 %v2968
        %v3841 = vunpack.c.l.b16 %v2969
        %v3842 = vunpack.c.l.b16 %v2970
        %v3843 = vunpack.c.l.b16 %v2971
        %v3844 = vunpack.c.l.b16 %v2972
        %v3845 = vunpack.c.l.b16 %v2973
        %v3846 = vunpack.c.l.b16 %v2974
        %v3847 = vunpack.c.l.b16 %v2975
        %v3848 = vunpack.c.l.b16 %v2976
        %v3849 = vunpack.c.l.b16 %v2977
        %v3850 = vunpack.c.l.b16 %v2978
        %v3851 = vunpack.c.l.b16 %v2979
        %v3852 = vunpack.c.l.b16 %v2980
        %v3853 = vunpack.c.l.b16 %v2981
        %v3854 = vunpack.c.l.b16 %v2982
        %v3855 = vunpack.c.l.b16 %v2983
        %v3856 = vunpack.c.l.b16 %v2984
        %v3857 = vunpack.c.l.b16 %v2985
        %v3858 = vunpack.c.l.b16 %v2986
        %v3859 = vunpack.c.l.b16 %v2987
        %v3860 = vunpack.c.l.b16 %v2988
        %v3861 = vunpack.c.l.b16 %v2989
        %v3862 = vunpack.c.l.b16 %v2990
        %v3863 = vunpack.c.l.b16 %v2991
        %v3864 = vunpack.c.l.b16 %v2992
        %v3865 = vunpack.c.l.b16 %v2993
        %v3866 = vunpack.c.l.b16 %v2994
        %v3867 = vunpack.c.l.b16 %v2995
        %v3868 = vunpack.c.l.b16 %v2996
        %v3869 = vunpack.c.l.b16 %v2997
        %v3870 = vunpack.c.l.b16 %v2998
        %v3871 = vunpack.c.l.b16 %v2999
        %v3872 = vunpack.c.l.b16 %v3000
        %v3873 = vunpack.c.l.b16 %v3001
        %v3874 = vunpack.c.l.b16 %v3002
        %v3875 = vunpack.c.l.b16 %v3003
        %v3876 = vunpack.c.l.b16 %v3004
        %v3877 = vunpack.c.l.b16 %v3005
        %v3878 = vunpack.c.l.b16 %v3006
        %v3879 = vunpack.c.l.b16 %v3007
        %v3880 = vunpack.c.l.b16 %v3008
        %v3881 = vunpack.c.l.b16 %v3009
        %v3882 = vunpack.c.l.b16 %v3010
        %v3883 = vunpack.c.l.b16 %v3011
        %v3884 = vunpack.c.l.b16 %v3012
        %v3885 = vunpack.c.l.b16 %v3013
        %v3886 = vunpack.c.l.b16 %v3014
        %v3887 = vunpack.c.l.b16 %v3015
        %v3888 = vunpack.c.l.b16 %v3016
        %v3889 = vunpack.c.l.b16 %v3017
        %v3890 = vunpack.c.l.b16 %v3018
        %v3891 = vunpack.c.l.b16 %v3019
        %v3892 = vunpack.c.l.b16 %v3020
        %v3893 = vunpack.c.l.b16 %v3021
        %v3894 = vunpack.c.l.b16 %v3022
        %v3895 = vunpack.c.l.b16 %v3023
        %v3896 = vunpack.c.l.b16 %v3024
        %v3897 = vunpack.c.l.b16 %v3025
        %v3898 = vunpack.c.l.b16 %v3026
        %v3899 = vunpack.c.l.b16 %v3027
        %v3900 = vunpack.c.l.b16 %v3028
        %v3901 = vunpack.c.l.b16 %v3029
        %v3902 = vunpack.c.l.b16 %v3030
        %v3903 = vunpack.c.l.b16 %v3031
        %v3904 = vunpack.c.l.b16 %v3032
        %v3905 = vunpack.c.l.b16 %v3033
        %v3906 = vunpack.c.l.b16 %v3034
        %v3907 = vunpack.c.l.b16 %v3035
        %v3908 = vunpack.c.l.b16 %v3036
        %v3909 = vunpack.c.l.b16 %v3037
        %v3910 = vunpack.c.l.b16 %v3038
        %v3911 = vunpack.c.l.b16 %v3039
        %v3912 = vunpack.c.l.b16 %v3040
        %v3913 = vunpack.c.l.b16 %v3041
        %v3914 = vunpack.c.l.b16 %v3042
        %v3915 = vunpack.c.l.b16 %v3043
        %v3916 = vunpack.c.l.b16 %v3044
        %v3917 = vunpack.c.l.b16 %v3045
        %v3918 = vunpack.c.l.b16 %v3046
        %v3919 = vunpack.c.l.b16 %v3047
        %v3920 = vunpack.c.l.b16 %v3048
        %v3921 = vunpack.c.l.b16 %v3049
        %v3922 = vunpack.c.l.b16 %v3050
        %v3923 = vunpack.c.l.b16 %v3051
        %v3924 = vunpack.c.l.b16 %v3052
        %v3925 = vunpack.c.l.b16 %v3053
        %v3926 = vunpack.c.l.b16 %v3054
        %v3927 = vunpack.c.l.b16 %v3055
        %v3928 = vunpack.c.l.b16 %v3056
        %v3929 = vunpack.c.l.b16 %v3057
        %v3930 = vunpack.c.l.b16 %v3058
        %v3931 = vpack.c.b16 %v3788, %v3787
        %v3932 = vpack.c.b16 %v3790, %v3789
        %v3933 = vpack.c.b16 %v3792, %v3791
        %v3934 = vpack.c.b16 %v3794, %v3793
        %v3935 = vpack.c.b16 %v3796, %v3795
        %v3936 = vpack.c.b16 %v3798, %v3797
        %v3937 = vpack.c.b16 %v3800, %v3799
        %v3938 = vpack.c.b16 %v3802, %v3801
        %v3939 = vpack.c.b16 %v3804, %v3803
        %v3940 = vpack.c.b16 %v3806, %v3805
        %v3941 = vpack.c.b16 %v3808, %v3807
        %v3942 = vpack.c.b16 %v3810, %v3809
        %v3943 = vpack.c.b16 %v3812, %v3811
        %v3944 = vpack.c.b16 %v3814, %v3813
        %v3945 = vpack.c.b16 %v3816, %v3815
        %v3946 = vpack.c.b16 %v3818, %v3817
        %v3947 = vpack.c.b16 %v3820, %v3819
        %v3948 = vpack.c.b16 %v3822, %v3821
        %v3949 = vpack.c.b16 %v3824, %v3823
        %v3950 = vpack.c.b16 %v3826, %v3825
        %v3951 = vpack.c.b16 %v3828, %v3827
        %v3952 = vpack.c.b16 %v3830, %v3829
        %v3953 = vpack.c.b16 %v3832, %v3831
        %v3954 = vpack.c.b16 %v3834, %v3833
        %v3955 = vpack.c.b16 %v3836, %v3835
        %v3956 = vpack.c.b16 %v3838, %v3837
        %v3957 = vpack.c.b16 %v3840, %v3839
        %v3958 = vpack.c.b16 %v3842, %v3841
        %v3959 = vpack.c.b16 %v3844, %v3843
        %v3960 = vpack.c.b16 %v3846, %v3845
        %v3961 = vpack.c.b16 %v3848, %v3847
        %v3962 = vpack.c.b16 %v3850, %v3849
        %v3963 = vpack.c.b16 %v3852, %v3851
        %v3964 = vpack.c.b16 %v3854, %v3853
        %v3965 = vpack.c.b16 %v3856, %v3855
        %v3966 = vpack.c.b16 %v3858, %v3857
        %v3967 = vpack.c.b16 %v3860, %v3859
        %v3968 = vpack.c.b16 %v3862, %v3861
        %v3969 = vpack.c.b16 %v3864, %v3863
        %v3970 = vpack.c.b16 %v3866, %v3865
        %v3971 = vpack.c.b16 %v3868, %v3867
        %v3972 = vpack.c.b16 %v3870, %v3869
        %v3973 = vpack.c.b16 %v3872, %v3871
        %v3974 = vpack.c.b16 %v3874, %v3873
        %v3975 = vpack.c.b16 %v3876, %v3875
        %v3976 = vpack.c.b16 %v3878, %v3877
        %v3977 = vpack.c.b16 %v3880, %v3879
        %v3978 = vpack.c.b16 %v3882, %v3881
        %v3979 = vpack.c.b16 %v3884, %v3883
        %v3980 = vpack.c.b16 %v3886, %v3885
        %v3981 = vpack.c.b16 %v3888, %v3887
        %v3982 = vpack.c.b16 %v3890, %v3889
        %v3983 = vpack.c.b16 %v3892, %v3891
        %v3984 = vpack.c.b16 %v3894, %v3893
        %v3985 = vpack.c.b16 %v3896, %v3895
        %v3986 = vpack.c.b16 %v3898, %v3897
        %v3987 = vpack.c.b16 %v3900, %v3899
        %v3988 = vpack.c.b16 %v3902, %v3901
        %v3989 = vpack.c.b16 %v3904, %v3903
        %v3990 = vpack.c.b16 %v3906, %v3905
        %v3991 = vpack.c.b16 %v3908, %v3907
        %v3992 = vpack.c.b16 %v3910, %v3909
        %v3993 = vpack.c.b16 %v3912, %v3911
        %v3994 = vpack.c.b16 %v3914, %v3913
        %v3995 = vpack.c.b16 %v3916, %v3915
        %v3996 = vpack.c.b16 %v3918, %v3917
        %v3997 = vpack.c.b16 %v3920, %v3919
        %v3998 = vpack.c.b16 %v3922, %v3921
        %v3999 = vpack.c.b16 %v3924, %v3923
        %v4000 = vpack.c.b16 %v3926, %v3925
        %v4001 = vpack.c.b16 %v3928, %v3927
        %v4002 = vpack.c.b16 %v3930, %v3929
        %4075 = vmatprep.subr.bf16.mxu0 0
        %4076 = vmatpush1.bf16.msra.mxu0 %v3931
        %4077 = vmatprep.subr.bf16.mxu0 0
        %4078 = vmatpush1.bf16.msra.mxu0 %v3932
        %4079 = vmatprep.subr.bf16.mxu0 0
        %4080 = vmatpush1.bf16.msra.mxu0 %v3933
        %4081 = vmatprep.subr.bf16.mxu0 0
        %4082 = vmatpush1.bf16.msra.mxu0 %v3934
        %4083 = vmatprep.subr.bf16.mxu0 0
        %4084 = vmatpush1.bf16.msra.mxu0 %v3935
        %4085 = vmatprep.subr.bf16.mxu0 0
        %4086 = vmatpush1.bf16.msra.mxu0 %v3936
        %4087 = vmatprep.subr.bf16.mxu0 0
        %4088 = vmatpush1.bf16.msra.mxu0 %v3937
        %4089 = vmatprep.subr.bf16.mxu0 0
        %4090 = vmatpush1.bf16.msra.mxu0 %v3938
        %4091 = vmatprep.subr.bf16.mxu0 0
        %4092 = vmatpush1.bf16.msra.mxu0 %v3939
        %4093 = vmatprep.subr.bf16.mxu0 0
        %4094 = vmatpush1.bf16.msra.mxu0 %v3940
        %4095 = vmatprep.subr.bf16.mxu0 0
        %4096 = vmatpush1.bf16.msra.mxu0 %v3941
        %4097 = vmatprep.subr.bf16.mxu0 0
        %4098 = vmatpush1.bf16.msra.mxu0 %v3942
        %4099 = vmatprep.subr.bf16.mxu0 0
        %4100 = vmatpush1.bf16.msra.mxu0 %v3943
        %4101 = vmatprep.subr.bf16.mxu0 0
        %4102 = vmatpush1.bf16.msra.mxu0 %v3944
        %4103 = vmatprep.subr.bf16.mxu0 0
        %4104 = vmatpush1.bf16.msra.mxu0 %v3945
        %4105 = vmatprep.subr.bf16.mxu0 0
        %4106 = vmatpush1.bf16.msra.mxu0 %v3946
        %4107 = vmatprep.mubr.bf16.mxu0 %v3410
        %4108 = vmatmul.mubr.bf16.gmra.mrb[0].mxu0 %v3409
        %v4109 = vpop.f32.mrb[0].mxu0
        %v4110 = vadd.f32 0.0, %v4109
        %v4111 = vpop.f32.mrb[0].mxu0
        %v4112 = vpop.f32.mrb[0].mxu0
        %v4113 = vadd.f32 0.0, %v4112
        %v4114 = vpop.f32.mrb[0].mxu0
        %4115 = vmatprep.mubr.bf16.mxu0 %v3419
        %4116 = vmatmul.mubr.bf16.gmra.mrb[0].mxu0 %v3418
        %v4117 = vpop.f32.mrb[0].mxu0
        %v4118 = vadd.f32 0.0, %v4117
        %v4119 = vpop.f32.mrb[0].mxu0
        %v4120 = vpop.f32.mrb[0].mxu0
        %v4121 = vadd.f32 0.0, %v4120
        %v4122 = vpop.f32.mrb[0].mxu0
        %4123 = vmatprep.mubr.bf16.mxu0 %v3428
        %4124 = vmatmul.mubr.bf16.gmra.mrb[0].mxu0 %v3427
        %v4125 = vpop.f32.mrb[0].mxu0
        %v4126 = vadd.f32 0.0, %v4125
        %v4127 = vpop.f32.mrb[0].mxu0
        %v4128 = vpop.f32.mrb[0].mxu0
        %v4129 = vadd.f32 0.0, %v4128
        %v4130 = vpop.f32.mrb[0].mxu0
        %4131 = vmatprep.mubr.bf16.mxu0 %v3437
        %4132 = vmatmul.mubr.bf16.gmra.mrb[0].mxu0 %v3436
        %v4133 = vpop.f32.mrb[0].mxu0
        %v4134 = vadd.f32 0.0, %v4133
        %v4135 = vpop.f32.mrb[0].mxu0
        %v4136 = vpop.f32.mrb[0].mxu0
        %v4137 = vadd.f32 0.0, %v4136
        %v4138 = vpop.f32.mrb[0].mxu0
        %4139 = vmatprep.mubr.bf16.mxu0 %v3446
        %4140 = vmatmul.mubr.bf16.gmra.mrb[0].mxu0 %v3445
        %v4141 = vpop.f32.mrb[0].mxu0
        %v4142 = vadd.f32 0.0, %v4141
        %v4143 = vpop.f32.mrb[0].mxu0
        %v4144 = vpop.f32.mrb[0].mxu0
        %v4145 = vadd.f32 0.0, %v4144
        %v4146 = vpop.f32.mrb[0].mxu0
        %4147 = vmatprep.mubr.bf16.mxu0 %v3455
        %4148 = vmatmul.mubr.bf16.gmra.mrb[0].mxu0 %v3454
        %v4149 = vpop.f32.mrb[0].mxu0
        %v4150 = vadd.f32 0.0, %v4149
        %v4151 = vpop.f32.mrb[0].mxu0
        %v4152 = vpop.f32.mrb[0].mxu0
        %v4153 = vadd.f32 0.0, %v4152
        %v4154 = vpop.f32.mrb[0].mxu0
        %4155 = vmatprep.mubr.bf16.mxu0 %v3464
        %4156 = vmatmul.mubr.bf16.gmra.mrb[0].mxu0 %v3463
        %v4157 = vpop.f32.mrb[0].mxu0
        %v4158 = vadd.f32 0.0, %v4157
        %v4159 = vpop.f32.mrb[0].mxu0
        %v4160 = vpop.f32.mrb[0].mxu0
        %v4161 = vadd.f32 0.0, %v4160
        %v4162 = vpop.f32.mrb[0].mxu0
        %4163 = vmatprep.mubr.bf16.mxu0 %v3473
        %4164 = vmatmul.mubr.bf16.gmra.mrb[0].mxu0 %v3472
        %v4165 = vpop.f32.mrb[0].mxu0
        %v4166 = vadd.f32 0.0, %v4165
        %v4167 = vpop.f32.mrb[0].mxu0
        %v4168 = vpop.f32.mrb[0].mxu0
        %v4169 = vadd.f32 0.0, %v4168
        %v4170 = vpop.f32.mrb[0].mxu0
        %4171 = vmatprep.mubr.bf16.mxu0 %v3482
        %4172 = vmatmul.mubr.bf16.gmra.mrb[0].mxu0 %v3481
        %v4173 = vpop.f32.mrb[0].mxu0
        %v4174 = vadd.f32 0.0, %v4173
        %v4175 = vpop.f32.mrb[0].mxu0
        %v4176 = vpop.f32.mrb[0].mxu0
        %v4177 = vadd.f32 0.0, %v4176
        %v4178 = vpop.f32.mrb[0].mxu0
        %4179 = vmatprep.mubr.bf16.mxu0 %v3491
        %4180 = vmatmul.mubr.bf16.gmra.mrb[0].mxu0 %v3490
        %v4181 = vpop.f32.mrb[0].mxu0
        %v4182 = vadd.f32 0.0, %v4181
        %v4183 = vpop.f32.mrb[0].mxu0
        %v4184 = vpop.f32.mrb[0].mxu0
        %v4185 = vadd.f32 0.0, %v4184
        %v4186 = vpop.f32.mrb[0].mxu0
        %4187 = vmatprep.mubr.bf16.mxu0 %v3500
        %4188 = vmatmul.mubr.bf16.gmra.mrb[0].mxu0 %v3499
        %v4189 = vpop.f32.mrb[0].mxu0
        %v4190 = vadd.f32 0.0, %v4189
        %v4191 = vpop.f32.mrb[0].mxu0
        %v4192 = vpop.f32.mrb[0].mxu0
        %v4193 = vadd.f32 0.0, %v4192
        %v4194 = vpop.f32.mrb[0].mxu0
        %4195 = vmatprep.mubr.bf16.mxu0 %v3509
        %4196 = vmatmul.mubr.bf16.gmra.mrb[0].mxu0 %v3508
        %v4197 = vpop.f32.mrb[0].mxu0
        %v4198 = vadd.f32 0.0, %v4197
        %v4199 = vpop.f32.mrb[0].mxu0
        %v4200 = vpop.f32.mrb[0].mxu0
        %v4201 = vadd.f32 0.0, %v4200
        %v4202 = vpop.f32.mrb[0].mxu0
        %4203 = vmatprep.mubr.bf16.mxu0 %v3518
        %4204 = vmatmul.mubr.bf16.gmra.mrb[0].mxu0 %v3517
        %v4205 = vpop.f32.mrb[0].mxu0
        %v4206 = vadd.f32 0.0, %v4205
        %v4207 = vpop.f32.mrb[0].mxu0
        %v4208 = vpop.f32.mrb[0].mxu0
        %v4209 = vpop.f32.mrb[0].mxu0
        %4210 = vdwg.mxu0
        %4211 = vmatprep.subr.bf16.mxu0 0
        %4212 = vmatpush1.bf16.msra.mxu0 %v3947
        %4213 = vmatprep.subr.bf16.mxu0 0
        %4214 = vmatpush1.bf16.msra.mxu0 %v3948
        %4215 = vmatprep.subr.bf16.mxu0 0
        %4216 = vmatpush1.bf16.msra.mxu0 %v3949
        %4217 = vmatprep.subr.bf16.mxu0 0
        %4218 = vmatpush1.bf16.msra.mxu0 %v3950
        %4219 = vmatprep.subr.bf16.mxu0 0
        %4220 = vmatpush1.bf16.msra.mxu0 %v3951
        %4221 = vmatprep.subr.bf16.mxu0 0
        %4222 = vmatpush1.bf16.msra.mxu0 %v3952
        %4223 = vmatprep.subr.bf16.mxu0 0
        %4224 = vmatpush1.bf16.msra.mxu0 %v3953
        %4225 = vmatprep.subr.bf16.mxu0 0
        %4226 = vmatpush1.bf16.msra.mxu0 %v3954
        %4227 = vmatprep.subr.bf16.mxu0 0
        %4228 = vmatpush1.bf16.msra.mxu0 %v3955
        %4229 = vmatprep.subr.bf16.mxu0 0
        %4230 = vmatpush1.bf16.msra.mxu0 %v3956
        %4231 = vmatprep.subr.bf16.mxu0 0
        %4232 = vmatpush1.bf16.msra.mxu0 %v3957
        %4233 = vmatprep.subr.bf16.mxu0 0
        %4234 = vmatpush1.bf16.msra.mxu0 %v3958
        %4235 = vmatprep.subr.bf16.mxu0 0
        %4236 = vmatpush1.bf16.msra.mxu0 %v3959
        %4237 = vmatprep.subr.bf16.mxu0 0
        %4238 = vmatpush1.bf16.msra.mxu0 %v3960
        %4239 = vmatprep.subr.bf16.mxu0 0
        %4240 = vmatpush1.bf16.msra.mxu0 %v3961
        %4241 = vmatprep.subr.bf16.mxu0 0
        %4242 = vmatpush1.bf16.msra.mxu0 %v3962
        %4243 = vmatprep.mubr.bf16.mxu0 %v3412
        %4244 = vmatmul.mubr.bf16.gmra.mrb[0].mxu0 %v3411
        %v4245 = vpop.f32.mrb[0].mxu0
        %v4246 = vadd.f32 %v4110, %v4245
        %v4247 = vpop.f32.mrb[0].mxu0
        %v4248 = vpop.f32.mrb[0].mxu0
        %v4249 = vadd.f32 %v4113, %v4248
        %v4250 = vpop.f32.mrb[0].mxu0
        %4251 = vmatprep.mubr.bf16.mxu0 %v3421
        %4252 = vmatmul.mubr.bf16.gmra.mrb[0].mxu0 %v3420
        %v4253 = vpop.f32.mrb[0].mxu0
        %v4254 = vadd.f32 %v4118, %v4253
        %v4255 = vpop.f32.mrb[0].mxu0
        %v4256 = vpop.f32.mrb[0].mxu0
        %v4257 = vadd.f32 %v4121, %v4256
        %v4258 = vpop.f32.mrb[0].mxu0
        %4259 = vmatprep.mubr.bf16.mxu0 %v3430
        %4260 = vmatmul.mubr.bf16.gmra.mrb[0].mxu0 %v3429
        %v4261 = vpop.f32.mrb[0].mxu0
        %v4262 = vadd.f32 %v4126, %v4261
        %v4263 = vpop.f32.mrb[0].mxu0
        %v4264 = vpop.f32.mrb[0].mxu0
        %v4265 = vadd.f32 %v4129, %v4264
        %v4266 = vpop.f32.mrb[0].mxu0
        %4267 = vmatprep.mubr.bf16.mxu0 %v3439
        %4268 = vmatmul.mubr.bf16.gmra.mrb[0].mxu0 %v3438
        %v4269 = vpop.f32.mrb[0].mxu0
        %v4270 = vadd.f32 %v4134, %v4269
        %v4271 = vpop.f32.mrb[0].mxu0
        %v4272 = vpop.f32.mrb[0].mxu0
        %v4273 = vadd.f32 %v4137, %v4272
        %v4274 = vpop.f32.mrb[0].mxu0
        %4275 = vmatprep.mubr.bf16.mxu0 %v3448
        %4276 = vmatmul.mubr.bf16.gmra.mrb[0].mxu0 %v3447
        %v4277 = vpop.f32.mrb[0].mxu0
        %v4278 = vadd.f32 %v4142, %v4277
        %v4279 = vpop.f32.mrb[0].mxu0
        %v4280 = vpop.f32.mrb[0].mxu0
        %v4281 = vadd.f32 %v4145, %v4280
        %v4282 = vpop.f32.mrb[0].mxu0
        %4283 = vmatprep.mubr.bf16.mxu0 %v3457
        %4284 = vmatmul.mubr.bf16.gmra.mrb[0].mxu0 %v3456
        %v4285 = vpop.f32.mrb[0].mxu0
        %v4286 = vadd.f32 %v4150, %v4285
        %v4287 = vpop.f32.mrb[0].mxu0
        %v4288 = vpop.f32.mrb[0].mxu0
        %v4289 = vadd.f32 %v4153, %v4288
        %v4290 = vpop.f32.mrb[0].mxu0
        %4291 = vmatprep.mubr.bf16.mxu0 %v3466
        %4292 = vmatmul.mubr.bf16.gmra.mrb[0].mxu0 %v3465
        %v4293 = vpop.f32.mrb[0].mxu0
        %v4294 = vadd.f32 %v4158, %v4293
        %v4295 = vpop.f32.mrb[0].mxu0
        %v4296 = vpop.f32.mrb[0].mxu0
        %v4297 = vadd.f32 %v4161, %v4296
        %v4298 = vpop.f32.mrb[0].mxu0
        %4299 = vmatprep.mubr.bf16.mxu0 %v3475
        %4300 = vmatmul.mubr.bf16.gmra.mrb[0].mxu0 %v3474
        %v4301 = vpop.f32.mrb[0].mxu0
        %v4302 = vadd.f32 %v4166, %v4301
        %v4303 = vpop.f32.mrb[0].mxu0
        %v4304 = vpop.f32.mrb[0].mxu0
        %v4305 = vadd.f32 %v4169, %v4304
        %v4306 = vpop.f32.mrb[0].mxu0
        %4307 = vmatprep.mubr.bf16.mxu0 %v3484
        %4308 = vmatmul.mubr.bf16.gmra.mrb[0].mxu0 %v3483
        %v4309 = vpop.f32.mrb[0].mxu0
        %v4310 = vadd.f32 %v4174, %v4309
        %v4311 = vpop.f32.mrb[0].mxu0
        %v4312 = vpop.f32.mrb[0].mxu0
        %v4313 = vadd.f32 %v4177, %v4312
        %v4314 = vpop.f32.mrb[0].mxu0
        %4315 = vmatprep.mubr.bf16.mxu0 %v3493
        %4316 = vmatmul.mubr.bf16.gmra.mrb[0].mxu0 %v3492
        %v4317 = vpop.f32.mrb[0].mxu0
        %v4318 = vadd.f32 %v4182, %v4317
        %v4319 = vpop.f32.mrb[0].mxu0
        %v4320 = vpop.f32.mrb[0].mxu0
        %v4321 = vadd.f32 %v4185, %v4320
        %v4322 = vpop.f32.mrb[0].mxu0
        %4323 = vmatprep.mubr.bf16.mxu0 %v3502
        %4324 = vmatmul.mubr.bf16.gmra.mrb[0].mxu0 %v3501
        %v4325 = vpop.f32.mrb[0].mxu0
        %v4326 = vadd.f32 %v4190, %v4325
        %v4327 = vpop.f32.mrb[0].mxu0
        %v4328 = vpop.f32.mrb[0].mxu0
        %v4329 = vadd.f32 %v4193, %v4328
        %v4330 = vpop.f32.mrb[0].mxu0
        %4331 = vmatprep.mubr.bf16.mxu0 %v3511
        %4332 = vmatmul.mubr.bf16.gmra.mrb[0].mxu0 %v3510
        %v4333 = vpop.f32.mrb[0].mxu0
        %v4334 = vadd.f32 %v4198, %v4333
        %v4335 = vpop.f32.mrb[0].mxu0
        %v4336 = vpop.f32.mrb[0].mxu0
        %v4337 = vadd.f32 %v4201, %v4336
        %v4338 = vpop.f32.mrb[0].mxu0
        %4339 = vmatprep.mubr.bf16.mxu0 %v3520
        %4340 = vmatmul.mubr.bf16.gmra.mrb[0].mxu0 %v3519
        %v4341 = vpop.f32.mrb[0].mxu0
        %v4342 = vadd.f32 %v4206, %v4341
        %v4343 = vpop.f32.mrb[0].mxu0
        %v4344 = vpop.f32.mrb[0].mxu0
        %v4345 = vpop.f32.mrb[0].mxu0
        %4346 = vdwg.mxu0
        %4347 = vmatprep.subr.bf16.mxu0 0
        %4348 = vmatpush1.bf16.msra.mxu0 %v3963
        %4349 = vmatprep.subr.bf16.mxu0 0
        %4350 = vmatpush1.bf16.msra.mxu0 %v3964
        %4351 = vmatprep.subr.bf16.mxu0 0
        %4352 = vmatpush1.bf16.msra.mxu0 %v3965
        %4353 = vmatprep.subr.bf16.mxu0 0
        %4354 = vmatpush1.bf16.msra.mxu0 %v3966
        %4355 = vmatprep.subr.bf16.mxu0 0
        %4356 = vmatpush1.bf16.msra.mxu0 %v3967
        %4357 = vmatprep.subr.bf16.mxu0 0
        %4358 = vmatpush1.bf16.msra.mxu0 %v3968
        %4359 = vmatprep.subr.bf16.mxu0 0
        %4360 = vmatpush1.bf16.msra.mxu0 %v3969
        %4361 = vmatprep.subr.bf16.mxu0 0
        %4362 = vmatpush1.bf16.msra.mxu0 %v3970
        %4363 = vmatprep.subr.bf16.mxu0 0
        %4364 = vmatpush1.bf16.msra.mxu0 %v3971
        %4365 = vmatprep.subr.bf16.mxu0 0
        %4366 = vmatpush1.bf16.msra.mxu0 %v3972
        %4367 = vmatprep.subr.bf16.mxu0 0
        %4368 = vmatpush1.bf16.msra.mxu0 %v3973
        %4369 = vmatprep.subr.bf16.mxu0 0
        %4370 = vmatpush1.bf16.msra.mxu0 %v3974
        %4371 = vmatprep.subr.bf16.mxu0 0
        %4372 = vmatpush1.bf16.msra.mxu0 %v3975
        %4373 = vmatprep.subr.bf16.mxu0 0
        %4374 = vmatpush1.bf16.msra.mxu0 %v3976
        %4375 = vmatprep.subr.bf16.mxu0 0
        %4376 = vmatpush1.bf16.msra.mxu0 %v3977
        %4377 = vmatprep.subr.bf16.mxu0 0
        %4378 = vmatpush1.bf16.msra.mxu0 %v3978
        %4379 = vmatprep.mubr.bf16.mxu0 %v3414
        %4380 = vmatmul.mubr.bf16.gmra.mrb[0].mxu0 %v3413
        %v4381 = vpop.f32.mrb[0].mxu0
        %v4382 = vadd.f32 %v4246, %v4381
        %v4383 = vpop.f32.mrb[0].mxu0
        %v4384 = vpop.f32.mrb[0].mxu0
        %v4385 = vadd.f32 %v4249, %v4384
        %v4386 = vpop.f32.mrb[0].mxu0
        %4387 = vmatprep.mubr.bf16.mxu0 %v3423
        %4388 = vmatmul.mubr.bf16.gmra.mrb[0].mxu0 %v3422
        %v4389 = vpop.f32.mrb[0].mxu0
        %v4390 = vadd.f32 %v4254, %v4389
        %v4391 = vpop.f32.mrb[0].mxu0
        %v4392 = vpop.f32.mrb[0].mxu0
        %v4393 = vadd.f32 %v4257, %v4392
        %v4394 = vpop.f32.mrb[0].mxu0
        %4395 = vmatprep.mubr.bf16.mxu0 %v3432
        %4396 = vmatmul.mubr.bf16.gmra.mrb[0].mxu0 %v3431
        %v4397 = vpop.f32.mrb[0].mxu0
        %v4398 = vadd.f32 %v4262, %v4397
        %v4399 = vpop.f32.mrb[0].mxu0
        %v4400 = vpop.f32.mrb[0].mxu0
        %v4401 = vadd.f32 %v4265, %v4400
        %v4402 = vpop.f32.mrb[0].mxu0
        %4403 = vmatprep.mubr.bf16.mxu0 %v3441
        %4404 = vmatmul.mubr.bf16.gmra.mrb[0].mxu0 %v3440
        %v4405 = vpop.f32.mrb[0].mxu0
        %v4406 = vadd.f32 %v4270, %v4405
        %v4407 = vpop.f32.mrb[0].mxu0
        %v4408 = vpop.f32.mrb[0].mxu0
        %v4409 = vadd.f32 %v4273, %v4408
        %v4410 = vpop.f32.mrb[0].mxu0
        %4411 = vmatprep.mubr.bf16.mxu0 %v3450
        %4412 = vmatmul.mubr.bf16.gmra.mrb[0].mxu0 %v3449
        %v4413 = vpop.f32.mrb[0].mxu0
        %v4414 = vadd.f32 %v4278, %v4413
        %v4415 = vpop.f32.mrb[0].mxu0
        %v4416 = vpop.f32.mrb[0].mxu0
        %v4417 = vadd.f32 %v4281, %v4416
        %v4418 = vpop.f32.mrb[0].mxu0
        %4419 = vmatprep.mubr.bf16.mxu0 %v3459
        %4420 = vmatmul.mubr.bf16.gmra.mrb[0].mxu0 %v3458
        %v4421 = vpop.f32.mrb[0].mxu0
        %v4422 = vadd.f32 %v4286, %v4421
        %v4423 = vpop.f32.mrb[0].mxu0
        %v4424 = vpop.f32.mrb[0].mxu0
        %v4425 = vadd.f32 %v4289, %v4424
        %v4426 = vpop.f32.mrb[0].mxu0
        %4427 = vmatprep.mubr.bf16.mxu0 %v3468
        %4428 = vmatmul.mubr.bf16.gmra.mrb[0].mxu0 %v3467
        %v4429 = vpop.f32.mrb[0].mxu0
        %v4430 = vadd.f32 %v4294, %v4429
        %v4431 = vpop.f32.mrb[0].mxu0
        %v4432 = vpop.f32.mrb[0].mxu0
        %v4433 = vadd.f32 %v4297, %v4432
        %v4434 = vpop.f32.mrb[0].mxu0
        %4435 = vmatprep.mubr.bf16.mxu0 %v3477
        %4436 = vmatmul.mubr.bf16.gmra.mrb[0].mxu0 %v3476
        %v4437 = vpop.f32.mrb[0].mxu0
        %v4438 = vadd.f32 %v4302, %v4437
        %v4439 = vpop.f32.mrb[0].mxu0
        %v4440 = vpop.f32.mrb[0].mxu0
        %v4441 = vadd.f32 %v4305, %v4440
        %v4442 = vpop.f32.mrb[0].mxu0
        %4443 = vmatprep.mubr.bf16.mxu0 %v3486
        %4444 = vmatmul.mubr.bf16.gmra.mrb[0].mxu0 %v3485
        %v4445 = vpop.f32.mrb[0].mxu0
        %v4446 = vadd.f32 %v4310, %v4445
        %v4447 = vpop.f32.mrb[0].mxu0
        %v4448 = vpop.f32.mrb[0].mxu0
        %v4449 = vadd.f32 %v4313, %v4448
        %v4450 = vpop.f32.mrb[0].mxu0
        %4451 = vmatprep.mubr.bf16.mxu0 %v3495
        %4452 = vmatmul.mubr.bf16.gmra.mrb[0].mxu0 %v3494
        %v4453 = vpop.f32.mrb[0].mxu0
        %v4454 = vadd.f32 %v4318, %v4453
        %v4455 = vpop.f32.mrb[0].mxu0
        %v4456 = vpop.f32.mrb[0].mxu0
        %v4457 = vadd.f32 %v4321, %v4456
        %v4458 = vpop.f32.mrb[0].mxu0
        %4459 = vmatprep.mubr.bf16.mxu0 %v3504
        %4460 = vmatmul.mubr.bf16.gmra.mrb[0].mxu0 %v3503
        %v4461 = vpop.f32.mrb[0].mxu0
        %v4462 = vadd.f32 %v4326, %v4461
        %v4463 = vpop.f32.mrb[0].mxu0
        %v4464 = vpop.f32.mrb[0].mxu0
        %v4465 = vadd.f32 %v4329, %v4464
        %v4466 = vpop.f32.mrb[0].mxu0
        %4467 = vmatprep.mubr.bf16.mxu0 %v3513
        %4468 = vmatmul.mubr.bf16.gmra.mrb[0].mxu0 %v3512
        %v4469 = vpop.f32.mrb[0].mxu0
        %v4470 = vadd.f32 %v4334, %v4469
        %v4471 = vpop.f32.mrb[0].mxu0
        %v4472 = vpop.f32.mrb[0].mxu0
        %v4473 = vadd.f32 %v4337, %v4472
        %v4474 = vpop.f32.mrb[0].mxu0
        %4475 = vmatprep.mubr.bf16.mxu0 %v3522
        %4476 = vmatmul.mubr.bf16.gmra.mrb[0].mxu0 %v3521
        %v4477 = vpop.f32.mrb[0].mxu0
        %v4478 = vadd.f32 %v4342, %v4477
        %v4479 = vpop.f32.mrb[0].mxu0
        %v4480 = vpop.f32.mrb[0].mxu0
        %v4481 = vpop.f32.mrb[0].mxu0
        %4482 = vdwg.mxu0
        %4483 = vmatprep.subr.bf16.mxu0 0
        %4484 = vmatpush1.bf16.msra.mxu0 %v3979
        %4485 = vmatprep.subr.bf16.mxu0 0
        %4486 = vmatpush1.bf16.msra.mxu0 %v3980
        %4487 = vmatprep.subr.bf16.mxu0 0
        %4488 = vmatpush1.bf16.msra.mxu0 %v3981
        %4489 = vmatprep.subr.bf16.mxu0 0
        %4490 = vmatpush1.bf16.msra.mxu0 %v3982
        %4491 = vmatprep.subr.bf16.mxu0 0
        %4492 = vmatpush1.bf16.msra.mxu0 %v3983
        %4493 = vmatprep.subr.bf16.mxu0 0
        %4494 = vmatpush1.bf16.msra.mxu0 %v3984
        %4495 = vmatprep.subr.bf16.mxu0 0
        %4496 = vmatpush1.bf16.msra.mxu0 %v3985
        %4497 = vmatprep.subr.bf16.mxu0 0
        %4498 = vmatpush1.bf16.msra.mxu0 %v3986
        %4499 = vmatprep.subr.bf16.mxu0 0
        %4500 = vmatpush1.bf16.msra.mxu0 %v3987
        %4501 = vmatprep.subr.bf16.mxu0 0
        %4502 = vmatpush1.bf16.msra.mxu0 %v3988
        %4503 = vmatprep.subr.bf16.mxu0 0
        %4504 = vmatpush1.bf16.msra.mxu0 %v3989
        %4505 = vmatprep.subr.bf16.mxu0 0
        %4506 = vmatpush1.bf16.msra.mxu0 %v3990
        %4507 = vmatprep.subr.bf16.mxu0 0
        %4508 = vmatpush1.bf16.msra.mxu0 %v3991
        %4509 = vmatprep.subr.bf16.mxu0 0
        %4510 = vmatpush1.bf16.msra.mxu0 %v3992
        %4511 = vmatprep.subr.bf16.mxu0 0
        %4512 = vmatpush1.bf16.msra.mxu0 %v3993
        %4513 = vmatprep.subr.bf16.mxu0 0
        %4514 = vmatpush1.bf16.msra.mxu0 %v3994
        %4515 = vmatprep.mubr.bf16.mxu0 %v3416
        %4516 = vmatmul.mubr.bf16.gmra.mrb[0].mxu0 %v3415
        %v4517 = vpop.f32.mrb[0].mxu0
        %v4518 = vadd.f32 %v4382, %v4517
        %v4519 = vpop.f32.mrb[0].mxu0
        %v4520 = vpop.f32.mrb[0].mxu0
        %v4521 = vadd.f32 %v4385, %v4520
        %v4522 = vpop.f32.mrb[0].mxu0
        %4523 = vmatprep.mubr.bf16.mxu0 %v3425
        %4524 = vmatmul.mubr.bf16.gmra.mrb[0].mxu0 %v3424
        %v4525 = vpop.f32.mrb[0].mxu0
        %v4526 = vadd.f32 %v4390, %v4525
        %v4527 = vpop.f32.mrb[0].mxu0
        %v4528 = vpop.f32.mrb[0].mxu0
        %v4529 = vadd.f32 %v4393, %v4528
        %v4530 = vpop.f32.mrb[0].mxu0
        %4531 = vmatprep.mubr.bf16.mxu0 %v3434
        %4532 = vmatmul.mubr.bf16.gmra.mrb[0].mxu0 %v3433
        %v4533 = vpop.f32.mrb[0].mxu0
        %v4534 = vadd.f32 %v4398, %v4533
        %v4535 = vpop.f32.mrb[0].mxu0
        %v4536 = vpop.f32.mrb[0].mxu0
        %v4537 = vadd.f32 %v4401, %v4536
        %v4538 = vpop.f32.mrb[0].mxu0
        %4539 = vmatprep.mubr.bf16.mxu0 %v3443
        %4540 = vmatmul.mubr.bf16.gmra.mrb[0].mxu0 %v3442
        %v4541 = vpop.f32.mrb[0].mxu0
        %v4542 = vadd.f32 %v4406, %v4541
        %v4543 = vpop.f32.mrb[0].mxu0
        %v4544 = vpop.f32.mrb[0].mxu0
        %v4545 = vadd.f32 %v4409, %v4544
        %v4546 = vpop.f32.mrb[0].mxu0
        %4547 = vmatprep.mubr.bf16.mxu0 %v3452
        %4548 = vmatmul.mubr.bf16.gmra.mrb[0].mxu0 %v3451
        %v4549 = vpop.f32.mrb[0].mxu0
        %v4550 = vadd.f32 %v4414, %v4549
        %v4551 = vpop.f32.mrb[0].mxu0
        %v4552 = vpop.f32.mrb[0].mxu0
        %v4553 = vadd.f32 %v4417, %v4552
        %v4554 = vpop.f32.mrb[0].mxu0
        %4555 = vmatprep.mubr.bf16.mxu0 %v3461
        %4556 = vmatmul.mubr.bf16.gmra.mrb[0].mxu0 %v3460
        %v4557 = vpop.f32.mrb[0].mxu0
        %v4558 = vadd.f32 %v4422, %v4557
        %v4559 = vpop.f32.mrb[0].mxu0
        %v4560 = vpop.f32.mrb[0].mxu0
        %v4561 = vadd.f32 %v4425, %v4560
        %v4562 = vpop.f32.mrb[0].mxu0
        %4563 = vmatprep.mubr.bf16.mxu0 %v3470
        %4564 = vmatmul.mubr.bf16.gmra.mrb[0].mxu0 %v3469
        %v4565 = vpop.f32.mrb[0].mxu0
        %v4566 = vadd.f32 %v4430, %v4565
        %v4567 = vpop.f32.mrb[0].mxu0
        %v4568 = vpop.f32.mrb[0].mxu0
        %v4569 = vadd.f32 %v4433, %v4568
        %v4570 = vpop.f32.mrb[0].mxu0
        %4571 = vmatprep.mubr.bf16.mxu0 %v3479
        %4572 = vmatmul.mubr.bf16.gmra.mrb[0].mxu0 %v3478
        %v4573 = vpop.f32.mrb[0].mxu0
        %v4574 = vadd.f32 %v4438, %v4573
        %v4575 = vpop.f32.mrb[0].mxu0
        %v4576 = vpop.f32.mrb[0].mxu0
        %v4577 = vadd.f32 %v4441, %v4576
        %v4578 = vpop.f32.mrb[0].mxu0
        %4579 = vmatprep.mubr.bf16.mxu0 %v3488
        %4580 = vmatmul.mubr.bf16.gmra.mrb[0].mxu0 %v3487
        %v4581 = vpop.f32.mrb[0].mxu0
        %v4582 = vadd.f32 %v4446, %v4581
        %v4583 = vpop.f32.mrb[0].mxu0
        %v4584 = vpop.f32.mrb[0].mxu0
        %v4585 = vadd.f32 %v4449, %v4584
        %v4586 = vpop.f32.mrb[0].mxu0
        %4587 = vmatprep.mubr.bf16.mxu0 %v3497
        %4588 = vmatmul.mubr.bf16.gmra.mrb[0].mxu0 %v3496
        %v4589 = vpop.f32.mrb[0].mxu0
        %v4590 = vadd.f32 %v4454, %v4589
        %v4591 = vpop.f32.mrb[0].mxu0
        %v4592 = vpop.f32.mrb[0].mxu0
        %v4593 = vadd.f32 %v4457, %v4592
        %v4594 = vpop.f32.mrb[0].mxu0
        %4595 = vmatprep.mubr.bf16.mxu0 %v3506
        %4596 = vmatmul.mubr.bf16.gmra.mrb[0].mxu0 %v3505
        %v4597 = vpop.f32.mrb[0].mxu0
        %v4598 = vadd.f32 %v4462, %v4597
        %v4599 = vpop.f32.mrb[0].mxu0
        %v4600 = vpop.f32.mrb[0].mxu0
        %v4601 = vadd.f32 %v4465, %v4600
        %v4602 = vpop.f32.mrb[0].mxu0
        %4603 = vmatprep.mubr.bf16.mxu0 %v3515
        %4604 = vmatmul.mubr.bf16.gmra.mrb[0].mxu0 %v3514
        %v4605 = vpop.f32.mrb[0].mxu0
        %v4606 = vadd.f32 %v4470, %v4605
        %v4607 = vpop.f32.mrb[0].mxu0
        %v4608 = vpop.f32.mrb[0].mxu0
        %v4609 = vadd.f32 %v4473, %v4608
        %v4610 = vpop.f32.mrb[0].mxu0
        %4611 = vmatprep.mubr.bf16.mxu0 %v3524
        %4612 = vmatmul.mubr.bf16.gmra.mrb[0].mxu0 %v3523
        %v4613 = vpop.f32.mrb[0].mxu0
        %v4614 = vadd.f32 %v4478, %v4613
        %v4615 = vpop.f32.mrb[0].mxu0
        %v4616 = vpop.f32.mrb[0].mxu0
        %v4617 = vpop.f32.mrb[0].mxu0
        %4618 = vdwg.mxu0
        %4619 = vmatprep.subr.bf16.mxu0 0
        %4620 = vmatpush1.bf16.msra.mxu0 %v3995
        %4621 = vmatprep.subr.bf16.mxu0 0
        %4622 = vmatpush1.bf16.msra.mxu0 %v3996
        %4623 = vmatprep.subr.bf16.mxu0 0
        %4624 = vmatpush1.bf16.msra.mxu0 %v3997
        %4625 = vmatprep.subr.bf16.mxu0 0
        %4626 = vmatpush1.bf16.msra.mxu0 %v3998
        %4627 = vmatprep.subr.bf16.mxu0 0
        %4628 = vmatpush1.bf16.msra.mxu0 %v3999
        %4629 = vmatprep.subr.bf16.mxu0 0
        %4630 = vmatpush1.bf16.msra.mxu0 %v4000
        %4631 = vmatprep.subr.bf16.mxu0 0
        %4632 = vmatpush1.bf16.msra.mxu0 %v4001
        %4633 = vmatprep.subr.bf16.mxu0 0
        %4634 = vmatpush1.bf16.msra.mxu0 %v4002
        %4635 = vmatprep.subr.bf16.mxu0 0
        %4636 = vmatpush1.bf16.msra.mxu0 0
        %4637 = vmatprep.subr.bf16.mxu0 0
        %4638 = vmatpush1.bf16.msra.mxu0 0
        %4639 = vmatprep.subr.bf16.mxu0 0
        %4640 = vmatpush1.bf16.msra.mxu0 0
        %4641 = vmatprep.subr.bf16.mxu0 0
        %4642 = vmatpush1.bf16.msra.mxu0 0
        %4643 = vmatprep.subr.bf16.mxu0 0
        %4644 = vmatpush1.bf16.msra.mxu0 0
        %4645 = vmatprep.subr.bf16.mxu0 0
        %4646 = vmatpush1.bf16.msra.mxu0 0
        %4647 = vmatprep.subr.bf16.mxu0 0
        %4648 = vmatpush1.bf16.msra.mxu0 0
        %4649 = vmatprep.subr.bf16.mxu0 0
        %4650 = vmatpush1.bf16.msra.mxu0 0
        %4651 = vmatprep.mubr.bf16.mxu0 0
        %4652 = vmatmul.mubr.bf16.gmra.mrb[0].mxu0 %v3417
        %v4653 = vpop.f32.mrb[0].mxu0
        %v4654 = vadd.f32 %v4518, %v4653
        %v4655 = vpop.f32.mrb[0].mxu0
        %v4656 = vpop.f32.mrb[0].mxu0
        %v4657 = vadd.f32 %v4521, %v4656
        %v4658 = vpop.f32.mrb[0].mxu0
        %4659 = vmatprep.mubr.bf16.mxu0 0
        %4660 = vmatmul.mubr.bf16.gmra.mrb[0].mxu0 %v3426
        %v4661 = vpop.f32.mrb[0].mxu0
        %v4662 = vadd.f32 %v4526, %v4661
        %v4663 = vpop.f32.mrb[0].mxu0
        %v4664 = vpop.f32.mrb[0].mxu0
        %v4665 = vadd.f32 %v4529, %v4664
        %v4666 = vpop.f32.mrb[0].mxu0
        %4667 = vmatprep.mubr.bf16.mxu0 0
        %4668 = vmatmul.mubr.bf16.gmra.mrb[0].mxu0 %v3435
        %v4669 = vpop.f32.mrb[0].mxu0
        %v4670 = vadd.f32 %v4534, %v4669
        %v4671 = vpop.f32.mrb[0].mxu0
        %v4672 = vpop.f32.mrb[0].mxu0
        %v4673 = vadd.f32 %v4537, %v4672
        %v4674 = vpop.f32.mrb[0].mxu0
        %4675 = vmatprep.mubr.bf16.mxu0 0
        %4676 = vmatmul.mubr.bf16.gmra.mrb[0].mxu0 %v3444
        %v4677 = vpop.f32.mrb[0].mxu0
        %v4678 = vadd.f32 %v4542, %v4677
        %v4679 = vpop.f32.mrb[0].mxu0
        %v4680 = vpop.f32.mrb[0].mxu0
        %v4681 = vadd.f32 %v4545, %v4680
        %v4682 = vpop.f32.mrb[0].mxu0
        %4683 = vmatprep.mubr.bf16.mxu0 0
        %4684 = vmatmul.mubr.bf16.gmra.mrb[0].mxu0 %v3453
        %v4685 = vpop.f32.mrb[0].mxu0
        %v4686 = vadd.f32 %v4550, %v4685
        %v4687 = vpop.f32.mrb[0].mxu0
        %v4688 = vpop.f32.mrb[0].mxu0
        %v4689 = vadd.f32 %v4553, %v4688
        %v4690 = vpop.f32.mrb[0].mxu0
        %4691 = vmatprep.mubr.bf16.mxu0 0
        %4692 = vmatmul.mubr.bf16.gmra.mrb[0].mxu0 %v3462
        %v4693 = vpop.f32.mrb[0].mxu0
        %v4694 = vadd.f32 %v4558, %v4693
        %v4695 = vpop.f32.mrb[0].mxu0
        %v4696 = vpop.f32.mrb[0].mxu0
        %v4697 = vadd.f32 %v4561, %v4696
        %v4698 = vpop.f32.mrb[0].mxu0
        %4699 = vmatprep.mubr.bf16.mxu0 0
        %4700 = vmatmul.mubr.bf16.gmra.mrb[0].mxu0 %v3471
        %v4701 = vpop.f32.mrb[0].mxu0
        %v4702 = vadd.f32 %v4566, %v4701
        %v4703 = vpop.f32.mrb[0].mxu0
        %v4704 = vpop.f32.mrb[0].mxu0
        %v4705 = vadd.f32 %v4569, %v4704
        %v4706 = vpop.f32.mrb[0].mxu0
        %4707 = vmatprep.mubr.bf16.mxu0 0
        %4708 = vmatmul.mubr.bf16.gmra.mrb[0].mxu0 %v3480
        %v4709 = vpop.f32.mrb[0].mxu0
        %v4710 = vadd.f32 %v4574, %v4709
        %v4711 = vpop.f32.mrb[0].mxu0
        %v4712 = vpop.f32.mrb[0].mxu0
        %v4713 = vadd.f32 %v4577, %v4712
        %v4714 = vpop.f32.mrb[0].mxu0
        %4715 = vmatprep.mubr.bf16.mxu0 0
        %4716 = vmatmul.mubr.bf16.gmra.mrb[0].mxu0 %v3489
        %v4717 = vpop.f32.mrb[0].mxu0
        %v4718 = vadd.f32 %v4582, %v4717
        %v4719 = vpop.f32.mrb[0].mxu0
        %v4720 = vpop.f32.mrb[0].mxu0
        %v4721 = vadd.f32 %v4585, %v4720
        %v4722 = vpop.f32.mrb[0].mxu0
        %4723 = vmatprep.mubr.bf16.mxu0 0
        %4724 = vmatmul.mubr.bf16.gmra.mrb[0].mxu0 %v3498
        %v4725 = vpop.f32.mrb[0].mxu0
        %v4726 = vadd.f32 %v4590, %v4725
        %v4727 = vpop.f32.mrb[0].mxu0
        %v4728 = vpop.f32.mrb[0].mxu0
        %v4729 = vadd.f32 %v4593, %v4728
        %v4730 = vpop.f32.mrb[0].mxu0
        %4731 = vmatprep.mubr.bf16.mxu0 0
        %4732 = vmatmul.mubr.bf16.gmra.mrb[0].mxu0 %v3507
        %v4733 = vpop.f32.mrb[0].mxu0
        %v4734 = vadd.f32 %v4598, %v4733
        %v4735 = vpop.f32.mrb[0].mxu0
        %v4736 = vpop.f32.mrb[0].mxu0
        %v4737 = vadd.f32 %v4601, %v4736
        %v4738 = vpop.f32.mrb[0].mxu0
        %4739 = vmatprep.mubr.bf16.mxu0 0
        %4740 = vmatmul.mubr.bf16.gmra.mrb[0].mxu0 %v3516
        %v4741 = vpop.f32.mrb[0].mxu0
        %v4742 = vadd.f32 %v4606, %v4741
        %v4743 = vpop.f32.mrb[0].mxu0
        %v4744 = vpop.f32.mrb[0].mxu0
        %v4745 = vadd.f32 %v4609, %v4744
        %v4746 = vpop.f32.mrb[0].mxu0
        %4747 = vmatprep.mubr.bf16.mxu0 0
        %4748 = vmatmul.mubr.bf16.gmra.mrb[0].mxu0 %v3525
        %v4749 = vpop.f32.mrb[0].mxu0
        %v4750 = vadd.f32 %v4614, %v4749
        %v4751 = vpop.f32.mrb[0].mxu0
        %v4752 = vpop.f32.mrb[0].mxu0
        %v4753 = vpop.f32.mrb[0].mxu0
        %4754 = vdwg.mxu0
        %v4755 = vld [vmem:[%s4] sm:$0xff]
        %v4756 = vld [vmem:[%s4 + $0x8] sm:$0xff]
        %v4757 = vld [vmem:[%s4 + $0x10] sm:$0xff]
        %v4758 = vld [vmem:[%s4 + $0x18] sm:$0xff]
        %v4759 = vld [vmem:[%s4 + $0x20] sm:$0xff]
        %v4760 = vld [vmem:[%s4 + $0x28] sm:$0xff]
        %v4761 = vld [vmem:[%s4 + $0x30] sm:$0xff]
        %v4762 = vld [vmem:[%s4 + $0x38] sm:$0xff]
        %v4763 = vld [vmem:[%s4 + $0x40] sm:$0xff]
        %v4764 = vld [vmem:[%s4 + $0x48] sm:$0xff]
        %v4765 = vld [vmem:[%s4 + $0x50] sm:$0xff]
        %v4766 = vld [vmem:[%s4 + $0x58] sm:$0xff]
        %v4767 = vld [vmem:[%s4 + $0x60] sm:$0xff]
        %v4768 = vld [vmem:[%s4 + $0x68] sm:$0xff]
        %v4769 = vld [vmem:[%s4 + $0x70] sm:$0xff]
        %v4770 = vld [vmem:[%s4 + $0x78] sm:$0xff]
        %v4771 = vld [vmem:[%s4 + $0x80] sm:$0xff]
        %v4772 = vld [vmem:[%s4 + $0x88] sm:$0xff]
        %v4773 = vld [vmem:[%s4 + $0x90] sm:$0xff]
        %v4774 = vld [vmem:[%s4 + $0x98] sm:$0xff]
        %v4775 = vld [vmem:[%s4 + $0xa0] sm:$0xff]
        %v4776 = vld [vmem:[%s4 + $0xa8] sm:$0xff]
        %v4777 = vld [vmem:[%s4 + $0xb0] sm:$0xff]
        %v4778 = vld [vmem:[%s4 + $0xb8] sm:$0xff]
        %v4779 = vld [vmem:[%s4 + $0xc0] sm:$0xff]
        %4781 = vset.pattern.permute.xlu0 0
        %4782 = vperm.xlu0 %4781, %v4755
        %v4783 = vpop.permute.xlu0 %4782
        %4786 = vset.pattern.permute.xlu0 0
        %4787 = vperm.xlu0 %4786, %v4756
        %v4788 = vpop.permute.xlu0 %4787
        %4791 = vset.pattern.permute.xlu0 0
        %4792 = vperm.xlu0 %4791, %v4757
        %v4793 = vpop.permute.xlu0 %4792
        %4796 = vset.pattern.permute.xlu0 0
        %4797 = vperm.xlu0 %4796, %v4758
        %v4798 = vpop.permute.xlu0 %4797
        %4801 = vset.pattern.permute.xlu0 0
        %4802 = vperm.xlu0 %4801, %v4759
        %v4803 = vpop.permute.xlu0 %4802
        %4806 = vset.pattern.permute.xlu0 0
        %4807 = vperm.xlu0 %4806, %v4760
        %v4808 = vpop.permute.xlu0 %4807
        %4811 = vset.pattern.permute.xlu0 0
        %4812 = vperm.xlu0 %4811, %v4761
        %v4813 = vpop.permute.xlu0 %4812
        %4816 = vset.pattern.permute.xlu0 0
        %4817 = vperm.xlu0 %4816, %v4762
        %v4818 = vpop.permute.xlu0 %4817
        %4821 = vset.pattern.permute.xlu0 0
        %4822 = vperm.xlu0 %4821, %v4763
        %v4823 = vpop.permute.xlu0 %4822
        %4826 = vset.pattern.permute.xlu0 0
        %4827 = vperm.xlu0 %4826, %v4764
        %v4828 = vpop.permute.xlu0 %4827
        %4831 = vset.pattern.permute.xlu0 0
        %4832 = vperm.xlu0 %4831, %v4765
        %v4833 = vpop.permute.xlu0 %4832
        %4836 = vset.pattern.permute.xlu0 0
        %4837 = vperm.xlu0 %4836, %v4766
        %v4838 = vpop.permute.xlu0 %4837
        %4841 = vset.pattern.permute.xlu0 0
        %4842 = vperm.xlu0 %4841, %v4767
        %v4843 = vpop.permute.xlu0 %4842
        %4846 = vset.pattern.permute.xlu0 0
        %4847 = vperm.xlu0 %4846, %v4768
        %v4848 = vpop.permute.xlu0 %4847
        %4851 = vset.pattern.permute.xlu0 0
        %4852 = vperm.xlu0 %4851, %v4769
        %v4853 = vpop.permute.xlu0 %4852
        %4856 = vset.pattern.permute.xlu0 0
        %4857 = vperm.xlu0 %4856, %v4770
        %v4858 = vpop.permute.xlu0 %4857
        %4861 = vset.pattern.permute.xlu0 0
        %4862 = vperm.xlu0 %4861, %v4771
        %v4863 = vpop.permute.xlu0 %4862
        %4866 = vset.pattern.permute.xlu0 0
        %4867 = vperm.xlu0 %4866, %v4772
        %v4868 = vpop.permute.xlu0 %4867
        %4871 = vset.pattern.permute.xlu0 0
        %4872 = vperm.xlu0 %4871, %v4773
        %v4873 = vpop.permute.xlu0 %4872
        %4876 = vset.pattern.permute.xlu0 0
        %4877 = vperm.xlu0 %4876, %v4774
        %v4878 = vpop.permute.xlu0 %4877
        %4881 = vset.pattern.permute.xlu0 0
        %4882 = vperm.xlu0 %4881, %v4775
        %v4883 = vpop.permute.xlu0 %4882
        %4886 = vset.pattern.permute.xlu0 0
        %4887 = vperm.xlu0 %4886, %v4776
        %v4888 = vpop.permute.xlu0 %4887
        %4891 = vset.pattern.permute.xlu0 0
        %4892 = vperm.xlu0 %4891, %v4777
        %v4893 = vpop.permute.xlu0 %4892
        %4896 = vset.pattern.permute.xlu0 0
        %4897 = vperm.xlu0 %4896, %v4778
        %v4898 = vpop.permute.xlu0 %4897
        %4901 = vset.pattern.permute.xlu0 0
        %4902 = vperm.xlu0 %4901, %v4779
        %v4903 = vpop.permute.xlu0 %4902
        %v4905 = vmul.f32 %v4654, %v4783
        %v4906 = vmul.f32 %v4657, %v4788
        %v4907 = vmul.f32 %v4662, %v4793
        %v4908 = vmul.f32 %v4665, %v4798
        %v4909 = vmul.f32 %v4670, %v4803
        %v4910 = vmul.f32 %v4673, %v4808
        %v4911 = vmul.f32 %v4678, %v4813
        %v4912 = vmul.f32 %v4681, %v4818
        %v4913 = vmul.f32 %v4686, %v4823
        %v4914 = vmul.f32 %v4689, %v4828
        %v4915 = vmul.f32 %v4694, %v4833
        %v4916 = vmul.f32 %v4697, %v4838
        %v4917 = vmul.f32 %v4702, %v4843
        %v4918 = vmul.f32 %v4705, %v4848
        %v4919 = vmul.f32 %v4710, %v4853
        %v4920 = vmul.f32 %v4713, %v4858
        %v4921 = vmul.f32 %v4718, %v4863
        %v4922 = vmul.f32 %v4721, %v4868
        %v4923 = vmul.f32 %v4726, %v4873
        %v4924 = vmul.f32 %v4729, %v4878
        %v4925 = vmul.f32 %v4734, %v4883
        %v4926 = vmul.f32 %v4737, %v4888
        %v4927 = vmul.f32 %v4742, %v4893
        %v4928 = vmul.f32 %v4745, %v4898
        %v4929 = vmul.f32 %v4750, %v4903
        %v4930 = vadd.f32 %v4905, %v4906
        %v4931 = vadd.f32 %v4930, %v4907
        %v4932 = vadd.f32 %v4931, %v4908
        %v4933 = vadd.f32 %v4932, %v4909
        %v4934 = vadd.f32 %v4933, %v4910
        %v4935 = vadd.f32 %v4934, %v4911
        %v4936 = vadd.f32 %v4935, %v4912
        %v4937 = vadd.f32 %v4936, %v4913
        %v4938 = vadd.f32 %v4937, %v4914
        %v4939 = vadd.f32 %v4938, %v4915
        %v4940 = vadd.f32 %v4939, %v4916
        %v4941 = vadd.f32 %v4940, %v4917
        %v4942 = vadd.f32 %v4941, %v4918
        %v4943 = vadd.f32 %v4942, %v4919
        %v4944 = vadd.f32 %v4943, %v4920
        %v4945 = vadd.f32 %v4944, %v4921
        %v4946 = vadd.f32 %v4945, %v4922
        %v4947 = vadd.f32 %v4946, %v4923
        %v4948 = vadd.f32 %v4947, %v4924
        %v4949 = vadd.f32 %v4948, %v4925
        %v4950 = vadd.f32 %v4949, %v4926
        %v4951 = vadd.f32 %v4950, %v4927
        %v4952 = vadd.f32 %v4951, %v4928
        %v4953 = vadd.f32 %v4952, %v4929
        %v4954 = vrot.slane %v4953, 4
        %v4955 = vadd.f32 %v4953, %v4954
        %v4956 = vrot.slane %v4955, 2
        %v4957 = vadd.f32 %v4955, %v4956
        %v4958 = vrot.slane %v4957, 1
        %v4959 = vadd.f32 %v4957, %v4958
        %v4960 = vmul.f32 %v4905, %v4905
        %v4961 = vmul.f32 %v4906, %v4906
        %v4962 = vmul.f32 %v4907, %v4907
        %v4963 = vmul.f32 %v4908, %v4908
        %v4964 = vmul.f32 %v4909, %v4909
        %v4965 = vmul.f32 %v4910, %v4910
        %v4966 = vmul.f32 %v4911, %v4911
        %v4967 = vmul.f32 %v4912, %v4912
        %v4968 = vmul.f32 %v4913, %v4913
        %v4969 = vmul.f32 %v4914, %v4914
        %v4970 = vmul.f32 %v4915, %v4915
        %v4971 = vmul.f32 %v4916, %v4916
        %v4972 = vmul.f32 %v4917, %v4917
        %v4973 = vmul.f32 %v4918, %v4918
        %v4974 = vmul.f32 %v4919, %v4919
        %v4975 = vmul.f32 %v4920, %v4920
        %v4976 = vmul.f32 %v4921, %v4921
        %v4977 = vmul.f32 %v4922, %v4922
        %v4978 = vmul.f32 %v4923, %v4923
        %v4979 = vmul.f32 %v4924, %v4924
        %v4980 = vmul.f32 %v4925, %v4925
        %v4981 = vmul.f32 %v4926, %v4926
        %v4982 = vmul.f32 %v4927, %v4927
        %v4983 = vmul.f32 %v4928, %v4928
        %v4984 = vmul.f32 %v4929, %v4929
        %v4985 = vadd.f32 %v4960, %v4961
        %v4986 = vadd.f32 %v4985, %v4962
        %v4987 = vadd.f32 %v4986, %v4963
        %v4988 = vadd.f32 %v4987, %v4964
        %v4989 = vadd.f32 %v4988, %v4965
        %v4990 = vadd.f32 %v4989, %v4966
        %v4991 = vadd.f32 %v4990, %v4967
        %v4992 = vadd.f32 %v4991, %v4968
        %v4993 = vadd.f32 %v4992, %v4969
        %v4994 = vadd.f32 %v4993, %v4970
        %v4995 = vadd.f32 %v4994, %v4971
        %v4996 = vadd.f32 %v4995, %v4972
        %v4997 = vadd.f32 %v4996, %v4973
        %v4998 = vadd.f32 %v4997, %v4974
        %v4999 = vadd.f32 %v4998, %v4975
        %v5000 = vadd.f32 %v4999, %v4976
        %v5001 = vadd.f32 %v5000, %v4977
        %v5002 = vadd.f32 %v5001, %v4978
        %v5003 = vadd.f32 %v5002, %v4979
        %v5004 = vadd.f32 %v5003, %v4980
        %v5005 = vadd.f32 %v5004, %v4981
        %v5006 = vadd.f32 %v5005, %v4982
        %v5007 = vadd.f32 %v5006, %v4983
        %v5008 = vadd.f32 %v5007, %v4984
        %v5009 = vrot.slane %v5008, 4
        %v5010 = vadd.f32 %v5008, %v5009
        %v5011 = vrot.slane %v5010, 2
        %v5012 = vadd.f32 %v5010, %v5011
        %v5013 = vrot.slane %v5012, 1
        %v5014 = vadd.f32 %v5012, %v5013
        %v5015 = vmul.f32 %v4959, 0.0078125
        %v5016 = vmul.f32 %v5014, 0.0078125
        %v5017 = vmul.f32 %v5015, %v5015
        %v5018 = vsub.f32 %v5016, %v5017
        %v5019 = vadd.f32 %v5018, 1e-05
        %v5020 = vrsqrt.pop %v5019
        %v5021 = vld [vmem:[%s300] sm:$0x1]
        %v5022 = vmul.f32 %v5020, %v5021
        %v5023 = vld [vmem:[%s308] sm:$0x1]
        %v5024 = vmul.f32 %v5015, %v5022
        %v5025 = vsub.f32 %v5023, %v5024
        %v5026 = vlaneseq
        %v5027 = vshrl.u32 %v5026, 7
        %v5028 = vsub.s32 0, %v5027
        %v5029 = vrot.slane %v5022, %v5028
        %v5030 = vmul.f32 %v4654, %v5029
        %v5031 = vmul.f32 %v4657, %v5029
        %v5032 = vmul.f32 %v4662, %v5029
        %v5033 = vmul.f32 %v4665, %v5029
        %v5034 = vmul.f32 %v4670, %v5029
        %v5035 = vmul.f32 %v4673, %v5029
        %v5036 = vmul.f32 %v4678, %v5029
        %v5037 = vmul.f32 %v4681, %v5029
        %v5038 = vmul.f32 %v4686, %v5029
        %v5039 = vmul.f32 %v4689, %v5029
        %v5040 = vmul.f32 %v4694, %v5029
        %v5041 = vmul.f32 %v4697, %v5029
        %v5042 = vmul.f32 %v4702, %v5029
        %v5043 = vmul.f32 %v4705, %v5029
        %v5044 = vmul.f32 %v4710, %v5029
        %v5045 = vmul.f32 %v4713, %v5029
        %v5046 = vmul.f32 %v4718, %v5029
        %v5047 = vmul.f32 %v4721, %v5029
        %v5048 = vmul.f32 %v4726, %v5029
        %v5049 = vmul.f32 %v4729, %v5029
        %v5050 = vmul.f32 %v4734, %v5029
        %v5051 = vmul.f32 %v4737, %v5029
        %v5052 = vmul.f32 %v4742, %v5029
        %v5053 = vmul.f32 %v4745, %v5029
        %v5054 = vmul.f32 %v4750, %v5029
        %v5056 = vlaneseq
        %v5057 = vshrl.u32 %v5056, 7
        %v5058 = vsub.s32 0, %v5057
        %v5059 = vrot.slane %v5025, %v5058
        %v5061 = vadd.f32 %v5030, %v5059
        %v5062 = vadd.f32 %v5031, %v5059
        %v5063 = vadd.f32 %v5032, %v5059
        %v5064 = vadd.f32 %v5033, %v5059
        %v5065 = vadd.f32 %v5034, %v5059
        %v5066 = vadd.f32 %v5035, %v5059
        %v5067 = vadd.f32 %v5036, %v5059
        %v5068 = vadd.f32 %v5037, %v5059
        %v5069 = vadd.f32 %v5038, %v5059
        %v5070 = vadd.f32 %v5039, %v5059
        %v5071 = vadd.f32 %v5040, %v5059
        %v5072 = vadd.f32 %v5041, %v5059
        %v5073 = vadd.f32 %v5042, %v5059
        %v5074 = vadd.f32 %v5043, %v5059
        %v5075 = vadd.f32 %v5044, %v5059
        %v5076 = vadd.f32 %v5045, %v5059
        %v5077 = vadd.f32 %v5046, %v5059
        %v5078 = vadd.f32 %v5047, %v5059
        %v5079 = vadd.f32 %v5048, %v5059
        %v5080 = vadd.f32 %v5049, %v5059
        %v5081 = vadd.f32 %v5050, %v5059
        %v5082 = vadd.f32 %v5051, %v5059
        %v5083 = vadd.f32 %v5052, %v5059
        %v5084 = vadd.f32 %v5053, %v5059
        %v5085 = vadd.f32 %v5054, %v5059
        %5086 = vst [vmem:[%s347] sm:$0xff] %v5061
        %5087 = vst [vmem:[%s347 + $0x8] sm:$0xff] %v5062
        %5088 = vst [vmem:[%s347 + $0x10] sm:$0xff] %v5063
        %5089 = vst [vmem:[%s347 + $0x18] sm:$0xff] %v5064
        %5090 = vst [vmem:[%s347 + $0x20] sm:$0xff] %v5065
        %5091 = vst [vmem:[%s347 + $0x28] sm:$0xff] %v5066
        %5092 = vst [vmem:[%s347 + $0x30] sm:$0xff] %v5067
        %5093 = vst [vmem:[%s347 + $0x38] sm:$0xff] %v5068
        %5094 = vst [vmem:[%s347 + $0x40] sm:$0xff] %v5069
        %5095 = vst [vmem:[%s347 + $0x48] sm:$0xff] %v5070
        %5096 = vst [vmem:[%s347 + $0x50] sm:$0xff] %v5071
        %5097 = vst [vmem:[%s347 + $0x58] sm:$0xff] %v5072
        %5098 = vst [vmem:[%s347 + $0x60] sm:$0xff] %v5073
        %5099 = vst [vmem:[%s347 + $0x68] sm:$0xff] %v5074
        %5100 = vst [vmem:[%s347 + $0x70] sm:$0xff] %v5075
        %5101 = vst [vmem:[%s347 + $0x78] sm:$0xff] %v5076
        %5102 = vst [vmem:[%s347 + $0x80] sm:$0xff] %v5077
        %5103 = vst [vmem:[%s347 + $0x88] sm:$0xff] %v5078
        %5104 = vst [vmem:[%s347 + $0x90] sm:$0xff] %v5079
        %5105 = vst [vmem:[%s347 + $0x98] sm:$0xff] %v5080
        %5106 = vst [vmem:[%s347 + $0xa0] sm:$0xff] %v5081
        %5107 = vst [vmem:[%s347 + $0xa8] sm:$0xff] %v5082
        %5108 = vst [vmem:[%s347 + $0xb0] sm:$0xff] %v5083
        %5109 = vst [vmem:[%s347 + $0xb8] sm:$0xff] %v5084
        %5110 = vst [vmem:[%s347 + $0xc0] sm:$0xff] %v5085
        %s5111 = sand.u32 %s161, 1
        %s5112 = scalar_lea.sflag [#allocation6], %s5111
        %s5113 = sand.u32 %s161, 1
        %s5114 = smul.addr %s5113, 200
        %s5115 = scalar_lea.vmem [#allocation12], %s5114
        // Predicated region
        $region57: #{tpu_custom_call.1} parent=39 // pred_check
          %p5116 = pneg %p171
        $region58: #{tpu_custom_call.1} parent=39 // pred_check_branch
          %5118 = sbr.rel (%p5116) target = $region60
        $region59: #{tpu_custom_call.1} parent=39 // pred_region
          %s5120 = ssub.s32 3200, 3200
          %5121 = vsyncadd %s5112, %s5120
          %s5122 = smul.addr %s28, 25
          %s5123 = smul.addr %s5122, 128
          %s5124 = scalar_lea.hbm %s5, %s5123
          %s5125 = sshll.u32 %s5115, 4
          %s5126 = int_to_ptr.vmem [resolvable:$true] %s5125
          %5131 = dma.vmem_to_hbm [thread:$0]  %s5126, 3200, %s5124, %s5112, 128, 128, 8
        $region60: #{tpu_custom_call.1} parent=39 // pred_fallthru
          _
      $region40: #{tpu_custom_call.1} parent=5 // pred_fallthru
        _
      %p5132 = scmp.le.s32.totalorder 2, %s23
      // Predicated region
      $region61: #{tpu_custom_call.1} parent=5 // pred_check
        %p5133 = pneg %p5132
      $region62: #{tpu_custom_call.1} parent=5 // pred_check_branch
        %5135 = sbr.rel (%p5133) target = $region64
      $region63: #{tpu_custom_call.1} parent=5 // pred_region
        %s5136 = ssub.s32 %s23, 2
        // Predicated region
        $region65: #{tpu_custom_call.1} parent=63 // pred_check
          %p5137 = pneg %p177
        $region66: #{tpu_custom_call.1} parent=63 // pred_check_branch
          %5139 = sbr.rel (%p5137) target = $region68
        $region67: #{tpu_custom_call.1} parent=63 // pred_region
          %s5140 = sand.u32 %s162, 1
          %s5141 = scalar_lea.sflag [#allocation6], %s5140
          %s5142 = sand.u32 %s162, 1
          %s5143 = smul.addr %s5142, 200
          %s5144 = scalar_lea.vmem [#allocation12], %s5143
          %5145 = dma.done %s5141, 3200
        $region68: #{tpu_custom_call.1} parent=63 // pred_fallthru
          _
      $region64: #{tpu_custom_call.1} parent=5 // pred_fallthru
        _
    $region6: #{tpu_custom_call.1} parent=1 // loop_footer
      %s27 = sadd.s32 1, %s23
    $region7: #{tpu_custom_call.1} parent=1 // loop_footer_branch
      %22 = sbr.rel target = $region3
    $region8: #{tpu_custom_call.1} parent=1 // loop_exit
      _
    %5146 = vsyncpa [#allocation5], 1
    %s5147 = scalar_lea.sflag [#allocation5], 1
    %5148 = vsyncpa %s5147, 1
    %5149 = vsyncpa [#allocation8], 1
    %s5150 = scalar_lea.sflag [#allocation8], 1
    %5151 = vsyncpa %s5150, 1
    %5152 = vsyncpa [#allocation11], 1
    %s5153 = scalar_lea.sflag [#allocation11], 1
    %5154 = vsyncpa %s5153, 1
    %5155 = vsyncpa [#allocation6], 1
    %s5156 = scalar_lea.sflag [#allocation6], 1
    %5157 = vsyncpa %s5156, 1

</llo_original>
